<compile_context>
chip_gen: v7x
topology: tpu7x:2x2x1
jax: 0.10.0
libtpu: 0.0.40
codegen_flags: <defaults>
</compile_context>

<pallas_src>
import functools

import jax
import jax.numpy as jnp
import numpy as np
from jax.experimental import pallas as pl
from jax.experimental.pallas import tpu as pltpu


# ----------------------------------------------------------------------------
# Fused HAAM kernel (single grid step, everything VMEM-resident)
# ----------------------------------------------------------------------------
def _haam_kernel(x_ref, bands_ref, shifts_ref, scales_ref, biases_ref,
                 fc_w1_ref, fc_b1_ref, fc_bns_ref, fc_bnb_ref,
                 fc_w2_ref, fc_b2_ref,
                 pool_rows_ref, pool_mat_ref, expand_rows_ref,
                 chan_tile_ref, spat_gather_ref, spat_tile_ref, sb_bias_ref,
                 out_ref, *, size, max_shift):
    f32 = jnp.float32
    x = x_ref[...]                       # (R, L) = (N*H, W*C), lane-packed
    R, L = x.shape

    def shift_rows(v, dh):
        # result row (n, h) picks row (n, h + dh) of v, zero outside the image
        if dh == 0:
            return v
        return jnp.dot(shifts_ref[dh + max_shift], v,
                       preferred_element_type=f32)

    def conv(inputs, K, dil, pad, idx, relu):
        # inputs: list of (activation (R, L), band-matrix offset).  The banded
        # weight matrices absorb kw taps, dilation and W zero padding.
        acc = jnp.zeros((R, L), f32)
        for kh in range(K):
            dh = kh * dil - pad
            for v, off in inputs:
                acc = acc + jnp.dot(shift_rows(v, dh), bands_ref[off + kh],
                                    preferred_element_type=f32)
        out = acc * scales_ref[idx:idx + 1, :] + biases_ref[idx:idx + 1, :]
        return jnp.maximum(out, 0.0) if relu else out

    OFF_CB1, OFF_CB2, OFF_SB1, OFF_SB2 = 0, 3, 8, 11
    OFF_CB3A, OFF_CB3B = 16, 17
    OFF_FA, OFF_FB = 18, 18 + size

    # ---------------- Channel block ----------------
    c1 = conv([(x, OFF_CB1)], K=3, dil=3, pad=3, idx=0, relu=True)   # 3x3 d3 p3
    c2 = conv([(x, OFF_CB2)], K=5, dil=1, pad=2, idx=1, relu=True)   # 5x5 p2

    # global average pool per (image, channel) via constant matmuls
    p1 = jnp.dot(jnp.dot(pool_rows_ref[...], c1, preferred_element_type=f32),
                 pool_mat_ref[...], preferred_element_type=f32)       # (N, C)
    p2 = jnp.dot(jnp.dot(pool_rows_ref[...], c2, preferred_element_type=f32),
                 pool_mat_ref[...], preferred_element_type=f32)

    # fc: Linear(2C->C) -> BN1d(eval, folded) -> ReLU -> Linear(C->C) -> Sigmoid
    w1 = fc_w1_ref[...]
    C = w1.shape[1]
    hid = (jnp.dot(p1, w1[:C, :], preferred_element_type=f32)
           + jnp.dot(p2, w1[C:, :], preferred_element_type=f32)
           + fc_b1_ref[...])
    hid = jnp.maximum(hid * fc_bns_ref[...] + fc_bnb_ref[...], 0.0)
    sig = jax.nn.sigmoid(jnp.dot(hid, fc_w2_ref[...],
                                 preferred_element_type=f32) + fc_b2_ref[...])

    # broadcast sigm over (h, w): (N, C) -> (N, W*C) -> (N*H, W*C)
    sig_l = jnp.dot(sig, chan_tile_ref[...], preferred_element_type=f32)
    sig_full = jnp.dot(expand_rows_ref[...], sig_l, preferred_element_type=f32)
    y = c1 * sig_full
    y1 = c2 * (1.0 - sig_full)

    # conv3: 1x1 over cat([y, y1]) as two block-diagonal matmuls (split weight)
    channel_data = conv([(y, OFF_CB3A), (y1, OFF_CB3B)],
                        K=1, dil=1, pad=0, idx=2, relu=True)

    # ---------------- Spatial block ----------------
    s1 = conv([(x, OFF_SB1)], K=3, dil=1, pad=1, idx=3, relu=True)
    spatil = conv([(s1, OFF_SB2)], K=5, dil=1, pad=2, idx=4, relu=True)

    d = jnp.maximum(channel_data + spatil, 0.0)
    # 1x1 conv to a single channel (weights baked into spat_gather) + sigmoid
    logits = jnp.dot(d, spat_gather_ref[...],
                     preferred_element_type=f32) + sb_bias_ref[...]   # (R, W)
    a_sp = jax.nn.sigmoid(logits)
    a_full = jnp.dot(a_sp, spat_tile_ref[...], preferred_element_type=f32)
    ys = a_full * channel_data
    ys1 = (1.0 - a_full) * spatil

    # final conv (k=size, pad=size//2) over cat([ys, ys1]) + BN (no ReLU)
    out = conv([(ys, OFF_FA), (ys1, OFF_FB)],
               K=size, dil=1, pad=size // 2, idx=5, relu=False)
    out_ref[...] = out


# ----------------------------------------------------------------------------
# Wrapper: NCHW in / NCHW out, layout plumbing stays outside the kernel
# ----------------------------------------------------------------------------
def haam_forward(x_nchw, params, *, size=3):
    N, C, H, W = x_nchw.shape
    x2d = jnp.transpose(x_nchw, (0, 2, 3, 1)).reshape(N * H, W * C)
    x2d = x2d.astype(jnp.float32)
    max_shift = max(3, size // 2)
    kernel = functools.partial(_haam_kernel, size=size, max_shift=max_shift)
    vmem = pl.BlockSpec(memory_space=pltpu.MemorySpace.VMEM)
    out2d = pl.pallas_call(
        kernel,
        out_shape=jax.ShapeDtypeStruct((N * H, W * C), jnp.float32),
        in_specs=[vmem] * 18,
        out_specs=vmem,
    )(x2d,
      params["bands"], params["shifts"], params["scales"], params["biases"],
      params["fc_w1"], params["fc_b1"], params["fc_bns"], params["fc_bnb"],
      params["fc_w2"], params["fc_b2"],
      params["pool_rows"], params["pool_mat"], params["expand_rows"],
      params["chan_tile"], params["spat_gather"], params["spat_tile"],
      params["sb_bias"])
    return jnp.transpose(out2d.reshape(N, H, W, C), (0, 3, 1, 2))


# ----------------------------------------------------------------------------
# Host-side parameter synthesis + constant-matrix construction
# ----------------------------------------------------------------------------
def _band_matrices(w, K, dil, pad, W, Cin, Cout):
    """B[kh][wi*Cin+ci, wo*Cout+co] = w[kh, kw, ci, co] with wi = wo + kw*dil - pad.
    Taps falling outside [0, W) are dropped, which implements zero padding in W."""
    B = np.zeros((K, W * Cin, W * Cout), np.float32)
    for kh in range(K):
        for kw in range(K):
            blk = w[kh, kw]
            for wo in range(W):
                wi = wo + kw * dil - pad
                if 0 <= wi < W:
                    B[kh, wi * Cin:(wi + 1) * Cin,
                      wo * Cout:(wo + 1) * Cout] += blk
    return B


def build_params(key, N, C, H, W, size):
    L, R = W * C, N * H
    max_shift = max(3, size // 2)

    def u(k, shape, s):
        return np.asarray(jax.random.uniform(k, shape, jnp.float32, -s, s))

    ks = jax.random.split(key, 12)

    # raw conv weights, layout (kh, kw, cin, cout)
    w_cb1 = u(ks[0], (3, 3, C, C), 0.2)
    w_cb2 = u(ks[1], (5, 5, C, C), 0.2)
    w_cb3 = u(ks[2], (1, 1, 2 * C, C), 0.3)
    w_sb1 = u(ks[3], (3, 3, C, C), 0.2)
    w_sb2 = u(ks[4], (5, 5, C, C), 0.2)
    w_fin = u(ks[5], (size, size, 2 * C, C), 0.2)

    bands = np.concatenate([
        _band_matrices(w_cb1, 3, 3, 3, W, C, C),
        _band_matrices(w_cb2, 5, 1, 2, W, C, C),
        _band_matrices(w_sb1, 3, 1, 1, W, C, C),
        _band_matrices(w_sb2, 5, 1, 2, W, C, C),
        _band_matrices(w_cb3[:, :, :C, :], 1, 1, 0, W, C, C),
        _band_matrices(w_cb3[:, :, C:, :], 1, 1, 0, W, C, C),
        _band_matrices(w_fin[:, :, :C, :], size, 1, size // 2, W, C, C),
        _band_matrices(w_fin[:, :, C:, :], size, 1, size // 2, W, C, C),
    ], axis=0)

    # folded (eval-mode) BatchNorm + conv-bias affines: [cb1, cb2, cb3, sb1, sb2, final]
    def fold_bn(k):
        kb, kg, kbt, km, kv = jax.random.split(k, 5)
        conv_b = u(kb, (C,), 0.1)
        gamma = 1.0 + u(kg, (C,), 0.1)
        beta = u(kbt, (C,), 0.1)
        mean = u(km, (C,), 0.1)
        var = 1.0 + np.abs(u(kv, (C,), 0.1))
        s = (gamma / np.sqrt(var + 1e-5)).astype(np.float32)
        return s, (beta + s * (conv_b - mean)).astype(np.float32)

    folds = [fold_bn(k) for k in jax.random.split(ks[6], 6)]
    scales = np.stack([np.tile(s, W) for s, _ in folds]).astype(np.float32)
    biases = np.stack([np.tile(b, W) for _, b in folds]).astype(np.float32)

    # row shift/mask matrices: (S_d @ X)[n*H+h] = X[n*H+h+d], zero out of range
    shifts = np.zeros((2 * max_shift + 1, R, R), np.float32)
    for d in range(-max_shift, max_shift + 1):
        for n in range(N):
            for h in range(H):
                if 0 <= h + d < H:
                    shifts[d + max_shift, n * H + h, n * H + h + d] = 1.0

    # pooling / broadcast helper matrices
    pool_rows = np.zeros((N, R), np.float32)
    for n in range(N):
        pool_rows[n, n * H:(n + 1) * H] = 1.0
    expand_rows = np.ascontiguousarray(pool_rows.T)
    pool_mat = np.zeros((L, C), np.float32)
    chan_tile = np.zeros((C, L), np.float32)
    spat_tile = np.zeros((W, L), np.float32)
    for w in range(W):
        for c in range(C):
            pool_mat[w * C + c, c] = 1.0 / (H * W)
            chan_tile[c, w * C + c] = 1.0
            spat_tile[w, w * C + c] = 1.0

    # Spatialblock's 1x1 conv to one channel (fixed deterministic parameter)
    sb_w = u(ks[7], (C,), 0.5)
    sb_b = u(ks[8], (1, 1), 0.1)
    spat_gather = np.zeros((L, W), np.float32)
    for w in range(W):
        for c in range(C):
            spat_gather[w * C + c, w] = sb_w[c]

    kfc = jax.random.split(ks[9], 6)
    fc_w1 = u(kfc[0], (2 * C, C), 0.3)
    fc_b1 = u(kfc[1], (1, C), 0.1)
    fc_bns = (1.0 + u(kfc[2], (1, C), 0.1)).astype(np.float32)
    fc_bnb = u(kfc[3], (1, C), 0.1)
    fc_w2 = u(kfc[4], (C, C), 0.3)
    fc_b2 = u(kfc[5], (1, C), 0.1)

    params = {k: jnp.asarray(v) for k, v in dict(
        bands=bands, shifts=shifts, scales=scales, biases=biases,
        fc_w1=fc_w1, fc_b1=fc_b1, fc_bns=fc_bns, fc_bnb=fc_bnb,
        fc_w2=fc_w2, fc_b2=fc_b2,
        pool_rows=pool_rows, pool_mat=pool_mat, expand_rows=expand_rows,
        chan_tile=chan_tile, spat_gather=spat_gather, spat_tile=spat_tile,
        sb_bias=sb_b).items()}

    raw = dict(w_cb1=w_cb1, w_cb2=w_cb2, w_cb3=w_cb3, w_sb1=w_sb1,
               w_sb2=w_sb2, w_fin=w_fin,
               affines=[(jnp.asarray(s), jnp.asarray(b)) for s, b in folds],
               fc_w1=jnp.asarray(fc_w1), fc_b1=jnp.asarray(fc_b1),
               fc_bns=jnp.asarray(fc_bns), fc_bnb=jnp.asarray(fc_bnb),
               fc_w2=jnp.asarray(fc_w2), fc_b2=jnp.asarray(fc_b2),
               sb_w=jnp.asarray(sb_w), sb_b=float(sb_b[0, 0]))
    return params, raw


# ----------------------------------------------------------------------------
# Pure-JAX (XLA) reference with identical semantics, used for validation only
# ----------------------------------------------------------------------------
def _conv_ref(x, w, s, b, dil, pad, relu):
    out = jax.lax.conv_general_dilated(
        x, jnp.asarray(w), window_strides=(1, 1),
        padding=[(pad, pad), (pad, pad)], rhs_dilation=(dil, dil),
        dimension_numbers=("NHWC", "HWIO", "NHWC"))
    out = out * s + b
    return jnp.maximum(out, 0.0) if relu else out


def haam_reference(x_nchw, raw, *, size=3):
    x = jnp.transpose(x_nchw, (0, 2, 3, 1)).astype(jnp.float32)
    (s1a, b1a), (s2a, b2a), (s3a, b3a), (s4a, b4a), (s5a, b5a), (s6a, b6a) = raw["affines"]
    c1 = _conv_ref(x, raw["w_cb1"], s1a, b1a, 3, 3, True)
    c2 = _conv_ref(x, raw["w_cb2"], s2a, b2a, 1, 2, True)
    p1 = jnp.mean(c1, axis=(1, 2))
    p2 = jnp.mean(c2, axis=(1, 2))
    C = raw["fc_w1"].shape[1]
    hid = p1 @ raw["fc_w1"][:C] + p2 @ raw["fc_w1"][C:] + raw["fc_b1"]
    hid = jnp.maximum(hid * raw["fc_bns"] + raw["fc_bnb"], 0.0)
    sig = jax.nn.sigmoid(hid @ raw["fc_w2"] + raw["fc_b2"])
    a = sig[:, None, None, :]
    comb = jnp.concatenate([c1 * a, c2 * (1.0 - a)], axis=-1)
    channel_data = _conv_ref(comb, raw["w_cb3"], s3a, b3a, 1, 0, True)
    s1 = _conv_ref(x, raw["w_sb1"], s4a, b4a, 1, 1, True)
    spatil = _conv_ref(s1, raw["w_sb2"], s5a, b5a, 1, 2, True)
    d = jnp.maximum(channel_data + spatil, 0.0)
    asp = jax.nn.sigmoid(jnp.einsum("nhwc,c->nhw", d, raw["sb_w"]) + raw["sb_b"])
    asp = asp[..., None]
    comb2 = jnp.concatenate([asp * channel_data, (1.0 - asp) * spatil], axis=-1)
    out = _conv_ref(comb2, raw["w_fin"], s6a, b6a, 1, size // 2, False)
    return jnp.transpose(out, (0, 3, 1, 2))


if __name__ == "__main__":
    N, C, H, W = 2, 4, 16, 16     # HAAM requires in_channels == out_channels
    SIZE = 3

    root = jax.random.PRNGKey(0)
    kparam, kx = jax.random.split(root)
    params, raw = build_params(kparam, N, C, H, W, SIZE)
    x = jax.random.normal(kx, (N, C, H, W), jnp.float32)

    fwd = jax.jit(functools.partial(haam_forward, size=SIZE))
    out = jax.block_until_ready(fwd(x, params))

    assert out.shape == (N, C, H, W), out.shape
    assert bool(jnp.all(jnp.isfinite(out)))

    ref = haam_reference(x, raw, size=SIZE)
    max_err = float(jnp.max(jnp.abs(out - ref)))
    assert max_err < 1e-1, f"kernel/reference mismatch: {max_err}"

    print("KERNEL_OK")
</pallas_src>

<mosaic_0001>
module attributes {stable_mosaic.version = 11 : i64} {
  func.func @_haam_kernel(%arg0: memref<32x64xf32, #tpu.memory_space<vmem>>, %arg1: memref<24x64x64xf32, #tpu.memory_space<vmem>>, %arg2: memref<7x32x32xf32, #tpu.memory_space<vmem>>, %arg3: memref<6x64xf32, #tpu.memory_space<vmem>>, %arg4: memref<6x64xf32, #tpu.memory_space<vmem>>, %arg5: memref<8x4xf32, #tpu.memory_space<vmem>>, %arg6: memref<1x4xf32, #tpu.memory_space<vmem>>, %arg7: memref<1x4xf32, #tpu.memory_space<vmem>>, %arg8: memref<1x4xf32, #tpu.memory_space<vmem>>, %arg9: memref<4x4xf32, #tpu.memory_space<vmem>>, %arg10: memref<1x4xf32, #tpu.memory_space<vmem>>, %arg11: memref<2x32xf32, #tpu.memory_space<vmem>>, %arg12: memref<64x4xf32, #tpu.memory_space<vmem>>, %arg13: memref<32x2xf32, #tpu.memory_space<vmem>>, %arg14: memref<4x64xf32, #tpu.memory_space<vmem>>, %arg15: memref<64x16xf32, #tpu.memory_space<vmem>>, %arg16: memref<16x64xf32, #tpu.memory_space<vmem>>, %arg17: memref<1x1xf32, #tpu.memory_space<vmem>>, %arg18: memref<32x64xf32, #tpu.memory_space<vmem>>) attributes {dimension_semantics = [], scalar_prefetch = 0 : i64, scratch_operands = 0 : i64, tpu.core_type = #tpu.core_type<tc>} {
    %c0 = arith.constant 0 : index
    %c0_0 = arith.constant 0 : index
    %0 = vector.load %arg0[%c0, %c0_0] : memref<32x64xf32, #tpu.memory_space<vmem>>, vector<32x64xf32>
    %cst = arith.constant 0.000000e+00 : f32
    %1 = vector.broadcast %cst : f32 to vector<32x64xf32>
    %c0_1 = arith.constant 0 : index
    %c0_2 = arith.constant 0 : index
    %c0_3 = arith.constant 0 : index
    %2 = vector.load %arg2[%c0_1, %c0_2, %c0_3] : memref<7x32x32xf32, #tpu.memory_space<vmem>>, vector<1x32x32xf32>
    %3 = vector.shape_cast %2 : vector<1x32x32xf32> to vector<32x32xf32>
    %cst_4 = arith.constant dense<0.000000e+00> : vector<32x64xf32>
    %4 = tpu.matmul %3, %0, %cst_4 {dimension_numbers = #tpu.dot_dimension_numbers<[1], [0], [0], [1], [0, 0, 1, 1], [], []>} : vector<32x32xf32>, vector<32x64xf32>, vector<32x64xf32> -> vector<32x64xf32>
    %c0_5 = arith.constant 0 : index
    %c0_6 = arith.constant 0 : index
    %c0_7 = arith.constant 0 : index
    %5 = vector.load %arg1[%c0_5, %c0_6, %c0_7] : memref<24x64x64xf32, #tpu.memory_space<vmem>>, vector<1x64x64xf32>
    %6 = vector.shape_cast %5 : vector<1x64x64xf32> to vector<64x64xf32>
    %cst_8 = arith.constant dense<0.000000e+00> : vector<32x64xf32>
    %7 = tpu.matmul %4, %6, %cst_8 {dimension_numbers = #tpu.dot_dimension_numbers<[1], [0], [0], [1], [0, 0, 1, 1], [], []>} : vector<32x64xf32>, vector<64x64xf32>, vector<32x64xf32> -> vector<32x64xf32>
    %8 = arith.addf %1, %7 : vector<32x64xf32>
    %c1 = arith.constant 1 : index
    %c0_9 = arith.constant 0 : index
    %c0_10 = arith.constant 0 : index
    %9 = vector.load %arg1[%c1, %c0_9, %c0_10] : memref<24x64x64xf32, #tpu.memory_space<vmem>>, vector<1x64x64xf32>
    %10 = vector.shape_cast %9 : vector<1x64x64xf32> to vector<64x64xf32>
    %cst_11 = arith.constant dense<0.000000e+00> : vector<32x64xf32>
    %11 = tpu.matmul %0, %10, %cst_11 {dimension_numbers = #tpu.dot_dimension_numbers<[1], [0], [0], [1], [0, 0, 1, 1], [], []>} : vector<32x64xf32>, vector<64x64xf32>, vector<32x64xf32> -> vector<32x64xf32>
    %12 = arith.addf %8, %11 : vector<32x64xf32>
    %c6 = arith.constant 6 : index
    %c0_12 = arith.constant 0 : index
    %c0_13 = arith.constant 0 : index
    %13 = vector.load %arg2[%c6, %c0_12, %c0_13] : memref<7x32x32xf32, #tpu.memory_space<vmem>>, vector<1x32x32xf32>
    %14 = vector.shape_cast %13 : vector<1x32x32xf32> to vector<32x32xf32>
    %cst_14 = arith.constant dense<0.000000e+00> : vector<32x64xf32>
    %15 = tpu.matmul %14, %0, %cst_14 {dimension_numbers = #tpu.dot_dimension_numbers<[1], [0], [0], [1], [0, 0, 1, 1], [], []>} : vector<32x32xf32>, vector<32x64xf32>, vector<32x64xf32> -> vector<32x64xf32>
    %c2 = arith.constant 2 : index
    %c0_15 = arith.constant 0 : index
    %c0_16 = arith.constant 0 : index
    %16 = vector.load %arg1[%c2, %c0_15, %c0_16] : memref<24x64x64xf32, #tpu.memory_space<vmem>>, vector<1x64x64xf32>
    %17 = vector.shape_cast %16 : vector<1x64x64xf32> to vector<64x64xf32>
    %cst_17 = arith.constant dense<0.000000e+00> : vector<32x64xf32>
    %18 = tpu.matmul %15, %17, %cst_17 {dimension_numbers = #tpu.dot_dimension_numbers<[1], [0], [0], [1], [0, 0, 1, 1], [], []>} : vector<32x64xf32>, vector<64x64xf32>, vector<32x64xf32> -> vector<32x64xf32>
    %19 = arith.addf %12, %18 : vector<32x64xf32>
    %c0_18 = arith.constant 0 : index
    %c0_19 = arith.constant 0 : index
    %20 = vector.load %arg3[%c0_18, %c0_19] : memref<6x64xf32, #tpu.memory_space<vmem>>, vector<1x64xf32>
    %21 = vector.broadcast %20 : vector<1x64xf32> to vector<32x64xf32>
    %22 = arith.mulf %19, %21 : vector<32x64xf32>
    %c0_20 = arith.constant 0 : index
    %c0_21 = arith.constant 0 : index
    %23 = vector.load %arg4[%c0_20, %c0_21] : memref<6x64xf32, #tpu.memory_space<vmem>>, vector<1x64xf32>
    %24 = vector.broadcast %23 : vector<1x64xf32> to vector<32x64xf32>
    %25 = arith.addf %22, %24 : vector<32x64xf32>
    %cst_22 = arith.constant 0.000000e+00 : f32
    %26 = vector.broadcast %cst_22 : f32 to vector<32x64xf32>
    %27 = arith.maximumf %25, %26 : vector<32x64xf32>
    %cst_23 = arith.constant 0.000000e+00 : f32
    %28 = vector.broadcast %cst_23 : f32 to vector<32x64xf32>
    %c1_24 = arith.constant 1 : index
    %c0_25 = arith.constant 0 : index
    %c0_26 = arith.constant 0 : index
    %29 = vector.load %arg2[%c1_24, %c0_25, %c0_26] : memref<7x32x32xf32, #tpu.memory_space<vmem>>, vector<1x32x32xf32>
    %30 = vector.shape_cast %29 : vector<1x32x32xf32> to vector<32x32xf32>
    %cst_27 = arith.constant dense<0.000000e+00> : vector<32x64xf32>
    %31 = tpu.matmul %30, %0, %cst_27 {dimension_numbers = #tpu.dot_dimension_numbers<[1], [0], [0], [1], [0, 0, 1, 1], [], []>} : vector<32x32xf32>, vector<32x64xf32>, vector<32x64xf32> -> vector<32x64xf32>
    %c3 = arith.constant 3 : index
    %c0_28 = arith.constant 0 : index
    %c0_29 = arith.constant 0 : index
    %32 = vector.load %arg1[%c3, %c0_28, %c0_29] : memref<24x64x64xf32, #tpu.memory_space<vmem>>, vector<1x64x64xf32>
    %33 = vector.shape_cast %32 : vector<1x64x64xf32> to vector<64x64xf32>
    %cst_30 = arith.constant dense<0.000000e+00> : vector<32x64xf32>
    %34 = tpu.matmul %31, %33, %cst_30 {dimension_numbers = #tpu.dot_dimension_numbers<[1], [0], [0], [1], [0, 0, 1, 1], [], []>} : vector<32x64xf32>, vector<64x64xf32>, vector<32x64xf32> -> vector<32x64xf32>
    %35 = arith.addf %28, %34 : vector<32x64xf32>
    %c2_31 = arith.constant 2 : index
    %c0_32 = arith.constant 0 : index
    %c0_33 = arith.constant 0 : index
    %36 = vector.load %arg2[%c2_31, %c0_32, %c0_33] : memref<7x32x32xf32, #tpu.memory_space<vmem>>, vector<1x32x32xf32>
    %37 = vector.shape_cast %36 : vector<1x32x32xf32> to vector<32x32xf32>
    %cst_34 = arith.constant dense<0.000000e+00> : vector<32x64xf32>
    %38 = tpu.matmul %37, %0, %cst_34 {dimension_numbers = #tpu.dot_dimension_numbers<[1], [0], [0], [1], [0, 0, 1, 1], [], []>} : vector<32x32xf32>, vector<32x64xf32>, vector<32x64xf32> -> vector<32x64xf32>
    %c4 = arith.constant 4 : index
    %c0_35 = arith.constant 0 : index
    %c0_36 = arith.constant 0 : index
    %39 = vector.load %arg1[%c4, %c0_35, %c0_36] : memref<24x64x64xf32, #tpu.memory_space<vmem>>, vector<1x64x64xf32>
    %40 = vector.shape_cast %39 : vector<1x64x64xf32> to vector<64x64xf32>
    %cst_37 = arith.constant dense<0.000000e+00> : vector<32x64xf32>
    %41 = tpu.matmul %38, %40, %cst_37 {dimension_numbers = #tpu.dot_dimension_numbers<[1], [0], [0], [1], [0, 0, 1, 1], [], []>} : vector<32x64xf32>, vector<64x64xf32>, vector<32x64xf32> -> vector<32x64xf32>
    %42 = arith.addf %35, %41 : vector<32x64xf32>
    %c5 = arith.constant 5 : index
    %c0_38 = arith.constant 0 : index
    %c0_39 = arith.constant 0 : index
    %43 = vector.load %arg1[%c5, %c0_38, %c0_39] : memref<24x64x64xf32, #tpu.memory_space<vmem>>, vector<1x64x64xf32>
    %44 = vector.shape_cast %43 : vector<1x64x64xf32> to vector<64x64xf32>
    %cst_40 = arith.constant dense<0.000000e+00> : vector<32x64xf32>
    %45 = tpu.matmul %0, %44, %cst_40 {dimension_numbers = #tpu.dot_dimension_numbers<[1], [0], [0], [1], [0, 0, 1, 1], [], []>} : vector<32x64xf32>, vector<64x64xf32>, vector<32x64xf32> -> vector<32x64xf32>
    %46 = arith.addf %42, %45 : vector<32x64xf32>
    %c4_41 = arith.constant 4 : index
    %c0_42 = arith.constant 0 : index
    %c0_43 = arith.constant 0 : index
    %47 = vector.load %arg2[%c4_41, %c0_42, %c0_43] : memref<7x32x32xf32, #tpu.memory_space<vmem>>, vector<1x32x32xf32>
    %48 = vector.shape_cast %47 : vector<1x32x32xf32> to vector<32x32xf32>
    %cst_44 = arith.constant dense<0.000000e+00> : vector<32x64xf32>
    %49 = tpu.matmul %48, %0, %cst_44 {dimension_numbers = #tpu.dot_dimension_numbers<[1], [0], [0], [1], [0, 0, 1, 1], [], []>} : vector<32x32xf32>, vector<32x64xf32>, vector<32x64xf32> -> vector<32x64xf32>
    %c6_45 = arith.constant 6 : index
    %c0_46 = arith.constant 0 : index
    %c0_47 = arith.constant 0 : index
    %50 = vector.load %arg1[%c6_45, %c0_46, %c0_47] : memref<24x64x64xf32, #tpu.memory_space<vmem>>, vector<1x64x64xf32>
    %51 = vector.shape_cast %50 : vector<1x64x64xf32> to vector<64x64xf32>
    %cst_48 = arith.constant dense<0.000000e+00> : vector<32x64xf32>
    %52 = tpu.matmul %49, %51, %cst_48 {dimension_numbers = #tpu.dot_dimension_numbers<[1], [0], [0], [1], [0, 0, 1, 1], [], []>} : vector<32x64xf32>, vector<64x64xf32>, vector<32x64xf32> -> vector<32x64xf32>
    %53 = arith.addf %46, %52 : vector<32x64xf32>
    %c5_49 = arith.constant 5 : index
    %c0_50 = arith.constant 0 : index
    %c0_51 = arith.constant 0 : index
    %54 = vector.load %arg2[%c5_49, %c0_50, %c0_51] : memref<7x32x32xf32, #tpu.memory_space<vmem>>, vector<1x32x32xf32>
    %55 = vector.shape_cast %54 : vector<1x32x32xf32> to vector<32x32xf32>
    %cst_52 = arith.constant dense<0.000000e+00> : vector<32x64xf32>
    %56 = tpu.matmul %55, %0, %cst_52 {dimension_numbers = #tpu.dot_dimension_numbers<[1], [0], [0], [1], [0, 0, 1, 1], [], []>} : vector<32x32xf32>, vector<32x64xf32>, vector<32x64xf32> -> vector<32x64xf32>
    %c7 = arith.constant 7 : index
    %c0_53 = arith.constant 0 : index
    %c0_54 = arith.constant 0 : index
    %57 = vector.load %arg1[%c7, %c0_53, %c0_54] : memref<24x64x64xf32, #tpu.memory_space<vmem>>, vector<1x64x64xf32>
    %58 = vector.shape_cast %57 : vector<1x64x64xf32> to vector<64x64xf32>
    %cst_55 = arith.constant dense<0.000000e+00> : vector<32x64xf32>
    %59 = tpu.matmul %56, %58, %cst_55 {dimension_numbers = #tpu.dot_dimension_numbers<[1], [0], [0], [1], [0, 0, 1, 1], [], []>} : vector<32x64xf32>, vector<64x64xf32>, vector<32x64xf32> -> vector<32x64xf32>
    %60 = arith.addf %53, %59 : vector<32x64xf32>
    %c1_56 = arith.constant 1 : index
    %c0_57 = arith.constant 0 : index
    %61 = vector.load %arg3[%c1_56, %c0_57] : memref<6x64xf32, #tpu.memory_space<vmem>>, vector<1x64xf32>
    %62 = vector.broadcast %61 : vector<1x64xf32> to vector<32x64xf32>
    %63 = arith.mulf %60, %62 : vector<32x64xf32>
    %c1_58 = arith.constant 1 : index
    %c0_59 = arith.constant 0 : index
    %64 = vector.load %arg4[%c1_58, %c0_59] : memref<6x64xf32, #tpu.memory_space<vmem>>, vector<1x64xf32>
    %65 = vector.broadcast %64 : vector<1x64xf32> to vector<32x64xf32>
    %66 = arith.addf %63, %65 : vector<32x64xf32>
    %cst_60 = arith.constant 0.000000e+00 : f32
    %67 = vector.broadcast %cst_60 : f32 to vector<32x64xf32>
    %68 = arith.maximumf %66, %67 : vector<32x64xf32>
    %c0_61 = arith.constant 0 : index
    %c0_62 = arith.constant 0 : index
    %69 = vector.load %arg11[%c0_61, %c0_62] : memref<2x32xf32, #tpu.memory_space<vmem>>, vector<2x32xf32>
    %cst_63 = arith.constant dense<0.000000e+00> : vector<2x64xf32>
    %70 = tpu.matmul %69, %27, %cst_63 {dimension_numbers = #tpu.dot_dimension_numbers<[1], [0], [0], [1], [0, 0, 1, 1], [], []>} : vector<2x32xf32>, vector<32x64xf32>, vector<2x64xf32> -> vector<2x64xf32>
    %c0_64 = arith.constant 0 : index
    %c0_65 = arith.constant 0 : index
    %71 = vector.load %arg12[%c0_64, %c0_65] : memref<64x4xf32, #tpu.memory_space<vmem>>, vector<64x4xf32>
    %cst_66 = arith.constant dense<0.000000e+00> : vector<2x4xf32>
    %72 = tpu.matmul %70, %71, %cst_66 {dimension_numbers = #tpu.dot_dimension_numbers<[1], [0], [0], [1], [0, 0, 1, 1], [], []>} : vector<2x64xf32>, vector<64x4xf32>, vector<2x4xf32> -> vector<2x4xf32>
    %c0_67 = arith.constant 0 : index
    %c0_68 = arith.constant 0 : index
    %73 = vector.load %arg11[%c0_67, %c0_68] : memref<2x32xf32, #tpu.memory_space<vmem>>, vector<2x32xf32>
    %cst_69 = arith.constant dense<0.000000e+00> : vector<2x64xf32>
    %74 = tpu.matmul %73, %68, %cst_69 {dimension_numbers = #tpu.dot_dimension_numbers<[1], [0], [0], [1], [0, 0, 1, 1], [], []>} : vector<2x32xf32>, vector<32x64xf32>, vector<2x64xf32> -> vector<2x64xf32>
    %c0_70 = arith.constant 0 : index
    %c0_71 = arith.constant 0 : index
    %75 = vector.load %arg12[%c0_70, %c0_71] : memref<64x4xf32, #tpu.memory_space<vmem>>, vector<64x4xf32>
    %cst_72 = arith.constant dense<0.000000e+00> : vector<2x4xf32>
    %76 = tpu.matmul %74, %75, %cst_72 {dimension_numbers = #tpu.dot_dimension_numbers<[1], [0], [0], [1], [0, 0, 1, 1], [], []>} : vector<2x64xf32>, vector<64x4xf32>, vector<2x4xf32> -> vector<2x4xf32>
    %c0_73 = arith.constant 0 : index
    %c0_74 = arith.constant 0 : index
    %77 = vector.load %arg5[%c0_73, %c0_74] : memref<8x4xf32, #tpu.memory_space<vmem>>, vector<8x4xf32>
    %78 = vector.extract_strided_slice %77 {offsets = [0, 0], sizes = [4, 4], strides = [1, 1]} : vector<8x4xf32> to vector<4x4xf32>
    %cst_75 = arith.constant dense<0.000000e+00> : vector<2x4xf32>
    %79 = tpu.matmul %72, %78, %cst_75 {dimension_numbers = #tpu.dot_dimension_numbers<[1], [0], [0], [1], [0, 0, 1, 1], [], []>} : vector<2x4xf32>, vector<4x4xf32>, vector<2x4xf32> -> vector<2x4xf32>
    %80 = vector.extract_strided_slice %77 {offsets = [4, 0], sizes = [4, 4], strides = [1, 1]} : vector<8x4xf32> to vector<4x4xf32>
    %cst_76 = arith.constant dense<0.000000e+00> : vector<2x4xf32>
    %81 = tpu.matmul %76, %80, %cst_76 {dimension_numbers = #tpu.dot_dimension_numbers<[1], [0], [0], [1], [0, 0, 1, 1], [], []>} : vector<2x4xf32>, vector<4x4xf32>, vector<2x4xf32> -> vector<2x4xf32>
    %82 = arith.addf %79, %81 : vector<2x4xf32>
    %c0_77 = arith.constant 0 : index
    %c0_78 = arith.constant 0 : index
    %83 = vector.load %arg6[%c0_77, %c0_78] : memref<1x4xf32, #tpu.memory_space<vmem>>, vector<1x4xf32>
    %84 = vector.broadcast %83 : vector<1x4xf32> to vector<2x4xf32>
    %85 = arith.addf %82, %84 : vector<2x4xf32>
    %c0_79 = arith.constant 0 : index
    %c0_80 = arith.constant 0 : index
    %86 = vector.load %arg7[%c0_79, %c0_80] : memref<1x4xf32, #tpu.memory_space<vmem>>, vector<1x4xf32>
    %87 = vector.broadcast %86 : vector<1x4xf32> to vector<2x4xf32>
    %88 = arith.mulf %85, %87 : vector<2x4xf32>
    %c0_81 = arith.constant 0 : index
    %c0_82 = arith.constant 0 : index
    %89 = vector.load %arg8[%c0_81, %c0_82] : memref<1x4xf32, #tpu.memory_space<vmem>>, vector<1x4xf32>
    %90 = vector.broadcast %89 : vector<1x4xf32> to vector<2x4xf32>
    %91 = arith.addf %88, %90 : vector<2x4xf32>
    %cst_83 = arith.constant 0.000000e+00 : f32
    %92 = vector.broadcast %cst_83 : f32 to vector<2x4xf32>
    %93 = arith.maximumf %91, %92 : vector<2x4xf32>
    %c0_84 = arith.constant 0 : index
    %c0_85 = arith.constant 0 : index
    %94 = vector.load %arg9[%c0_84, %c0_85] : memref<4x4xf32, #tpu.memory_space<vmem>>, vector<4x4xf32>
    %cst_86 = arith.constant dense<0.000000e+00> : vector<2x4xf32>
    %95 = tpu.matmul %93, %94, %cst_86 {dimension_numbers = #tpu.dot_dimension_numbers<[1], [0], [0], [1], [0, 0, 1, 1], [], []>} : vector<2x4xf32>, vector<4x4xf32>, vector<2x4xf32> -> vector<2x4xf32>
    %c0_87 = arith.constant 0 : index
    %c0_88 = arith.constant 0 : index
    %96 = vector.load %arg10[%c0_87, %c0_88] : memref<1x4xf32, #tpu.memory_space<vmem>>, vector<1x4xf32>
    %97 = vector.broadcast %96 : vector<1x4xf32> to vector<2x4xf32>
    %98 = arith.addf %95, %97 : vector<2x4xf32>
    %99 = arith.negf %98 : vector<2x4xf32>
    %100 = math.exp %99 : vector<2x4xf32>
    %cst_89 = arith.constant 1.000000e+00 : f32
    %101 = vector.broadcast %cst_89 : f32 to vector<2x4xf32>
    %102 = arith.addf %101, %100 : vector<2x4xf32>
    %103 = arith.divf %101, %102 : vector<2x4xf32>
    %c0_90 = arith.constant 0 : index
    %c0_91 = arith.constant 0 : index
    %104 = vector.load %arg14[%c0_90, %c0_91] : memref<4x64xf32, #tpu.memory_space<vmem>>, vector<4x64xf32>
    %cst_92 = arith.constant dense<0.000000e+00> : vector<2x64xf32>
    %105 = tpu.matmul %103, %104, %cst_92 {dimension_numbers = #tpu.dot_dimension_numbers<[1], [0], [0], [1], [0, 0, 1, 1], [], []>} : vector<2x4xf32>, vector<4x64xf32>, vector<2x64xf32> -> vector<2x64xf32>
    %c0_93 = arith.constant 0 : index
    %c0_94 = arith.constant 0 : index
    %106 = vector.load %arg13[%c0_93, %c0_94] : memref<32x2xf32, #tpu.memory_space<vmem>>, vector<32x2xf32>
    %cst_95 = arith.constant dense<0.000000e+00> : vector<32x64xf32>
    %107 = tpu.matmul %106, %105, %cst_95 {dimension_numbers = #tpu.dot_dimension_numbers<[1], [0], [0], [1], [0, 0, 1, 1], [], []>} : vector<32x2xf32>, vector<2x64xf32>, vector<32x64xf32> -> vector<32x64xf32>
    %108 = arith.mulf %27, %107 : vector<32x64xf32>
    %cst_96 = arith.constant 1.000000e+00 : f32
    %109 = vector.broadcast %cst_96 : f32 to vector<32x64xf32>
    %110 = arith.subf %109, %107 : vector<32x64xf32>
    %111 = arith.mulf %68, %110 : vector<32x64xf32>
    %cst_97 = arith.constant 0.000000e+00 : f32
    %112 = vector.broadcast %cst_97 : f32 to vector<32x64xf32>
    %c16 = arith.constant 16 : index
    %c0_98 = arith.constant 0 : index
    %c0_99 = arith.constant 0 : index
    %113 = vector.load %arg1[%c16, %c0_98, %c0_99] : memref<24x64x64xf32, #tpu.memory_space<vmem>>, vector<1x64x64xf32>
    %114 = vector.shape_cast %113 : vector<1x64x64xf32> to vector<64x64xf32>
    %cst_100 = arith.constant dense<0.000000e+00> : vector<32x64xf32>
    %115 = tpu.matmul %108, %114, %cst_100 {dimension_numbers = #tpu.dot_dimension_numbers<[1], [0], [0], [1], [0, 0, 1, 1], [], []>} : vector<32x64xf32>, vector<64x64xf32>, vector<32x64xf32> -> vector<32x64xf32>
    %116 = arith.addf %112, %115 : vector<32x64xf32>
    %c17 = arith.constant 17 : index
    %c0_101 = arith.constant 0 : index
    %c0_102 = arith.constant 0 : index
    %117 = vector.load %arg1[%c17, %c0_101, %c0_102] : memref<24x64x64xf32, #tpu.memory_space<vmem>>, vector<1x64x64xf32>
    %118 = vector.shape_cast %117 : vector<1x64x64xf32> to vector<64x64xf32>
    %cst_103 = arith.constant dense<0.000000e+00> : vector<32x64xf32>
    %119 = tpu.matmul %111, %118, %cst_103 {dimension_numbers = #tpu.dot_dimension_numbers<[1], [0], [0], [1], [0, 0, 1, 1], [], []>} : vector<32x64xf32>, vector<64x64xf32>, vector<32x64xf32> -> vector<32x64xf32>
    %120 = arith.addf %116, %119 : vector<32x64xf32>
    %c2_104 = arith.constant 2 : index
    %c0_105 = arith.constant 0 : index
    %121 = vector.load %arg3[%c2_104, %c0_105] : memref<6x64xf32, #tpu.memory_space<vmem>>, vector<1x64xf32>
    %122 = vector.broadcast %121 : vector<1x64xf32> to vector<32x64xf32>
    %123 = arith.mulf %120, %122 : vector<32x64xf32>
    %c2_106 = arith.constant 2 : index
    %c0_107 = arith.constant 0 : index
    %124 = vector.load %arg4[%c2_106, %c0_107] : memref<6x64xf32, #tpu.memory_space<vmem>>, vector<1x64xf32>
    %125 = vector.broadcast %124 : vector<1x64xf32> to vector<32x64xf32>
    %126 = arith.addf %123, %125 : vector<32x64xf32>
    %cst_108 = arith.constant 0.000000e+00 : f32
    %127 = vector.broadcast %cst_108 : f32 to vector<32x64xf32>
    %128 = arith.maximumf %126, %127 : vector<32x64xf32>
    %cst_109 = arith.constant 0.000000e+00 : f32
    %129 = vector.broadcast %cst_109 : f32 to vector<32x64xf32>
    %c2_110 = arith.constant 2 : index
    %c0_111 = arith.constant 0 : index
    %c0_112 = arith.constant 0 : index
    %130 = vector.load %arg2[%c2_110, %c0_111, %c0_112] : memref<7x32x32xf32, #tpu.memory_space<vmem>>, vector<1x32x32xf32>
    %131 = vector.shape_cast %130 : vector<1x32x32xf32> to vector<32x32xf32>
    %cst_113 = arith.constant dense<0.000000e+00> : vector<32x64xf32>
    %132 = tpu.matmul %131, %0, %cst_113 {dimension_numbers = #tpu.dot_dimension_numbers<[1], [0], [0], [1], [0, 0, 1, 1], [], []>} : vector<32x32xf32>, vector<32x64xf32>, vector<32x64xf32> -> vector<32x64xf32>
    %c8 = arith.constant 8 : index
    %c0_114 = arith.constant 0 : index
    %c0_115 = arith.constant 0 : index
    %133 = vector.load %arg1[%c8, %c0_114, %c0_115] : memref<24x64x64xf32, #tpu.memory_space<vmem>>, vector<1x64x64xf32>
    %134 = vector.shape_cast %133 : vector<1x64x64xf32> to vector<64x64xf32>
    %cst_116 = arith.constant dense<0.000000e+00> : vector<32x64xf32>
    %135 = tpu.matmul %132, %134, %cst_116 {dimension_numbers = #tpu.dot_dimension_numbers<[1], [0], [0], [1], [0, 0, 1, 1], [], []>} : vector<32x64xf32>, vector<64x64xf32>, vector<32x64xf32> -> vector<32x64xf32>
    %136 = arith.addf %129, %135 : vector<32x64xf32>
    %c9 = arith.constant 9 : index
    %c0_117 = arith.constant 0 : index
    %c0_118 = arith.constant 0 : index
    %137 = vector.load %arg1[%c9, %c0_117, %c0_118] : memref<24x64x64xf32, #tpu.memory_space<vmem>>, vector<1x64x64xf32>
    %138 = vector.shape_cast %137 : vector<1x64x64xf32> to vector<64x64xf32>
    %cst_119 = arith.constant dense<0.000000e+00> : vector<32x64xf32>
    %139 = tpu.matmul %0, %138, %cst_119 {dimension_numbers = #tpu.dot_dimension_numbers<[1], [0], [0], [1], [0, 0, 1, 1], [], []>} : vector<32x64xf32>, vector<64x64xf32>, vector<32x64xf32> -> vector<32x64xf32>
    %140 = arith.addf %136, %139 : vector<32x64xf32>
    %c4_120 = arith.constant 4 : index
    %c0_121 = arith.constant 0 : index
    %c0_122 = arith.constant 0 : index
    %141 = vector.load %arg2[%c4_120, %c0_121, %c0_122] : memref<7x32x32xf32, #tpu.memory_space<vmem>>, vector<1x32x32xf32>
    %142 = vector.shape_cast %141 : vector<1x32x32xf32> to vector<32x32xf32>
    %cst_123 = arith.constant dense<0.000000e+00> : vector<32x64xf32>
    %143 = tpu.matmul %142, %0, %cst_123 {dimension_numbers = #tpu.dot_dimension_numbers<[1], [0], [0], [1], [0, 0, 1, 1], [], []>} : vector<32x32xf32>, vector<32x64xf32>, vector<32x64xf32> -> vector<32x64xf32>
    %c10 = arith.constant 10 : index
    %c0_124 = arith.constant 0 : index
    %c0_125 = arith.constant 0 : index
    %144 = vector.load %arg1[%c10, %c0_124, %c0_125] : memref<24x64x64xf32, #tpu.memory_space<vmem>>, vector<1x64x64xf32>
    %145 = vector.shape_cast %144 : vector<1x64x64xf32> to vector<64x64xf32>
    %cst_126 = arith.constant dense<0.000000e+00> : vector<32x64xf32>
    %146 = tpu.matmul %143, %145, %cst_126 {dimension_numbers = #tpu.dot_dimension_numbers<[1], [0], [0], [1], [0, 0, 1, 1], [], []>} : vector<32x64xf32>, vector<64x64xf32>, vector<32x64xf32> -> vector<32x64xf32>
    %147 = arith.addf %140, %146 : vector<32x64xf32>
    %c3_127 = arith.constant 3 : index
    %c0_128 = arith.constant 0 : index
    %148 = vector.load %arg3[%c3_127, %c0_128] : memref<6x64xf32, #tpu.memory_space<vmem>>, vector<1x64xf32>
    %149 = vector.broadcast %148 : vector<1x64xf32> to vector<32x64xf32>
    %150 = arith.mulf %147, %149 : vector<32x64xf32>
    %c3_129 = arith.constant 3 : index
    %c0_130 = arith.constant 0 : index
    %151 = vector.load %arg4[%c3_129, %c0_130] : memref<6x64xf32, #tpu.memory_space<vmem>>, vector<1x64xf32>
    %152 = vector.broadcast %151 : vector<1x64xf32> to vector<32x64xf32>
    %153 = arith.addf %150, %152 : vector<32x64xf32>
    %cst_131 = arith.constant 0.000000e+00 : f32
    %154 = vector.broadcast %cst_131 : f32 to vector<32x64xf32>
    %155 = arith.maximumf %153, %154 : vector<32x64xf32>
    %cst_132 = arith.constant 0.000000e+00 : f32
    %156 = vector.broadcast %cst_132 : f32 to vector<32x64xf32>
    %c1_133 = arith.constant 1 : index
    %c0_134 = arith.constant 0 : index
    %c0_135 = arith.constant 0 : index
    %157 = vector.load %arg2[%c1_133, %c0_134, %c0_135] : memref<7x32x32xf32, #tpu.memory_space<vmem>>, vector<1x32x32xf32>
    %158 = vector.shape_cast %157 : vector<1x32x32xf32> to vector<32x32xf32>
    %cst_136 = arith.constant dense<0.000000e+00> : vector<32x64xf32>
    %159 = tpu.matmul %158, %155, %cst_136 {dimension_numbers = #tpu.dot_dimension_numbers<[1], [0], [0], [1], [0, 0, 1, 1], [], []>} : vector<32x32xf32>, vector<32x64xf32>, vector<32x64xf32> -> vector<32x64xf32>
    %c11 = arith.constant 11 : index
    %c0_137 = arith.constant 0 : index
    %c0_138 = arith.constant 0 : index
    %160 = vector.load %arg1[%c11, %c0_137, %c0_138] : memref<24x64x64xf32, #tpu.memory_space<vmem>>, vector<1x64x64xf32>
    %161 = vector.shape_cast %160 : vector<1x64x64xf32> to vector<64x64xf32>
    %cst_139 = arith.constant dense<0.000000e+00> : vector<32x64xf32>
    %162 = tpu.matmul %159, %161, %cst_139 {dimension_numbers = #tpu.dot_dimension_numbers<[1], [0], [0], [1], [0, 0, 1, 1], [], []>} : vector<32x64xf32>, vector<64x64xf32>, vector<32x64xf32> -> vector<32x64xf32>
    %163 = arith.addf %156, %162 : vector<32x64xf32>
    %c2_140 = arith.constant 2 : index
    %c0_141 = arith.constant 0 : index
    %c0_142 = arith.constant 0 : index
    %164 = vector.load %arg2[%c2_140, %c0_141, %c0_142] : memref<7x32x32xf32, #tpu.memory_space<vmem>>, vector<1x32x32xf32>
    %165 = vector.shape_cast %164 : vector<1x32x32xf32> to vector<32x32xf32>
    %cst_143 = arith.constant dense<0.000000e+00> : vector<32x64xf32>
    %166 = tpu.matmul %165, %155, %cst_143 {dimension_numbers = #tpu.dot_dimension_numbers<[1], [0], [0], [1], [0, 0, 1, 1], [], []>} : vector<32x32xf32>, vector<32x64xf32>, vector<32x64xf32> -> vector<32x64xf32>
    %c12 = arith.constant 12 : index
    %c0_144 = arith.constant 0 : index
    %c0_145 = arith.constant 0 : index
    %167 = vector.load %arg1[%c12, %c0_144, %c0_145] : memref<24x64x64xf32, #tpu.memory_space<vmem>>, vector<1x64x64xf32>
    %168 = vector.shape_cast %167 : vector<1x64x64xf32> to vector<64x64xf32>
    %cst_146 = arith.constant dense<0.000000e+00> : vector<32x64xf32>
    %169 = tpu.matmul %166, %168, %cst_146 {dimension_numbers = #tpu.dot_dimension_numbers<[1], [0], [0], [1], [0, 0, 1, 1], [], []>} : vector<32x64xf32>, vector<64x64xf32>, vector<32x64xf32> -> vector<32x64xf32>
    %170 = arith.addf %163, %169 : vector<32x64xf32>
    %c13 = arith.constant 13 : index
    %c0_147 = arith.constant 0 : index
    %c0_148 = arith.constant 0 : index
    %171 = vector.load %arg1[%c13, %c0_147, %c0_148] : memref<24x64x64xf32, #tpu.memory_space<vmem>>, vector<1x64x64xf32>
    %172 = vector.shape_cast %171 : vector<1x64x64xf32> to vector<64x64xf32>
    %cst_149 = arith.constant dense<0.000000e+00> : vector<32x64xf32>
    %173 = tpu.matmul %155, %172, %cst_149 {dimension_numbers = #tpu.dot_dimension_numbers<[1], [0], [0], [1], [0, 0, 1, 1], [], []>} : vector<32x64xf32>, vector<64x64xf32>, vector<32x64xf32> -> vector<32x64xf32>
    %174 = arith.addf %170, %173 : vector<32x64xf32>
    %c4_150 = arith.constant 4 : index
    %c0_151 = arith.constant 0 : index
    %c0_152 = arith.constant 0 : index
    %175 = vector.load %arg2[%c4_150, %c0_151, %c0_152] : memref<7x32x32xf32, #tpu.memory_space<vmem>>, vector<1x32x32xf32>
    %176 = vector.shape_cast %175 : vector<1x32x32xf32> to vector<32x32xf32>
    %cst_153 = arith.constant dense<0.000000e+00> : vector<32x64xf32>
    %177 = tpu.matmul %176, %155, %cst_153 {dimension_numbers = #tpu.dot_dimension_numbers<[1], [0], [0], [1], [0, 0, 1, 1], [], []>} : vector<32x32xf32>, vector<32x64xf32>, vector<32x64xf32> -> vector<32x64xf32>
    %c14 = arith.constant 14 : index
    %c0_154 = arith.constant 0 : index
    %c0_155 = arith.constant 0 : index
    %178 = vector.load %arg1[%c14, %c0_154, %c0_155] : memref<24x64x64xf32, #tpu.memory_space<vmem>>, vector<1x64x64xf32>
    %179 = vector.shape_cast %178 : vector<1x64x64xf32> to vector<64x64xf32>
    %cst_156 = arith.constant dense<0.000000e+00> : vector<32x64xf32>
    %180 = tpu.matmul %177, %179, %cst_156 {dimension_numbers = #tpu.dot_dimension_numbers<[1], [0], [0], [1], [0, 0, 1, 1], [], []>} : vector<32x64xf32>, vector<64x64xf32>, vector<32x64xf32> -> vector<32x64xf32>
    %181 = arith.addf %174, %180 : vector<32x64xf32>
    %c5_157 = arith.constant 5 : index
    %c0_158 = arith.constant 0 : index
    %c0_159 = arith.constant 0 : index
    %182 = vector.load %arg2[%c5_157, %c0_158, %c0_159] : memref<7x32x32xf32, #tpu.memory_space<vmem>>, vector<1x32x32xf32>
    %183 = vector.shape_cast %182 : vector<1x32x32xf32> to vector<32x32xf32>
    %cst_160 = arith.constant dense<0.000000e+00> : vector<32x64xf32>
    %184 = tpu.matmul %183, %155, %cst_160 {dimension_numbers = #tpu.dot_dimension_numbers<[1], [0], [0], [1], [0, 0, 1, 1], [], []>} : vector<32x32xf32>, vector<32x64xf32>, vector<32x64xf32> -> vector<32x64xf32>
    %c15 = arith.constant 15 : index
    %c0_161 = arith.constant 0 : index
    %c0_162 = arith.constant 0 : index
    %185 = vector.load %arg1[%c15, %c0_161, %c0_162] : memref<24x64x64xf32, #tpu.memory_space<vmem>>, vector<1x64x64xf32>
    %186 = vector.shape_cast %185 : vector<1x64x64xf32> to vector<64x64xf32>
    %cst_163 = arith.constant dense<0.000000e+00> : vector<32x64xf32>
    %187 = tpu.matmul %184, %186, %cst_163 {dimension_numbers = #tpu.dot_dimension_numbers<[1], [0], [0], [1], [0, 0, 1, 1], [], []>} : vector<32x64xf32>, vector<64x64xf32>, vector<32x64xf32> -> vector<32x64xf32>
    %188 = arith.addf %181, %187 : vector<32x64xf32>
    %c4_164 = arith.constant 4 : index
    %c0_165 = arith.constant 0 : index
    %189 = vector.load %arg3[%c4_164, %c0_165] : memref<6x64xf32, #tpu.memory_space<vmem>>, vector<1x64xf32>
    %190 = vector.broadcast %189 : vector<1x64xf32> to vector<32x64xf32>
    %191 = arith.mulf %188, %190 : vector<32x64xf32>
    %c4_166 = arith.constant 4 : index
    %c0_167 = arith.constant 0 : index
    %192 = vector.load %arg4[%c4_166, %c0_167] : memref<6x64xf32, #tpu.memory_space<vmem>>, vector<1x64xf32>
    %193 = vector.broadcast %192 : vector<1x64xf32> to vector<32x64xf32>
    %194 = arith.addf %191, %193 : vector<32x64xf32>
    %cst_168 = arith.constant 0.000000e+00 : f32
    %195 = vector.broadcast %cst_168 : f32 to vector<32x64xf32>
    %196 = arith.maximumf %194, %195 : vector<32x64xf32>
    %197 = arith.addf %128, %196 : vector<32x64xf32>
    %cst_169 = arith.constant 0.000000e+00 : f32
    %198 = vector.broadcast %cst_169 : f32 to vector<32x64xf32>
    %199 = arith.maximumf %197, %198 : vector<32x64xf32>
    %c0_170 = arith.constant 0 : index
    %c0_171 = arith.constant 0 : index
    %200 = vector.load %arg15[%c0_170, %c0_171] : memref<64x16xf32, #tpu.memory_space<vmem>>, vector<64x16xf32>
    %cst_172 = arith.constant dense<0.000000e+00> : vector<32x16xf32>
    %201 = tpu.matmul %199, %200, %cst_172 {dimension_numbers = #tpu.dot_dimension_numbers<[1], [0], [0], [1], [0, 0, 1, 1], [], []>} : vector<32x64xf32>, vector<64x16xf32>, vector<32x16xf32> -> vector<32x16xf32>
    %c0_173 = arith.constant 0 : index
    %c0_174 = arith.constant 0 : index
    %202 = vector.load %arg17[%c0_173, %c0_174] : memref<1x1xf32, #tpu.memory_space<vmem>>, vector<1x1xf32>
    %203 = vector.broadcast %202 : vector<1x1xf32> to vector<32x16xf32>
    %204 = arith.addf %201, %203 : vector<32x16xf32>
    %205 = arith.negf %204 : vector<32x16xf32>
    %206 = math.exp %205 : vector<32x16xf32>
    %cst_175 = arith.constant 1.000000e+00 : f32
    %207 = vector.broadcast %cst_175 : f32 to vector<32x16xf32>
    %208 = arith.addf %207, %206 : vector<32x16xf32>
    %209 = arith.divf %207, %208 : vector<32x16xf32>
    %c0_176 = arith.constant 0 : index
    %c0_177 = arith.constant 0 : index
    %210 = vector.load %arg16[%c0_176, %c0_177] : memref<16x64xf32, #tpu.memory_space<vmem>>, vector<16x64xf32>
    %cst_178 = arith.constant dense<0.000000e+00> : vector<32x64xf32>
    %211 = tpu.matmul %209, %210, %cst_178 {dimension_numbers = #tpu.dot_dimension_numbers<[1], [0], [0], [1], [0, 0, 1, 1], [], []>} : vector<32x16xf32>, vector<16x64xf32>, vector<32x64xf32> -> vector<32x64xf32>
    %212 = arith.mulf %211, %128 : vector<32x64xf32>
    %cst_179 = arith.constant 1.000000e+00 : f32
    %213 = vector.broadcast %cst_179 : f32 to vector<32x64xf32>
    %214 = arith.subf %213, %211 : vector<32x64xf32>
    %215 = arith.mulf %214, %196 : vector<32x64xf32>
    %cst_180 = arith.constant 0.000000e+00 : f32
    %216 = vector.broadcast %cst_180 : f32 to vector<32x64xf32>
    %c2_181 = arith.constant 2 : index
    %c0_182 = arith.constant 0 : index
    %c0_183 = arith.constant 0 : index
    %217 = vector.load %arg2[%c2_181, %c0_182, %c0_183] : memref<7x32x32xf32, #tpu.memory_space<vmem>>, vector<1x32x32xf32>
    %218 = vector.shape_cast %217 : vector<1x32x32xf32> to vector<32x32xf32>
    %cst_184 = arith.constant dense<0.000000e+00> : vector<32x64xf32>
    %219 = tpu.matmul %218, %212, %cst_184 {dimension_numbers = #tpu.dot_dimension_numbers<[1], [0], [0], [1], [0, 0, 1, 1], [], []>} : vector<32x32xf32>, vector<32x64xf32>, vector<32x64xf32> -> vector<32x64xf32>
    %c18 = arith.constant 18 : index
    %c0_185 = arith.constant 0 : index
    %c0_186 = arith.constant 0 : index
    %220 = vector.load %arg1[%c18, %c0_185, %c0_186] : memref<24x64x64xf32, #tpu.memory_space<vmem>>, vector<1x64x64xf32>
    %221 = vector.shape_cast %220 : vector<1x64x64xf32> to vector<64x64xf32>
    %cst_187 = arith.constant dense<0.000000e+00> : vector<32x64xf32>
    %222 = tpu.matmul %219, %221, %cst_187 {dimension_numbers = #tpu.dot_dimension_numbers<[1], [0], [0], [1], [0, 0, 1, 1], [], []>} : vector<32x64xf32>, vector<64x64xf32>, vector<32x64xf32> -> vector<32x64xf32>
    %223 = arith.addf %216, %222 : vector<32x64xf32>
    %c2_188 = arith.constant 2 : index
    %c0_189 = arith.constant 0 : index
    %c0_190 = arith.constant 0 : index
    %224 = vector.load %arg2[%c2_188, %c0_189, %c0_190] : memref<7x32x32xf32, #tpu.memory_space<vmem>>, vector<1x32x32xf32>
    %225 = vector.shape_cast %224 : vector<1x32x32xf32> to vector<32x32xf32>
    %cst_191 = arith.constant dense<0.000000e+00> : vector<32x64xf32>
    %226 = tpu.matmul %225, %215, %cst_191 {dimension_numbers = #tpu.dot_dimension_numbers<[1], [0], [0], [1], [0, 0, 1, 1], [], []>} : vector<32x32xf32>, vector<32x64xf32>, vector<32x64xf32> -> vector<32x64xf32>
    %c21 = arith.constant 21 : index
    %c0_192 = arith.constant 0 : index
    %c0_193 = arith.constant 0 : index
    %227 = vector.load %arg1[%c21, %c0_192, %c0_193] : memref<24x64x64xf32, #tpu.memory_space<vmem>>, vector<1x64x64xf32>
    %228 = vector.shape_cast %227 : vector<1x64x64xf32> to vector<64x64xf32>
    %cst_194 = arith.constant dense<0.000000e+00> : vector<32x64xf32>
    %229 = tpu.matmul %226, %228, %cst_194 {dimension_numbers = #tpu.dot_dimension_numbers<[1], [0], [0], [1], [0, 0, 1, 1], [], []>} : vector<32x64xf32>, vector<64x64xf32>, vector<32x64xf32> -> vector<32x64xf32>
    %230 = arith.addf %223, %229 : vector<32x64xf32>
    %c19 = arith.constant 19 : index
    %c0_195 = arith.constant 0 : index
    %c0_196 = arith.constant 0 : index
    %231 = vector.load %arg1[%c19, %c0_195, %c0_196] : memref<24x64x64xf32, #tpu.memory_space<vmem>>, vector<1x64x64xf32>
    %232 = vector.shape_cast %231 : vector<1x64x64xf32> to vector<64x64xf32>
    %cst_197 = arith.constant dense<0.000000e+00> : vector<32x64xf32>
    %233 = tpu.matmul %212, %232, %cst_197 {dimension_numbers = #tpu.dot_dimension_numbers<[1], [0], [0], [1], [0, 0, 1, 1], [], []>} : vector<32x64xf32>, vector<64x64xf32>, vector<32x64xf32> -> vector<32x64xf32>
    %234 = arith.addf %230, %233 : vector<32x64xf32>
    %c22 = arith.constant 22 : index
    %c0_198 = arith.constant 0 : index
    %c0_199 = arith.constant 0 : index
    %235 = vector.load %arg1[%c22, %c0_198, %c0_199] : memref<24x64x64xf32, #tpu.memory_space<vmem>>, vector<1x64x64xf32>
    %236 = vector.shape_cast %235 : vector<1x64x64xf32> to vector<64x64xf32>
    %cst_200 = arith.constant dense<0.000000e+00> : vector<32x64xf32>
    %237 = tpu.matmul %215, %236, %cst_200 {dimension_numbers = #tpu.dot_dimension_numbers<[1], [0], [0], [1], [0, 0, 1, 1], [], []>} : vector<32x64xf32>, vector<64x64xf32>, vector<32x64xf32> -> vector<32x64xf32>
    %238 = arith.addf %234, %237 : vector<32x64xf32>
    %c4_201 = arith.constant 4 : index
    %c0_202 = arith.constant 0 : index
    %c0_203 = arith.constant 0 : index
    %239 = vector.load %arg2[%c4_201, %c0_202, %c0_203] : memref<7x32x32xf32, #tpu.memory_space<vmem>>, vector<1x32x32xf32>
    %240 = vector.shape_cast %239 : vector<1x32x32xf32> to vector<32x32xf32>
    %cst_204 = arith.constant dense<0.000000e+00> : vector<32x64xf32>
    %241 = tpu.matmul %240, %212, %cst_204 {dimension_numbers = #tpu.dot_dimension_numbers<[1], [0], [0], [1], [0, 0, 1, 1], [], []>} : vector<32x32xf32>, vector<32x64xf32>, vector<32x64xf32> -> vector<32x64xf32>
    %c20 = arith.constant 20 : index
    %c0_205 = arith.constant 0 : index
    %c0_206 = arith.constant 0 : index
    %242 = vector.load %arg1[%c20, %c0_205, %c0_206] : memref<24x64x64xf32, #tpu.memory_space<vmem>>, vector<1x64x64xf32>
    %243 = vector.shape_cast %242 : vector<1x64x64xf32> to vector<64x64xf32>
    %cst_207 = arith.constant dense<0.000000e+00> : vector<32x64xf32>
    %244 = tpu.matmul %241, %243, %cst_207 {dimension_numbers = #tpu.dot_dimension_numbers<[1], [0], [0], [1], [0, 0, 1, 1], [], []>} : vector<32x64xf32>, vector<64x64xf32>, vector<32x64xf32> -> vector<32x64xf32>
    %245 = arith.addf %238, %244 : vector<32x64xf32>
    %c4_208 = arith.constant 4 : index
    %c0_209 = arith.constant 0 : index
    %c0_210 = arith.constant 0 : index
    %246 = vector.load %arg2[%c4_208, %c0_209, %c0_210] : memref<7x32x32xf32, #tpu.memory_space<vmem>>, vector<1x32x32xf32>
    %247 = vector.shape_cast %246 : vector<1x32x32xf32> to vector<32x32xf32>
    %cst_211 = arith.constant dense<0.000000e+00> : vector<32x64xf32>
    %248 = tpu.matmul %247, %215, %cst_211 {dimension_numbers = #tpu.dot_dimension_numbers<[1], [0], [0], [1], [0, 0, 1, 1], [], []>} : vector<32x32xf32>, vector<32x64xf32>, vector<32x64xf32> -> vector<32x64xf32>
    %c23 = arith.constant 23 : index
    %c0_212 = arith.constant 0 : index
    %c0_213 = arith.constant 0 : index
    %249 = vector.load %arg1[%c23, %c0_212, %c0_213] : memref<24x64x64xf32, #tpu.memory_space<vmem>>, vector<1x64x64xf32>
    %250 = vector.shape_cast %249 : vector<1x64x64xf32> to vector<64x64xf32>
    %cst_214 = arith.constant dense<0.000000e+00> : vector<32x64xf32>
    %251 = tpu.matmul %248, %250, %cst_214 {dimension_numbers = #tpu.dot_dimension_numbers<[1], [0], [0], [1], [0, 0, 1, 1], [], []>} : vector<32x64xf32>, vector<64x64xf32>, vector<32x64xf32> -> vector<32x64xf32>
    %252 = arith.addf %245, %251 : vector<32x64xf32>
    %c5_215 = arith.constant 5 : index
    %c0_216 = arith.constant 0 : index
    %253 = vector.load %arg3[%c5_215, %c0_216] : memref<6x64xf32, #tpu.memory_space<vmem>>, vector<1x64xf32>
    %254 = vector.broadcast %253 : vector<1x64xf32> to vector<32x64xf32>
    %255 = arith.mulf %252, %254 : vector<32x64xf32>
    %c5_217 = arith.constant 5 : index
    %c0_218 = arith.constant 0 : index
    %256 = vector.load %arg4[%c5_217, %c0_218] : memref<6x64xf32, #tpu.memory_space<vmem>>, vector<1x64xf32>
    %257 = vector.broadcast %256 : vector<1x64xf32> to vector<32x64xf32>
    %258 = arith.addf %255, %257 : vector<32x64xf32>
    %c0_219 = arith.constant 0 : index
    %c0_220 = arith.constant 0 : index
    %259 = vector.load %arg18[%c0_219, %c0_220] : memref<32x64xf32, #tpu.memory_space<vmem>>, vector<32x64xf32>
    tpu.vector_store %arg18[%c0_219, %c0_220], %258 {strides = array<i32>} : memref<32x64xf32, #tpu.memory_space<vmem>>, vector<32x64xf32>,
    return
  }
}

</mosaic_0001>

<llo_original>
// kernel: haam_forward.1
$region0: #{haam_forward.1}
  #allocation0 [shape = 'u32[]', space=smem, size = 0x4, offset = 0x4, fixed_abs, tag = 'smem constant byte address 0x4 - core index']
  #allocation1 [shape = 'u32[144,128]{1,0:T(1,128)}', space=vmem, size = 0x12000, scoped, tag = 'internal scratch']
  #allocation2 [shape = 'f32[1,1]{1,0:T(1,128)S(1)}', space=vmem, size = 0x200, scoped, tag = 'scoped memory for haam_forward.1']
  %s0 = inlined_call_operand.vmem [shape: f32[32,64], index: 0, kind: input, shape index: {}]
  %s1 = inlined_call_operand.hbm [shape: f32[24,64,64], index: 1, kind: input, shape index: {}]
  %s2 = inlined_call_operand.vmem [shape: f32[7,32,32], index: 2, kind: input, shape index: {}]
  %s3 = inlined_call_operand.vmem [shape: f32[6,64], index: 3, kind: input, shape index: {}]
  %s4 = inlined_call_operand.vmem [shape: f32[6,64], index: 4, kind: input, shape index: {}]
  %s5 = inlined_call_operand.vmem [shape: f32[8,4], index: 5, kind: input, shape index: {}]
  %s6 = inlined_call_operand.vmem [shape: f32[1,4], index: 6, kind: input, shape index: {}]
  %s7 = inlined_call_operand.vmem [shape: f32[1,4], index: 7, kind: input, shape index: {}]
  %s8 = inlined_call_operand.vmem [shape: f32[1,4], index: 8, kind: input, shape index: {}]
  %s9 = inlined_call_operand.vmem [shape: f32[4,4], index: 9, kind: input, shape index: {}]
  %s10 = inlined_call_operand.vmem [shape: f32[1,4], index: 10, kind: input, shape index: {}]
  %s11 = inlined_call_operand.vmem [shape: f32[2,32], index: 11, kind: input, shape index: {}]
  %s12 = inlined_call_operand.vmem [shape: f32[64,4], index: 12, kind: input, shape index: {}]
  %s13 = inlined_call_operand.vmem [shape: f32[32,2], index: 13, kind: input, shape index: {}]
  %s14 = inlined_call_operand.vmem [shape: f32[4,64], index: 14, kind: input, shape index: {}]
  %s15 = inlined_call_operand.vmem [shape: f32[64,16], index: 15, kind: input, shape index: {}]
  %s16 = inlined_call_operand.vmem [shape: f32[16,64], index: 16, kind: input, shape index: {}]
  %s17 = inlined_call_operand.<no memory space> [shape: f32[1,1], index: 17, kind: input, shape index: {}]
  %s18 = inlined_call_operand.vmem [shape: f32[32,64], index: 18, kind: output, shape index: {}]
  %s19 = sld [smem:[#allocation0]]
  $region86: #{haam_forward.1} parent=0
    _
  %s21 = ssub.s32 1, %s19
  %s22 = scalar_select 0, %s21, %s19
  %v23 = vstv %s17
  %24 = vst [vmem:[#allocation2] sm:$0x1] %v23
  $region1: #{haam_forward.1} parent=0
    #allocation3 [shape = 'u8[786432]{0}', space=vmem, size = 0xc0000, scoped, tag = 'input window, operand 1, single buffered']
    #allocation4 [shape = 's32[1]{0}', space=sflag, size = 0x4, scoped, tag = 'scoped memory for haam_forward.1']
    %25 = vsyncpa [#allocation4], 0
    // Predicated region
    $region2: #{haam_forward.1} parent=1 // pred_check
      _
    $region3: #{haam_forward.1} parent=1 // pred_check_branch
      %27 = sbr.rel (0) target = $region5
    $region4: #{haam_forward.1} parent=1 // pred_region
      _
    $region5: #{haam_forward.1} parent=1 // pred_fallthru
      _
    // Predicated region
    $region6: #{haam_forward.1} parent=1 // pred_check
      _
    $region7: #{haam_forward.1} parent=1 // pred_check_branch
      %29 = sbr.rel (0) target = $region9
    $region8: #{haam_forward.1} parent=1 // pred_region
      %s31 = ssub.s32 24576, 24576
      %32 = vsyncadd [#allocation4], %s31
      %s33 = sshll.u32 [#allocation3], 4
      %s34 = int_to_ptr.vmem [resolvable:$true] %s33
      %39 = dma.hbm_to_vmem [thread:$0]  %s1, 24576, %s34, [#allocation4], 128, 128, 8
    $region9: #{haam_forward.1} parent=1 // pred_fallthru
      _
    // Predicated region
    $region10: #{haam_forward.1} parent=1 // pred_check
      _
    $region11: #{haam_forward.1} parent=1 // pred_check_branch
      %41 = sbr.rel (0) target = $region13
    $region12: #{haam_forward.1} parent=1 // pred_region
      _
    $region13: #{haam_forward.1} parent=1 // pred_fallthru
      _
    // Predicated region
    $region14: #{haam_forward.1} parent=1 // pred_check
      _
    $region15: #{haam_forward.1} parent=1 // pred_check_branch
      %43 = sbr.rel (0) target = $region17
    $region16: #{haam_forward.1} parent=1 // pred_region
      _
    $region17: #{haam_forward.1} parent=1 // pred_fallthru
      _
    // Predicated region
    $region18: #{haam_forward.1} parent=1 // pred_check
      _
    $region19: #{haam_forward.1} parent=1 // pred_check_branch
      %45 = sbr.rel (0) target = $region21
    $region20: #{haam_forward.1} parent=1 // pred_region
      _
    $region21: #{haam_forward.1} parent=1 // pred_fallthru
      _
    // Predicated region
    $region22: #{haam_forward.1} parent=1 // pred_check
      _
    $region23: #{haam_forward.1} parent=1 // pred_check_branch
      %47 = sbr.rel (0) target = $region25
    $region24: #{haam_forward.1} parent=1 // pred_region
      _
    $region25: #{haam_forward.1} parent=1 // pred_fallthru
      _
    // Predicated region
    $region26: #{haam_forward.1} parent=1 // pred_check
      _
    $region27: #{haam_forward.1} parent=1 // pred_check_branch
      %49 = sbr.rel (0) target = $region29
    $region28: #{haam_forward.1} parent=1 // pred_region
      _
    $region29: #{haam_forward.1} parent=1 // pred_fallthru
      _
    // Predicated region
    $region30: #{haam_forward.1} parent=1 // pred_check
      _
    $region31: #{haam_forward.1} parent=1 // pred_check_branch
      %51 = sbr.rel (0) target = $region33
    $region32: #{haam_forward.1} parent=1 // pred_region
      _
    $region33: #{haam_forward.1} parent=1 // pred_fallthru
      _
    // Predicated region
    $region34: #{haam_forward.1} parent=1 // pred_check
      _
    $region35: #{haam_forward.1} parent=1 // pred_check_branch
      %53 = sbr.rel (0) target = $region37
    $region36: #{haam_forward.1} parent=1 // pred_region
      _
    $region37: #{haam_forward.1} parent=1 // pred_fallthru
      _
    // Predicated region
    $region38: #{haam_forward.1} parent=1 // pred_check
      _
    $region39: #{haam_forward.1} parent=1 // pred_check_branch
      %55 = sbr.rel (0) target = $region41
    $region40: #{haam_forward.1} parent=1 // pred_region
      _
    $region41: #{haam_forward.1} parent=1 // pred_fallthru
      _
    // Predicated region
    $region42: #{haam_forward.1} parent=1 // pred_check
      _
    $region43: #{haam_forward.1} parent=1 // pred_check_branch
      %57 = sbr.rel (0) target = $region45
    $region44: #{haam_forward.1} parent=1 // pred_region
      _
    $region45: #{haam_forward.1} parent=1 // pred_fallthru
      _
    // Predicated region
    $region46: #{haam_forward.1} parent=1 // pred_check
      _
    $region47: #{haam_forward.1} parent=1 // pred_check_branch
      %59 = sbr.rel (0) target = $region49
    $region48: #{haam_forward.1} parent=1 // pred_region
      _
    $region49: #{haam_forward.1} parent=1 // pred_fallthru
      _
    // Predicated region
    $region50: #{haam_forward.1} parent=1 // pred_check
      _
    $region51: #{haam_forward.1} parent=1 // pred_check_branch
      %61 = sbr.rel (0) target = $region53
    $region52: #{haam_forward.1} parent=1 // pred_region
      _
    $region53: #{haam_forward.1} parent=1 // pred_fallthru
      _
    // Predicated region
    $region54: #{haam_forward.1} parent=1 // pred_check
      _
    $region55: #{haam_forward.1} parent=1 // pred_check_branch
      %63 = sbr.rel (0) target = $region57
    $region56: #{haam_forward.1} parent=1 // pred_region
      _
    $region57: #{haam_forward.1} parent=1 // pred_fallthru
      _
    // Predicated region
    $region58: #{haam_forward.1} parent=1 // pred_check
      _
    $region59: #{haam_forward.1} parent=1 // pred_check_branch
      %65 = sbr.rel (0) target = $region61
    $region60: #{haam_forward.1} parent=1 // pred_region
      _
    $region61: #{haam_forward.1} parent=1 // pred_fallthru
      _
    // Predicated region
    $region62: #{haam_forward.1} parent=1 // pred_check
      _
    $region63: #{haam_forward.1} parent=1 // pred_check_branch
      %67 = sbr.rel (0) target = $region65
    $region64: #{haam_forward.1} parent=1 // pred_region
      _
    $region65: #{haam_forward.1} parent=1 // pred_fallthru
      _
    // Predicated region
    $region66: #{haam_forward.1} parent=1 // pred_check
      _
    $region67: #{haam_forward.1} parent=1 // pred_check_branch
      %69 = sbr.rel (0) target = $region69
    $region68: #{haam_forward.1} parent=1 // pred_region
      _
    $region69: #{haam_forward.1} parent=1 // pred_fallthru
      _
    // Predicated region
    $region70: #{haam_forward.1} parent=1 // pred_check
      _
    $region71: #{haam_forward.1} parent=1 // pred_check_branch
      %71 = sbr.rel (0) target = $region73
    $region72: #{haam_forward.1} parent=1 // pred_region
      _
    $region73: #{haam_forward.1} parent=1 // pred_fallthru
      _
    // Predicated region
    $region74: #{haam_forward.1} parent=1 // pred_check
      _
    $region75: #{haam_forward.1} parent=1 // pred_check_branch
      %73 = sbr.rel (0) target = $region77
    $region76: #{haam_forward.1} parent=1 // pred_region
      %74 = dma.done [#allocation4], 24576
    $region77: #{haam_forward.1} parent=1 // pred_fallthru
      _
    %v75 = vld [vmem:[%s0] sm:$0xff]
    %v76 = vld [vmem:[%s0 + $0x8] sm:$0xff]
    %v77 = vld [vmem:[%s0 + $0x10] sm:$0xff]
    %v78 = vld [vmem:[%s0 + $0x18] sm:$0xff]
    %v79 = vld [vmem:[%s2] sm:$0xff]
    %v80 = vld [vmem:[%s2 + $0x8] sm:$0xff]
    %v81 = vld [vmem:[%s2 + $0x10] sm:$0xff]
    %v82 = vld [vmem:[%s2 + $0x18] sm:$0xff]
    %vm83 = vcmask 261120
    %v85 = vsel %vm83, %v79, 0
    %v88 = vsel %vm83, %v80, 0
    %v91 = vsel %vm83, %v81, 0
    %v94 = vsel %vm83, %v82, 0
    %96 = vmatprep.subr.mxu0 0.0
    %97 = vmatpush1.msra.mxu0 %v75
    %98 = vmatprep.subr.mxu0 0.0
    %99 = vmatpush1.msra.mxu0 %v76
    %100 = vmatprep.subr.mxu0 0.0
    %101 = vmatpush1.msra.mxu0 %v77
    %102 = vmatprep.subr.mxu0 0.0
    %103 = vmatpush1.msra.mxu0 %v78
    %104 = vmatprep.subr.mxu0 0.0
    %105 = vmatpush1.msra.mxu0 0.0
    %106 = vmatprep.subr.mxu0 0.0
    %107 = vmatpush1.msra.mxu0 0.0
    %108 = vmatprep.subr.mxu0 0.0
    %109 = vmatpush1.msra.mxu0 0.0
    %110 = vmatprep.subr.mxu0 0.0
    %111 = vmatpush1.msra.mxu0 0.0
    %112 = vmatprep.subr.mxu0 0.0
    %113 = vmatpush1.msra.mxu0 0.0
    %114 = vmatprep.subr.mxu0 0.0
    %115 = vmatpush1.msra.mxu0 0.0
    %116 = vmatprep.subr.mxu0 0.0
    %117 = vmatpush1.msra.mxu0 0.0
    %118 = vmatprep.subr.mxu0 0.0
    %119 = vmatpush1.msra.mxu0 0.0
    %120 = vmatprep.subr.mxu0 0.0
    %121 = vmatpush1.msra.mxu0 0.0
    %122 = vmatprep.subr.mxu0 0.0
    %123 = vmatpush1.msra.mxu0 0.0
    %124 = vmatprep.subr.mxu0 0.0
    %125 = vmatpush1.msra.mxu0 0.0
    %126 = vmatprep.subr.mxu0 0.0
    %127 = vmatpush1.msra.mxu0 0.0
    %128 = vmatprep.subr.mxu0 0.0
    %129 = vmatpush1.msra.mxu0 0.0
    %130 = vmatprep.subr.mxu0 0.0
    %131 = vmatpush1.msra.mxu0 0.0
    %132 = vmatprep.subr.mxu0 0.0
    %133 = vmatpush1.msra.mxu0 0.0
    %134 = vmatprep.subr.mxu0 0.0
    %135 = vmatpush1.msra.mxu0 0.0
    %136 = vmatprep.subr.mxu0 0.0
    %137 = vmatpush1.msra.mxu0 0.0
    %138 = vmatprep.subr.mxu0 0.0
    %139 = vmatpush1.msra.mxu0 0.0
    %140 = vmatprep.subr.mxu0 0.0
    %141 = vmatpush1.msra.mxu0 0.0
    %142 = vmatprep.subr.mxu0 0.0
    %143 = vmatpush1.msra.mxu0 0.0
    %144 = vmatprep.subr.mxu0 0.0
    %145 = vmatpush1.msra.mxu0 0.0
    %146 = vmatprep.subr.mxu0 0.0
    %147 = vmatpush1.msra.mxu0 0.0
    %148 = vmatprep.subr.mxu0 0.0
    %149 = vmatpush1.msra.mxu0 0.0
    %150 = vmatprep.subr.mxu0 0.0
    %151 = vmatpush1.msra.mxu0 0.0
    %152 = vmatprep.subr.mxu0 0.0
    %153 = vmatpush1.msra.mxu0 0.0
    %154 = vmatprep.subr.mxu0 0.0
    %155 = vmatpush1.msra.mxu0 0.0
    %156 = vmatprep.subr.mxu0 0.0
    %157 = vmatpush1.msra.mxu0 0.0
    %158 = vmatprep.subr.mxu0 0.0
    %159 = vmatpush1.msra.mxu0 0.0
    %160 = vmatprep.mubr.f32.mxu0 0.0
    %161 = vmatmul.mubr.f32.gmra.mrb[0].mxu0 %v85
    %v162 = vpop.f32.mrb[0].mxu0
    %v163 = vadd.f32 0.0, %v162
    %v164 = vpop.f32.mrb[0].mxu0
    %165 = vmatprep.mubr.f32.mxu0 0.0
    %166 = vmatmul.mubr.f32.gmra.mrb[0].mxu0 %v88
    %v167 = vpop.f32.mrb[0].mxu0
    %v168 = vadd.f32 0.0, %v167
    %v169 = vpop.f32.mrb[0].mxu0
    %170 = vmatprep.mubr.f32.mxu0 0.0
    %171 = vmatmul.mubr.f32.gmra.mrb[0].mxu0 %v91
    %v172 = vpop.f32.mrb[0].mxu0
    %v173 = vadd.f32 0.0, %v172
    %v174 = vpop.f32.mrb[0].mxu0
    %175 = vmatprep.mubr.f32.mxu0 0.0
    %176 = vmatmul.mubr.f32.gmra.mrb[0].mxu0 %v94
    %v177 = vpop.f32.mrb[0].mxu0
    %v178 = vadd.f32 0.0, %v177
    %v179 = vpop.f32.mrb[0].mxu0
    %180 = vdwg.mxu0
    %v181 = vld [vmem:[#allocation3] sm:$0xff]
    %v182 = vld [vmem:[#allocation3 + $0x8] sm:$0xff]
    %v183 = vld [vmem:[#allocation3 + $0x10] sm:$0xff]
    %v184 = vld [vmem:[#allocation3 + $0x18] sm:$0xff]
    %v185 = vld [vmem:[#allocation3 + $0x20] sm:$0xff]
    %v186 = vld [vmem:[#allocation3 + $0x28] sm:$0xff]
    %v187 = vld [vmem:[#allocation3 + $0x30] sm:$0xff]
    %v188 = vld [vmem:[#allocation3 + $0x38] sm:$0xff]
    %s189 = scalar_lea.vmem [#allocation3], 64
    %v190 = vld [vmem:[%s189] sm:$0xff]
    %v191 = vld [vmem:[%s189 + $0x8] sm:$0xff]
    %v192 = vld [vmem:[%s189 + $0x10] sm:$0xff]
    %v193 = vld [vmem:[%s189 + $0x18] sm:$0xff]
    %v194 = vld [vmem:[%s189 + $0x20] sm:$0xff]
    %v195 = vld [vmem:[%s189 + $0x28] sm:$0xff]
    %v196 = vld [vmem:[%s189 + $0x30] sm:$0xff]
    %v197 = vld [vmem:[%s189 + $0x38] sm:$0xff]
    %vm198 = vcmask 523264
    %v200 = vsel %vm198, %v75, 0
    %v203 = vsel %vm198, %v76, 0
    %v206 = vsel %vm198, %v77, 0
    %v209 = vsel %vm198, %v78, 0
    %211 = vmatprep.subr.mxu0 0.0
    %212 = vmatpush1.msra.mxu0 %v190
    %213 = vmatprep.subr.mxu0 0.0
    %214 = vmatpush1.msra.mxu0 %v191
    %215 = vmatprep.subr.mxu0 0.0
    %216 = vmatpush1.msra.mxu0 %v192
    %217 = vmatprep.subr.mxu0 0.0
    %218 = vmatpush1.msra.mxu0 %v193
    %219 = vmatprep.subr.mxu0 0.0
    %220 = vmatpush1.msra.mxu0 %v194
    %221 = vmatprep.subr.mxu0 0.0
    %222 = vmatpush1.msra.mxu0 %v195
    %223 = vmatprep.subr.mxu0 0.0
    %224 = vmatpush1.msra.mxu0 %v196
    %225 = vmatprep.subr.mxu0 0.0
    %226 = vmatpush1.msra.mxu0 %v197
    %227 = vmatprep.subr.mxu0 0.0
    %228 = vmatpush1.msra.mxu0 0.0
    %229 = vmatprep.subr.mxu0 0.0
    %230 = vmatpush1.msra.mxu0 0.0
    %231 = vmatprep.subr.mxu0 0.0
    %232 = vmatpush1.msra.mxu0 0.0
    %233 = vmatprep.subr.mxu0 0.0
    %234 = vmatpush1.msra.mxu0 0.0
    %235 = vmatprep.subr.mxu0 0.0
    %236 = vmatpush1.msra.mxu0 0.0
    %237 = vmatprep.subr.mxu0 0.0
    %238 = vmatpush1.msra.mxu0 0.0
    %239 = vmatprep.subr.mxu0 0.0
    %240 = vmatpush1.msra.mxu0 0.0
    %241 = vmatprep.subr.mxu0 0.0
    %242 = vmatpush1.msra.mxu0 0.0
    %243 = vmatprep.subr.mxu0 0.0
    %244 = vmatpush1.msra.mxu0 0.0
    %245 = vmatprep.subr.mxu0 0.0
    %246 = vmatpush1.msra.mxu0 0.0
    %247 = vmatprep.subr.mxu0 0.0
    %248 = vmatpush1.msra.mxu0 0.0
    %249 = vmatprep.subr.mxu0 0.0
    %250 = vmatpush1.msra.mxu0 0.0
    %251 = vmatprep.subr.mxu0 0.0
    %252 = vmatpush1.msra.mxu0 0.0
    %253 = vmatprep.subr.mxu0 0.0
    %254 = vmatpush1.msra.mxu0 0.0
    %255 = vmatprep.subr.mxu0 0.0
    %256 = vmatpush1.msra.mxu0 0.0
    %257 = vmatprep.subr.mxu0 0.0
    %258 = vmatpush1.msra.mxu0 0.0
    %259 = vmatprep.subr.mxu0 0.0
    %260 = vmatpush1.msra.mxu0 0.0
    %261 = vmatprep.subr.mxu0 0.0
    %262 = vmatpush1.msra.mxu0 0.0
    %263 = vmatprep.subr.mxu0 0.0
    %264 = vmatpush1.msra.mxu0 0.0
    %265 = vmatprep.subr.mxu0 0.0
    %266 = vmatpush1.msra.mxu0 0.0
    %267 = vmatprep.subr.mxu0 0.0
    %268 = vmatpush1.msra.mxu0 0.0
    %269 = vmatprep.subr.mxu0 0.0
    %270 = vmatpush1.msra.mxu0 0.0
    %271 = vmatprep.subr.mxu0 0.0
    %272 = vmatpush1.msra.mxu0 0.0
    %273 = vmatprep.subr.mxu0 0.0
    %274 = vmatpush1.msra.mxu0 0.0
    %275 = vmatprep.mubr.f32.mxu0 0.0
    %276 = vmatmul.mubr.f32.gmra.mrb[0].mxu0 %v200
    %v277 = vpop.f32.mrb[0].mxu0
    %v278 = vadd.f32 0.0, %v277
    %v279 = vpop.f32.mrb[0].mxu0
    %280 = vmatprep.mubr.f32.mxu0 0.0
    %281 = vmatmul.mubr.f32.gmra.mrb[0].mxu0 %v203
    %v282 = vpop.f32.mrb[0].mxu0
    %v283 = vadd.f32 0.0, %v282
    %v284 = vpop.f32.mrb[0].mxu0
    %285 = vmatprep.mubr.f32.mxu0 0.0
    %286 = vmatmul.mubr.f32.gmra.mrb[0].mxu0 %v206
    %v287 = vpop.f32.mrb[0].mxu0
    %v288 = vadd.f32 0.0, %v287
    %v289 = vpop.f32.mrb[0].mxu0
    %290 = vmatprep.mubr.f32.mxu0 0.0
    %291 = vmatmul.mubr.f32.gmra.mrb[0].mxu0 %v209
    %v292 = vpop.f32.mrb[0].mxu0
    %v293 = vadd.f32 0.0, %v292
    %v294 = vpop.f32.mrb[0].mxu0
    %295 = vdwg.mxu0
    %v297 = vsel %vm198, %v163, 0
    %v300 = vsel %vm198, %v168, 0
    %v303 = vsel %vm198, %v173, 0
    %v306 = vsel %vm198, %v178, 0
    %308 = vmatprep.subr.mxu0 0.0
    %309 = vmatpush1.msra.mxu0 %v181
    %310 = vmatprep.subr.mxu0 0.0
    %311 = vmatpush1.msra.mxu0 %v182
    %312 = vmatprep.subr.mxu0 0.0
    %313 = vmatpush1.msra.mxu0 %v183
    %314 = vmatprep.subr.mxu0 0.0
    %315 = vmatpush1.msra.mxu0 %v184
    %316 = vmatprep.subr.mxu0 0.0
    %317 = vmatpush1.msra.mxu0 %v185
    %318 = vmatprep.subr.mxu0 0.0
    %319 = vmatpush1.msra.mxu0 %v186
    %320 = vmatprep.subr.mxu0 0.0
    %321 = vmatpush1.msra.mxu0 %v187
    %322 = vmatprep.subr.mxu0 0.0
    %323 = vmatpush1.msra.mxu0 %v188
    %324 = vmatprep.subr.mxu0 0.0
    %325 = vmatpush1.msra.mxu0 0.0
    %326 = vmatprep.subr.mxu0 0.0
    %327 = vmatpush1.msra.mxu0 0.0
    %328 = vmatprep.subr.mxu0 0.0
    %329 = vmatpush1.msra.mxu0 0.0
    %330 = vmatprep.subr.mxu0 0.0
    %331 = vmatpush1.msra.mxu0 0.0
    %332 = vmatprep.subr.mxu0 0.0
    %333 = vmatpush1.msra.mxu0 0.0
    %334 = vmatprep.subr.mxu0 0.0
    %335 = vmatpush1.msra.mxu0 0.0
    %336 = vmatprep.subr.mxu0 0.0
    %337 = vmatpush1.msra.mxu0 0.0
    %338 = vmatprep.subr.mxu0 0.0
    %339 = vmatpush1.msra.mxu0 0.0
    %340 = vmatprep.subr.mxu0 0.0
    %341 = vmatpush1.msra.mxu0 0.0
    %342 = vmatprep.subr.mxu0 0.0
    %343 = vmatpush1.msra.mxu0 0.0
    %344 = vmatprep.subr.mxu0 0.0
    %345 = vmatpush1.msra.mxu0 0.0
    %346 = vmatprep.subr.mxu0 0.0
    %347 = vmatpush1.msra.mxu0 0.0
    %348 = vmatprep.subr.mxu0 0.0
    %349 = vmatpush1.msra.mxu0 0.0
    %350 = vmatprep.subr.mxu0 0.0
    %351 = vmatpush1.msra.mxu0 0.0
    %352 = vmatprep.subr.mxu0 0.0
    %353 = vmatpush1.msra.mxu0 0.0
    %354 = vmatprep.subr.mxu0 0.0
    %355 = vmatpush1.msra.mxu0 0.0
    %356 = vmatprep.subr.mxu0 0.0
    %357 = vmatpush1.msra.mxu0 0.0
    %358 = vmatprep.subr.mxu0 0.0
    %359 = vmatpush1.msra.mxu0 0.0
    %360 = vmatprep.subr.mxu0 0.0
    %361 = vmatpush1.msra.mxu0 0.0
    %362 = vmatprep.subr.mxu0 0.0
    %363 = vmatpush1.msra.mxu0 0.0
    %364 = vmatprep.subr.mxu0 0.0
    %365 = vmatpush1.msra.mxu0 0.0
    %366 = vmatprep.subr.mxu0 0.0
    %367 = vmatpush1.msra.mxu0 0.0
    %368 = vmatprep.subr.mxu0 0.0
    %369 = vmatpush1.msra.mxu0 0.0
    %370 = vmatprep.subr.mxu0 0.0
    %371 = vmatpush1.msra.mxu0 0.0
    %372 = vmatprep.mubr.f32.mxu0 0.0
    %373 = vmatmul.mubr.f32.gmra.mrb[0].mxu0 %v297
    %v374 = vpop.f32.mrb[0].mxu0
    %v375 = vadd.f32 %v278, %v374
    %v376 = vpop.f32.mrb[0].mxu0
    %377 = vmatprep.mubr.f32.mxu0 0.0
    %378 = vmatmul.mubr.f32.gmra.mrb[0].mxu0 %v300
    %v379 = vpop.f32.mrb[0].mxu0
    %v380 = vadd.f32 %v283, %v379
    %v381 = vpop.f32.mrb[0].mxu0
    %382 = vmatprep.mubr.f32.mxu0 0.0
    %383 = vmatmul.mubr.f32.gmra.mrb[0].mxu0 %v303
    %v384 = vpop.f32.mrb[0].mxu0
    %v385 = vadd.f32 %v288, %v384
    %v386 = vpop.f32.mrb[0].mxu0
    %387 = vmatprep.mubr.f32.mxu0 0.0
    %388 = vmatmul.mubr.f32.gmra.mrb[0].mxu0 %v306
    %v389 = vpop.f32.mrb[0].mxu0
    %v390 = vadd.f32 %v293, %v389
    %v391 = vpop.f32.mrb[0].mxu0
    %392 = vdwg.mxu0
    %s393 = scalar_lea.vmem %s2, 192
    %v394 = vld [vmem:[%s393] sm:$0xff]
    %v395 = vld [vmem:[%s393 + $0x8] sm:$0xff]
    %v396 = vld [vmem:[%s393 + $0x10] sm:$0xff]
    %v397 = vld [vmem:[%s393 + $0x18] sm:$0xff]
    %v399 = vsel %vm83, %v394, 0
    %v402 = vsel %vm83, %v395, 0
    %v405 = vsel %vm83, %v396, 0
    %v408 = vsel %vm83, %v397, 0
    %410 = vmatprep.subr.mxu0 0.0
    %411 = vmatpush1.msra.mxu0 %v75
    %412 = vmatprep.subr.mxu0 0.0
    %413 = vmatpush1.msra.mxu0 %v76
    %414 = vmatprep.subr.mxu0 0.0
    %415 = vmatpush1.msra.mxu0 %v77
    %416 = vmatprep.subr.mxu0 0.0
    %417 = vmatpush1.msra.mxu0 %v78
    %418 = vmatprep.subr.mxu0 0.0
    %419 = vmatpush1.msra.mxu0 0.0
    %420 = vmatprep.subr.mxu0 0.0
    %421 = vmatpush1.msra.mxu0 0.0
    %422 = vmatprep.subr.mxu0 0.0
    %423 = vmatpush1.msra.mxu0 0.0
    %424 = vmatprep.subr.mxu0 0.0
    %425 = vmatpush1.msra.mxu0 0.0
    %426 = vmatprep.subr.mxu0 0.0
    %427 = vmatpush1.msra.mxu0 0.0
    %428 = vmatprep.subr.mxu0 0.0
    %429 = vmatpush1.msra.mxu0 0.0
    %430 = vmatprep.subr.mxu0 0.0
    %431 = vmatpush1.msra.mxu0 0.0
    %432 = vmatprep.subr.mxu0 0.0
    %433 = vmatpush1.msra.mxu0 0.0
    %434 = vmatprep.subr.mxu0 0.0
    %435 = vmatpush1.msra.mxu0 0.0
    %436 = vmatprep.subr.mxu0 0.0
    %437 = vmatpush1.msra.mxu0 0.0
    %438 = vmatprep.subr.mxu0 0.0
    %439 = vmatpush1.msra.mxu0 0.0
    %440 = vmatprep.subr.mxu0 0.0
    %441 = vmatpush1.msra.mxu0 0.0
    %442 = vmatprep.subr.mxu0 0.0
    %443 = vmatpush1.msra.mxu0 0.0
    %444 = vmatprep.subr.mxu0 0.0
    %445 = vmatpush1.msra.mxu0 0.0
    %446 = vmatprep.subr.mxu0 0.0
    %447 = vmatpush1.msra.mxu0 0.0
    %448 = vmatprep.subr.mxu0 0.0
    %449 = vmatpush1.msra.mxu0 0.0
    %450 = vmatprep.subr.mxu0 0.0
    %451 = vmatpush1.msra.mxu0 0.0
    %452 = vmatprep.subr.mxu0 0.0
    %453 = vmatpush1.msra.mxu0 0.0
    %454 = vmatprep.subr.mxu0 0.0
    %455 = vmatpush1.msra.mxu0 0.0
    %456 = vmatprep.subr.mxu0 0.0
    %457 = vmatpush1.msra.mxu0 0.0
    %458 = vmatprep.subr.mxu0 0.0
    %459 = vmatpush1.msra.mxu0 0.0
    %460 = vmatprep.subr.mxu0 0.0
    %461 = vmatpush1.msra.mxu0 0.0
    %462 = vmatprep.subr.mxu0 0.0
    %463 = vmatpush1.msra.mxu0 0.0
    %464 = vmatprep.subr.mxu0 0.0
    %465 = vmatpush1.msra.mxu0 0.0
    %466 = vmatprep.subr.mxu0 0.0
    %467 = vmatpush1.msra.mxu0 0.0
    %468 = vmatprep.subr.mxu0 0.0
    %469 = vmatpush1.msra.mxu0 0.0
    %470 = vmatprep.subr.mxu0 0.0
    %471 = vmatpush1.msra.mxu0 0.0
    %472 = vmatprep.subr.mxu0 0.0
    %473 = vmatpush1.msra.mxu0 0.0
    %474 = vmatprep.mubr.f32.mxu0 0.0
    %475 = vmatmul.mubr.f32.gmra.mrb[0].mxu0 %v399
    %v476 = vpop.f32.mrb[0].mxu0
    %v477 = vadd.f32 0.0, %v476
    %v478 = vpop.f32.mrb[0].mxu0
    %479 = vmatprep.mubr.f32.mxu0 0.0
    %480 = vmatmul.mubr.f32.gmra.mrb[0].mxu0 %v402
    %v481 = vpop.f32.mrb[0].mxu0
    %v482 = vadd.f32 0.0, %v481
    %v483 = vpop.f32.mrb[0].mxu0
    %484 = vmatprep.mubr.f32.mxu0 0.0
    %485 = vmatmul.mubr.f32.gmra.mrb[0].mxu0 %v405
    %v486 = vpop.f32.mrb[0].mxu0
    %v487 = vadd.f32 0.0, %v486
    %v488 = vpop.f32.mrb[0].mxu0
    %489 = vmatprep.mubr.f32.mxu0 0.0
    %490 = vmatmul.mubr.f32.gmra.mrb[0].mxu0 %v408
    %v491 = vpop.f32.mrb[0].mxu0
    %v492 = vadd.f32 0.0, %v491
    %v493 = vpop.f32.mrb[0].mxu0
    %494 = vdwg.mxu0
    %s495 = scalar_lea.vmem [#allocation3], 128
    %v496 = vld [vmem:[%s495] sm:$0xff]
    %v497 = vld [vmem:[%s495 + $0x8] sm:$0xff]
    %v498 = vld [vmem:[%s495 + $0x10] sm:$0xff]
    %v499 = vld [vmem:[%s495 + $0x18] sm:$0xff]
    %v500 = vld [vmem:[%s495 + $0x20] sm:$0xff]
    %v501 = vld [vmem:[%s495 + $0x28] sm:$0xff]
    %v502 = vld [vmem:[%s495 + $0x30] sm:$0xff]
    %v503 = vld [vmem:[%s495 + $0x38] sm:$0xff]
    %v505 = vsel %vm198, %v477, 0
    %v508 = vsel %vm198, %v482, 0
    %v511 = vsel %vm198, %v487, 0
    %v514 = vsel %vm198, %v492, 0
    %516 = vmatprep.subr.mxu0 0.0
    %517 = vmatpush1.msra.mxu0 %v496
    %518 = vmatprep.subr.mxu0 0.0
    %519 = vmatpush1.msra.mxu0 %v497
    %520 = vmatprep.subr.mxu0 0.0
    %521 = vmatpush1.msra.mxu0 %v498
    %522 = vmatprep.subr.mxu0 0.0
    %523 = vmatpush1.msra.mxu0 %v499
    %524 = vmatprep.subr.mxu0 0.0
    %525 = vmatpush1.msra.mxu0 %v500
    %526 = vmatprep.subr.mxu0 0.0
    %527 = vmatpush1.msra.mxu0 %v501
    %528 = vmatprep.subr.mxu0 0.0
    %529 = vmatpush1.msra.mxu0 %v502
    %530 = vmatprep.subr.mxu0 0.0
    %531 = vmatpush1.msra.mxu0 %v503
    %532 = vmatprep.subr.mxu0 0.0
    %533 = vmatpush1.msra.mxu0 0.0
    %534 = vmatprep.subr.mxu0 0.0
    %535 = vmatpush1.msra.mxu0 0.0
    %536 = vmatprep.subr.mxu0 0.0
    %537 = vmatpush1.msra.mxu0 0.0
    %538 = vmatprep.subr.mxu0 0.0
    %539 = vmatpush1.msra.mxu0 0.0
    %540 = vmatprep.subr.mxu0 0.0
    %541 = vmatpush1.msra.mxu0 0.0
    %542 = vmatprep.subr.mxu0 0.0
    %543 = vmatpush1.msra.mxu0 0.0
    %544 = vmatprep.subr.mxu0 0.0
    %545 = vmatpush1.msra.mxu0 0.0
    %546 = vmatprep.subr.mxu0 0.0
    %547 = vmatpush1.msra.mxu0 0.0
    %548 = vmatprep.subr.mxu0 0.0
    %549 = vmatpush1.msra.mxu0 0.0
    %550 = vmatprep.subr.mxu0 0.0
    %551 = vmatpush1.msra.mxu0 0.0
    %552 = vmatprep.subr.mxu0 0.0
    %553 = vmatpush1.msra.mxu0 0.0
    %554 = vmatprep.subr.mxu0 0.0
    %555 = vmatpush1.msra.mxu0 0.0
    %556 = vmatprep.subr.mxu0 0.0
    %557 = vmatpush1.msra.mxu0 0.0
    %558 = vmatprep.subr.mxu0 0.0
    %559 = vmatpush1.msra.mxu0 0.0
    %560 = vmatprep.subr.mxu0 0.0
    %561 = vmatpush1.msra.mxu0 0.0
    %562 = vmatprep.subr.mxu0 0.0
    %563 = vmatpush1.msra.mxu0 0.0
    %564 = vmatprep.subr.mxu0 0.0
    %565 = vmatpush1.msra.mxu0 0.0
    %566 = vmatprep.subr.mxu0 0.0
    %567 = vmatpush1.msra.mxu0 0.0
    %568 = vmatprep.subr.mxu0 0.0
    %569 = vmatpush1.msra.mxu0 0.0
    %570 = vmatprep.subr.mxu0 0.0
    %571 = vmatpush1.msra.mxu0 0.0
    %572 = vmatprep.subr.mxu0 0.0
    %573 = vmatpush1.msra.mxu0 0.0
    %574 = vmatprep.subr.mxu0 0.0
    %575 = vmatpush1.msra.mxu0 0.0
    %576 = vmatprep.subr.mxu0 0.0
    %577 = vmatpush1.msra.mxu0 0.0
    %578 = vmatprep.subr.mxu0 0.0
    %579 = vmatpush1.msra.mxu0 0.0
    %580 = vmatprep.mubr.f32.mxu0 0.0
    %581 = vmatmul.mubr.f32.gmra.mrb[0].mxu0 %v505
    %v582 = vpop.f32.mrb[0].mxu0
    %v583 = vadd.f32 0.0, %v582
    %v584 = vpop.f32.mrb[0].mxu0
    %585 = vmatprep.mubr.f32.mxu0 0.0
    %586 = vmatmul.mubr.f32.gmra.mrb[0].mxu0 %v508
    %v587 = vpop.f32.mrb[0].mxu0
    %v588 = vadd.f32 0.0, %v587
    %v589 = vpop.f32.mrb[0].mxu0
    %590 = vmatprep.mubr.f32.mxu0 0.0
    %591 = vmatmul.mubr.f32.gmra.mrb[0].mxu0 %v511
    %v592 = vpop.f32.mrb[0].mxu0
    %v593 = vadd.f32 0.0, %v592
    %v594 = vpop.f32.mrb[0].mxu0
    %595 = vmatprep.mubr.f32.mxu0 0.0
    %596 = vmatmul.mubr.f32.gmra.mrb[0].mxu0 %v514
    %v597 = vpop.f32.mrb[0].mxu0
    %v598 = vadd.f32 0.0, %v597
    %v599 = vpop.f32.mrb[0].mxu0
    %600 = vdwg.mxu0
    %v601 = vadd.f32 %v375, %v583
    %v602 = vadd.f32 %v380, %v588
    %v603 = vadd.f32 %v385, %v593
    %v604 = vadd.f32 %v390, %v598
    %v605 = vld [vmem:[%s3] sm:$0x1]
    %v606 = vlaneseq
    %v607 = vshrl.u32 %v606, 7
    %v608 = vsub.s32 0, %v607
    %v609 = vrot.slane %v605, %v608
    %v610 = vmul.f32 %v601, %v609
    %v611 = vmul.f32 %v602, %v609
    %v612 = vmul.f32 %v603, %v609
    %v613 = vmul.f32 %v604, %v609
    %v614 = vld [vmem:[%s4] sm:$0x1]
    %v615 = vlaneseq
    %v616 = vshrl.u32 %v615, 7
    %v617 = vsub.s32 0, %v616
    %v618 = vrot.slane %v614, %v617
    %v619 = vadd.f32 %v610, %v618
    %v620 = vadd.f32 %v611, %v618
    %v621 = vadd.f32 %v612, %v618
    %v622 = vadd.f32 %v613, %v618
    %v623 = vmax.f32 %v619, 0.0
    %v624 = vmax.f32 %v620, 0.0
    %v625 = vmax.f32 %v621, 0.0
    %v626 = vmax.f32 %v622, 0.0
    %s627 = scalar_lea.vmem %s2, 32
    %v628 = vld [vmem:[%s627] sm:$0xff]
    %v629 = vld [vmem:[%s627 + $0x8] sm:$0xff]
    %v630 = vld [vmem:[%s627 + $0x10] sm:$0xff]
    %v631 = vld [vmem:[%s627 + $0x18] sm:$0xff]
    %v633 = vsel %vm83, %v628, 0
    %v636 = vsel %vm83, %v629, 0
    %v639 = vsel %vm83, %v630, 0
    %v642 = vsel %vm83, %v631, 0
    %644 = vmatprep.subr.mxu0 0.0
    %645 = vmatpush1.msra.mxu0 %v75
    %646 = vmatprep.subr.mxu0 0.0
    %647 = vmatpush1.msra.mxu0 %v76
    %648 = vmatprep.subr.mxu0 0.0
    %649 = vmatpush1.msra.mxu0 %v77
    %650 = vmatprep.subr.mxu0 0.0
    %651 = vmatpush1.msra.mxu0 %v78
    %652 = vmatprep.subr.mxu0 0.0
    %653 = vmatpush1.msra.mxu0 0.0
    %654 = vmatprep.subr.mxu0 0.0
    %655 = vmatpush1.msra.mxu0 0.0
    %656 = vmatprep.subr.mxu0 0.0
    %657 = vmatpush1.msra.mxu0 0.0
    %658 = vmatprep.subr.mxu0 0.0
    %659 = vmatpush1.msra.mxu0 0.0
    %660 = vmatprep.subr.mxu0 0.0
    %661 = vmatpush1.msra.mxu0 0.0
    %662 = vmatprep.subr.mxu0 0.0
    %663 = vmatpush1.msra.mxu0 0.0
    %664 = vmatprep.subr.mxu0 0.0
    %665 = vmatpush1.msra.mxu0 0.0
    %666 = vmatprep.subr.mxu0 0.0
    %667 = vmatpush1.msra.mxu0 0.0
    %668 = vmatprep.subr.mxu0 0.0
    %669 = vmatpush1.msra.mxu0 0.0
    %670 = vmatprep.subr.mxu0 0.0
    %671 = vmatpush1.msra.mxu0 0.0
    %672 = vmatprep.subr.mxu0 0.0
    %673 = vmatpush1.msra.mxu0 0.0
    %674 = vmatprep.subr.mxu0 0.0
    %675 = vmatpush1.msra.mxu0 0.0
    %676 = vmatprep.subr.mxu0 0.0
    %677 = vmatpush1.msra.mxu0 0.0
    %678 = vmatprep.subr.mxu0 0.0
    %679 = vmatpush1.msra.mxu0 0.0
    %680 = vmatprep.subr.mxu0 0.0
    %681 = vmatpush1.msra.mxu0 0.0
    %682 = vmatprep.subr.mxu0 0.0
    %683 = vmatpush1.msra.mxu0 0.0
    %684 = vmatprep.subr.mxu0 0.0
    %685 = vmatpush1.msra.mxu0 0.0
    %686 = vmatprep.subr.mxu0 0.0
    %687 = vmatpush1.msra.mxu0 0.0
    %688 = vmatprep.subr.mxu0 0.0
    %689 = vmatpush1.msra.mxu0 0.0
    %690 = vmatprep.subr.mxu0 0.0
    %691 = vmatpush1.msra.mxu0 0.0
    %692 = vmatprep.subr.mxu0 0.0
    %693 = vmatpush1.msra.mxu0 0.0
    %694 = vmatprep.subr.mxu0 0.0
    %695 = vmatpush1.msra.mxu0 0.0
    %696 = vmatprep.subr.mxu0 0.0
    %697 = vmatpush1.msra.mxu0 0.0
    %698 = vmatprep.subr.mxu0 0.0
    %699 = vmatpush1.msra.mxu0 0.0
    %700 = vmatprep.subr.mxu0 0.0
    %701 = vmatpush1.msra.mxu0 0.0
    %702 = vmatprep.subr.mxu0 0.0
    %703 = vmatpush1.msra.mxu0 0.0
    %704 = vmatprep.subr.mxu0 0.0
    %705 = vmatpush1.msra.mxu0 0.0
    %706 = vmatprep.subr.mxu0 0.0
    %707 = vmatpush1.msra.mxu0 0.0
    %708 = vmatprep.mubr.f32.mxu0 0.0
    %709 = vmatmul.mubr.f32.gmra.mrb[0].mxu0 %v633
    %v710 = vpop.f32.mrb[0].mxu0
    %v711 = vadd.f32 0.0, %v710
    %v712 = vpop.f32.mrb[0].mxu0
    %713 = vmatprep.mubr.f32.mxu0 0.0
    %714 = vmatmul.mubr.f32.gmra.mrb[0].mxu0 %v636
    %v715 = vpop.f32.mrb[0].mxu0
    %v716 = vadd.f32 0.0, %v715
    %v717 = vpop.f32.mrb[0].mxu0
    %718 = vmatprep.mubr.f32.mxu0 0.0
    %719 = vmatmul.mubr.f32.gmra.mrb[0].mxu0 %v639
    %v720 = vpop.f32.mrb[0].mxu0
    %v721 = vadd.f32 0.0, %v720
    %v722 = vpop.f32.mrb[0].mxu0
    %723 = vmatprep.mubr.f32.mxu0 0.0
    %724 = vmatmul.mubr.f32.gmra.mrb[0].mxu0 %v642
    %v725 = vpop.f32.mrb[0].mxu0
    %v726 = vadd.f32 0.0, %v725
    %v727 = vpop.f32.mrb[0].mxu0
    %728 = vdwg.mxu0
    %s729 = scalar_lea.vmem [#allocation3], 192
    %v730 = vld [vmem:[%s729] sm:$0xff]
    %v731 = vld [vmem:[%s729 + $0x8] sm:$0xff]
    %v732 = vld [vmem:[%s729 + $0x10] sm:$0xff]
    %v733 = vld [vmem:[%s729 + $0x18] sm:$0xff]
    %v734 = vld [vmem:[%s729 + $0x20] sm:$0xff]
    %v735 = vld [vmem:[%s729 + $0x28] sm:$0xff]
    %v736 = vld [vmem:[%s729 + $0x30] sm:$0xff]
    %v737 = vld [vmem:[%s729 + $0x38] sm:$0xff]
    %s738 = scalar_lea.vmem %s2, 64
    %v739 = vld [vmem:[%s738] sm:$0xff]
    %v740 = vld [vmem:[%s738 + $0x8] sm:$0xff]
    %v741 = vld [vmem:[%s738 + $0x10] sm:$0xff]
    %v742 = vld [vmem:[%s738 + $0x18] sm:$0xff]
    %v744 = vsel %vm83, %v739, 0
    %v747 = vsel %vm83, %v740, 0
    %v750 = vsel %vm83, %v741, 0
    %v753 = vsel %vm83, %v742, 0
    %755 = vmatprep.subr.mxu0 0.0
    %756 = vmatpush1.msra.mxu0 %v75
    %757 = vmatprep.subr.mxu0 0.0
    %758 = vmatpush1.msra.mxu0 %v76
    %759 = vmatprep.subr.mxu0 0.0
    %760 = vmatpush1.msra.mxu0 %v77
    %761 = vmatprep.subr.mxu0 0.0
    %762 = vmatpush1.msra.mxu0 %v78
    %763 = vmatprep.subr.mxu0 0.0
    %764 = vmatpush1.msra.mxu0 0.0
    %765 = vmatprep.subr.mxu0 0.0
    %766 = vmatpush1.msra.mxu0 0.0
    %767 = vmatprep.subr.mxu0 0.0
    %768 = vmatpush1.msra.mxu0 0.0
    %769 = vmatprep.subr.mxu0 0.0
    %770 = vmatpush1.msra.mxu0 0.0
    %771 = vmatprep.subr.mxu0 0.0
    %772 = vmatpush1.msra.mxu0 0.0
    %773 = vmatprep.subr.mxu0 0.0
    %774 = vmatpush1.msra.mxu0 0.0
    %775 = vmatprep.subr.mxu0 0.0
    %776 = vmatpush1.msra.mxu0 0.0
    %777 = vmatprep.subr.mxu0 0.0
    %778 = vmatpush1.msra.mxu0 0.0
    %779 = vmatprep.subr.mxu0 0.0
    %780 = vmatpush1.msra.mxu0 0.0
    %781 = vmatprep.subr.mxu0 0.0
    %782 = vmatpush1.msra.mxu0 0.0
    %783 = vmatprep.subr.mxu0 0.0
    %784 = vmatpush1.msra.mxu0 0.0
    %785 = vmatprep.subr.mxu0 0.0
    %786 = vmatpush1.msra.mxu0 0.0
    %787 = vmatprep.subr.mxu0 0.0
    %788 = vmatpush1.msra.mxu0 0.0
    %789 = vmatprep.subr.mxu0 0.0
    %790 = vmatpush1.msra.mxu0 0.0
    %791 = vmatprep.subr.mxu0 0.0
    %792 = vmatpush1.msra.mxu0 0.0
    %793 = vmatprep.subr.mxu0 0.0
    %794 = vmatpush1.msra.mxu0 0.0
    %795 = vmatprep.subr.mxu0 0.0
    %796 = vmatpush1.msra.mxu0 0.0
    %797 = vmatprep.subr.mxu0 0.0
    %798 = vmatpush1.msra.mxu0 0.0
    %799 = vmatprep.subr.mxu0 0.0
    %800 = vmatpush1.msra.mxu0 0.0
    %801 = vmatprep.subr.mxu0 0.0
    %802 = vmatpush1.msra.mxu0 0.0
    %803 = vmatprep.subr.mxu0 0.0
    %804 = vmatpush1.msra.mxu0 0.0
    %805 = vmatprep.subr.mxu0 0.0
    %806 = vmatpush1.msra.mxu0 0.0
    %807 = vmatprep.subr.mxu0 0.0
    %808 = vmatpush1.msra.mxu0 0.0
    %809 = vmatprep.subr.mxu0 0.0
    %810 = vmatpush1.msra.mxu0 0.0
    %811 = vmatprep.subr.mxu0 0.0
    %812 = vmatpush1.msra.mxu0 0.0
    %813 = vmatprep.subr.mxu0 0.0
    %814 = vmatpush1.msra.mxu0 0.0
    %815 = vmatprep.subr.mxu0 0.0
    %816 = vmatpush1.msra.mxu0 0.0
    %817 = vmatprep.subr.mxu0 0.0
    %818 = vmatpush1.msra.mxu0 0.0
    %819 = vmatprep.mubr.f32.mxu0 0.0
    %820 = vmatmul.mubr.f32.gmra.mrb[0].mxu0 %v744
    %v821 = vpop.f32.mrb[0].mxu0
    %v822 = vadd.f32 0.0, %v821
    %v823 = vpop.f32.mrb[0].mxu0
    %824 = vmatprep.mubr.f32.mxu0 0.0
    %825 = vmatmul.mubr.f32.gmra.mrb[0].mxu0 %v747
    %v826 = vpop.f32.mrb[0].mxu0
    %v827 = vadd.f32 0.0, %v826
    %v828 = vpop.f32.mrb[0].mxu0
    %829 = vmatprep.mubr.f32.mxu0 0.0
    %830 = vmatmul.mubr.f32.gmra.mrb[0].mxu0 %v750
    %v831 = vpop.f32.mrb[0].mxu0
    %v832 = vadd.f32 0.0, %v831
    %v833 = vpop.f32.mrb[0].mxu0
    %834 = vmatprep.mubr.f32.mxu0 0.0
    %835 = vmatmul.mubr.f32.gmra.mrb[0].mxu0 %v753
    %v836 = vpop.f32.mrb[0].mxu0
    %v837 = vadd.f32 0.0, %v836
    %v838 = vpop.f32.mrb[0].mxu0
    %839 = vdwg.mxu0
    %s840 = scalar_lea.vmem [#allocation3], 256
    %v841 = vld [vmem:[%s840] sm:$0xff]
    %v842 = vld [vmem:[%s840 + $0x8] sm:$0xff]
    %v843 = vld [vmem:[%s840 + $0x10] sm:$0xff]
    %v844 = vld [vmem:[%s840 + $0x18] sm:$0xff]
    %v845 = vld [vmem:[%s840 + $0x20] sm:$0xff]
    %v846 = vld [vmem:[%s840 + $0x28] sm:$0xff]
    %v847 = vld [vmem:[%s840 + $0x30] sm:$0xff]
    %v848 = vld [vmem:[%s840 + $0x38] sm:$0xff]
    %v850 = vsel %vm198, %v822, 0
    %v853 = vsel %vm198, %v827, 0
    %v856 = vsel %vm198, %v832, 0
    %v859 = vsel %vm198, %v837, 0
    %861 = vmatprep.subr.mxu0 0.0
    %862 = vmatpush1.msra.mxu0 %v841
    %863 = vmatprep.subr.mxu0 0.0
    %864 = vmatpush1.msra.mxu0 %v842
    %865 = vmatprep.subr.mxu0 0.0
    %866 = vmatpush1.msra.mxu0 %v843
    %867 = vmatprep.subr.mxu0 0.0
    %868 = vmatpush1.msra.mxu0 %v844
    %869 = vmatprep.subr.mxu0 0.0
    %870 = vmatpush1.msra.mxu0 %v845
    %871 = vmatprep.subr.mxu0 0.0
    %872 = vmatpush1.msra.mxu0 %v846
    %873 = vmatprep.subr.mxu0 0.0
    %874 = vmatpush1.msra.mxu0 %v847
    %875 = vmatprep.subr.mxu0 0.0
    %876 = vmatpush1.msra.mxu0 %v848
    %877 = vmatprep.subr.mxu0 0.0
    %878 = vmatpush1.msra.mxu0 0.0
    %879 = vmatprep.subr.mxu0 0.0
    %880 = vmatpush1.msra.mxu0 0.0
    %881 = vmatprep.subr.mxu0 0.0
    %882 = vmatpush1.msra.mxu0 0.0
    %883 = vmatprep.subr.mxu0 0.0
    %884 = vmatpush1.msra.mxu0 0.0
    %885 = vmatprep.subr.mxu0 0.0
    %886 = vmatpush1.msra.mxu0 0.0
    %887 = vmatprep.subr.mxu0 0.0
    %888 = vmatpush1.msra.mxu0 0.0
    %889 = vmatprep.subr.mxu0 0.0
    %890 = vmatpush1.msra.mxu0 0.0
    %891 = vmatprep.subr.mxu0 0.0
    %892 = vmatpush1.msra.mxu0 0.0
    %893 = vmatprep.subr.mxu0 0.0
    %894 = vmatpush1.msra.mxu0 0.0
    %895 = vmatprep.subr.mxu0 0.0
    %896 = vmatpush1.msra.mxu0 0.0
    %897 = vmatprep.subr.mxu0 0.0
    %898 = vmatpush1.msra.mxu0 0.0
    %899 = vmatprep.subr.mxu0 0.0
    %900 = vmatpush1.msra.mxu0 0.0
    %901 = vmatprep.subr.mxu0 0.0
    %902 = vmatpush1.msra.mxu0 0.0
    %903 = vmatprep.subr.mxu0 0.0
    %904 = vmatpush1.msra.mxu0 0.0
    %905 = vmatprep.subr.mxu0 0.0
    %906 = vmatpush1.msra.mxu0 0.0
    %907 = vmatprep.subr.mxu0 0.0
    %908 = vmatpush1.msra.mxu0 0.0
    %909 = vmatprep.subr.mxu0 0.0
    %910 = vmatpush1.msra.mxu0 0.0
    %911 = vmatprep.subr.mxu0 0.0
    %912 = vmatpush1.msra.mxu0 0.0
    %913 = vmatprep.subr.mxu0 0.0
    %914 = vmatpush1.msra.mxu0 0.0
    %915 = vmatprep.subr.mxu0 0.0
    %916 = vmatpush1.msra.mxu0 0.0
    %917 = vmatprep.subr.mxu0 0.0
    %918 = vmatpush1.msra.mxu0 0.0
    %919 = vmatprep.subr.mxu0 0.0
    %920 = vmatpush1.msra.mxu0 0.0
    %921 = vmatprep.subr.mxu0 0.0
    %922 = vmatpush1.msra.mxu0 0.0
    %923 = vmatprep.subr.mxu0 0.0
    %924 = vmatpush1.msra.mxu0 0.0
    %925 = vmatprep.mubr.f32.mxu0 0.0
    %926 = vmatmul.mubr.f32.gmra.mrb[0].mxu0 %v850
    %v927 = vpop.f32.mrb[0].mxu0
    %v928 = vadd.f32 0.0, %v927
    %v929 = vpop.f32.mrb[0].mxu0
    %930 = vmatprep.mubr.f32.mxu0 0.0
    %931 = vmatmul.mubr.f32.gmra.mrb[0].mxu0 %v853
    %v932 = vpop.f32.mrb[0].mxu0
    %v933 = vadd.f32 0.0, %v932
    %v934 = vpop.f32.mrb[0].mxu0
    %935 = vmatprep.mubr.f32.mxu0 0.0
    %936 = vmatmul.mubr.f32.gmra.mrb[0].mxu0 %v856
    %v937 = vpop.f32.mrb[0].mxu0
    %v938 = vadd.f32 0.0, %v937
    %v939 = vpop.f32.mrb[0].mxu0
    %940 = vmatprep.mubr.f32.mxu0 0.0
    %941 = vmatmul.mubr.f32.gmra.mrb[0].mxu0 %v859
    %v942 = vpop.f32.mrb[0].mxu0
    %v943 = vadd.f32 0.0, %v942
    %v944 = vpop.f32.mrb[0].mxu0
    %945 = vdwg.mxu0
    %v947 = vsel %vm198, %v711, 0
    %v950 = vsel %vm198, %v716, 0
    %v953 = vsel %vm198, %v721, 0
    %v956 = vsel %vm198, %v726, 0
    %958 = vmatprep.subr.mxu0 0.0
    %959 = vmatpush1.msra.mxu0 %v730
    %960 = vmatprep.subr.mxu0 0.0
    %961 = vmatpush1.msra.mxu0 %v731
    %962 = vmatprep.subr.mxu0 0.0
    %963 = vmatpush1.msra.mxu0 %v732
    %964 = vmatprep.subr.mxu0 0.0
    %965 = vmatpush1.msra.mxu0 %v733
    %966 = vmatprep.subr.mxu0 0.0
    %967 = vmatpush1.msra.mxu0 %v734
    %968 = vmatprep.subr.mxu0 0.0
    %969 = vmatpush1.msra.mxu0 %v735
    %970 = vmatprep.subr.mxu0 0.0
    %971 = vmatpush1.msra.mxu0 %v736
    %972 = vmatprep.subr.mxu0 0.0
    %973 = vmatpush1.msra.mxu0 %v737
    %974 = vmatprep.subr.mxu0 0.0
    %975 = vmatpush1.msra.mxu0 0.0
    %976 = vmatprep.subr.mxu0 0.0
    %977 = vmatpush1.msra.mxu0 0.0
    %978 = vmatprep.subr.mxu0 0.0
    %979 = vmatpush1.msra.mxu0 0.0
    %980 = vmatprep.subr.mxu0 0.0
    %981 = vmatpush1.msra.mxu0 0.0
    %982 = vmatprep.subr.mxu0 0.0
    %983 = vmatpush1.msra.mxu0 0.0
    %984 = vmatprep.subr.mxu0 0.0
    %985 = vmatpush1.msra.mxu0 0.0
    %986 = vmatprep.subr.mxu0 0.0
    %987 = vmatpush1.msra.mxu0 0.0
    %988 = vmatprep.subr.mxu0 0.0
    %989 = vmatpush1.msra.mxu0 0.0
    %990 = vmatprep.subr.mxu0 0.0
    %991 = vmatpush1.msra.mxu0 0.0
    %992 = vmatprep.subr.mxu0 0.0
    %993 = vmatpush1.msra.mxu0 0.0
    %994 = vmatprep.subr.mxu0 0.0
    %995 = vmatpush1.msra.mxu0 0.0
    %996 = vmatprep.subr.mxu0 0.0
    %997 = vmatpush1.msra.mxu0 0.0
    %998 = vmatprep.subr.mxu0 0.0
    %999 = vmatpush1.msra.mxu0 0.0
    %1000 = vmatprep.subr.mxu0 0.0
    %1001 = vmatpush1.msra.mxu0 0.0
    %1002 = vmatprep.subr.mxu0 0.0
    %1003 = vmatpush1.msra.mxu0 0.0
    %1004 = vmatprep.subr.mxu0 0.0
    %1005 = vmatpush1.msra.mxu0 0.0
    %1006 = vmatprep.subr.mxu0 0.0
    %1007 = vmatpush1.msra.mxu0 0.0
    %1008 = vmatprep.subr.mxu0 0.0
    %1009 = vmatpush1.msra.mxu0 0.0
    %1010 = vmatprep.subr.mxu0 0.0
    %1011 = vmatpush1.msra.mxu0 0.0
    %1012 = vmatprep.subr.mxu0 0.0
    %1013 = vmatpush1.msra.mxu0 0.0
    %1014 = vmatprep.subr.mxu0 0.0
    %1015 = vmatpush1.msra.mxu0 0.0
    %1016 = vmatprep.subr.mxu0 0.0
    %1017 = vmatpush1.msra.mxu0 0.0
    %1018 = vmatprep.subr.mxu0 0.0
    %1019 = vmatpush1.msra.mxu0 0.0
    %1020 = vmatprep.subr.mxu0 0.0
    %1021 = vmatpush1.msra.mxu0 0.0
    %1022 = vmatprep.mubr.f32.mxu0 0.0
    %1023 = vmatmul.mubr.f32.gmra.mrb[0].mxu0 %v947
    %v1024 = vpop.f32.mrb[0].mxu0
    %v1025 = vadd.f32 %v928, %v1024
    %v1026 = vpop.f32.mrb[0].mxu0
    %1027 = vmatprep.mubr.f32.mxu0 0.0
    %1028 = vmatmul.mubr.f32.gmra.mrb[0].mxu0 %v950
    %v1029 = vpop.f32.mrb[0].mxu0
    %v1030 = vadd.f32 %v933, %v1029
    %v1031 = vpop.f32.mrb[0].mxu0
    %1032 = vmatprep.mubr.f32.mxu0 0.0
    %1033 = vmatmul.mubr.f32.gmra.mrb[0].mxu0 %v953
    %v1034 = vpop.f32.mrb[0].mxu0
    %v1035 = vadd.f32 %v938, %v1034
    %v1036 = vpop.f32.mrb[0].mxu0
    %1037 = vmatprep.mubr.f32.mxu0 0.0
    %1038 = vmatmul.mubr.f32.gmra.mrb[0].mxu0 %v956
    %v1039 = vpop.f32.mrb[0].mxu0
    %v1040 = vadd.f32 %v943, %v1039
    %v1041 = vpop.f32.mrb[0].mxu0
    %1042 = vdwg.mxu0
    %s1043 = scalar_lea.vmem [#allocation3], 320
    %v1044 = vld [vmem:[%s1043] sm:$0xff]
    %v1045 = vld [vmem:[%s1043 + $0x8] sm:$0xff]
    %v1046 = vld [vmem:[%s1043 + $0x10] sm:$0xff]
    %v1047 = vld [vmem:[%s1043 + $0x18] sm:$0xff]
    %v1048 = vld [vmem:[%s1043 + $0x20] sm:$0xff]
    %v1049 = vld [vmem:[%s1043 + $0x28] sm:$0xff]
    %v1050 = vld [vmem:[%s1043 + $0x30] sm:$0xff]
    %v1051 = vld [vmem:[%s1043 + $0x38] sm:$0xff]
    %1052 = vmatprep.subr.mxu0 0.0
    %1053 = vmatpush1.msra.mxu0 %v1044
    %1054 = vmatprep.subr.mxu0 0.0
    %1055 = vmatpush1.msra.mxu0 %v1045
    %1056 = vmatprep.subr.mxu0 0.0
    %1057 = vmatpush1.msra.mxu0 %v1046
    %1058 = vmatprep.subr.mxu0 0.0
    %1059 = vmatpush1.msra.mxu0 %v1047
    %1060 = vmatprep.subr.mxu0 0.0
    %1061 = vmatpush1.msra.mxu0 %v1048
    %1062 = vmatprep.subr.mxu0 0.0
    %1063 = vmatpush1.msra.mxu0 %v1049
    %1064 = vmatprep.subr.mxu0 0.0
    %1065 = vmatpush1.msra.mxu0 %v1050
    %1066 = vmatprep.subr.mxu0 0.0
    %1067 = vmatpush1.msra.mxu0 %v1051
    %1068 = vmatprep.subr.mxu0 0.0
    %1069 = vmatpush1.msra.mxu0 0.0
    %1070 = vmatprep.subr.mxu0 0.0
    %1071 = vmatpush1.msra.mxu0 0.0
    %1072 = vmatprep.subr.mxu0 0.0
    %1073 = vmatpush1.msra.mxu0 0.0
    %1074 = vmatprep.subr.mxu0 0.0
    %1075 = vmatpush1.msra.mxu0 0.0
    %1076 = vmatprep.subr.mxu0 0.0
    %1077 = vmatpush1.msra.mxu0 0.0
    %1078 = vmatprep.subr.mxu0 0.0
    %1079 = vmatpush1.msra.mxu0 0.0
    %1080 = vmatprep.subr.mxu0 0.0
    %1081 = vmatpush1.msra.mxu0 0.0
    %1082 = vmatprep.subr.mxu0 0.0
    %1083 = vmatpush1.msra.mxu0 0.0
    %1084 = vmatprep.subr.mxu0 0.0
    %1085 = vmatpush1.msra.mxu0 0.0
    %1086 = vmatprep.subr.mxu0 0.0
    %1087 = vmatpush1.msra.mxu0 0.0
    %1088 = vmatprep.subr.mxu0 0.0
    %1089 = vmatpush1.msra.mxu0 0.0
    %1090 = vmatprep.subr.mxu0 0.0
    %1091 = vmatpush1.msra.mxu0 0.0
    %1092 = vmatprep.subr.mxu0 0.0
    %1093 = vmatpush1.msra.mxu0 0.0
    %1094 = vmatprep.subr.mxu0 0.0
    %1095 = vmatpush1.msra.mxu0 0.0
    %1096 = vmatprep.subr.mxu0 0.0
    %1097 = vmatpush1.msra.mxu0 0.0
    %1098 = vmatprep.subr.mxu0 0.0
    %1099 = vmatpush1.msra.mxu0 0.0
    %1100 = vmatprep.subr.mxu0 0.0
    %1101 = vmatpush1.msra.mxu0 0.0
    %1102 = vmatprep.subr.mxu0 0.0
    %1103 = vmatpush1.msra.mxu0 0.0
    %1104 = vmatprep.subr.mxu0 0.0
    %1105 = vmatpush1.msra.mxu0 0.0
    %1106 = vmatprep.subr.mxu0 0.0
    %1107 = vmatpush1.msra.mxu0 0.0
    %1108 = vmatprep.subr.mxu0 0.0
    %1109 = vmatpush1.msra.mxu0 0.0
    %1110 = vmatprep.subr.mxu0 0.0
    %1111 = vmatpush1.msra.mxu0 0.0
    %1112 = vmatprep.subr.mxu0 0.0
    %1113 = vmatpush1.msra.mxu0 0.0
    %1114 = vmatprep.subr.mxu0 0.0
    %1115 = vmatpush1.msra.mxu0 0.0
    %1116 = vmatprep.mubr.f32.mxu0 0.0
    %1117 = vmatmul.mubr.f32.gmra.mrb[0].mxu0 %v200
    %v1118 = vpop.f32.mrb[0].mxu0
    %v1119 = vadd.f32 0.0, %v1118
    %v1120 = vpop.f32.mrb[0].mxu0
    %1121 = vmatprep.mubr.f32.mxu0 0.0
    %1122 = vmatmul.mubr.f32.gmra.mrb[0].mxu0 %v203
    %v1123 = vpop.f32.mrb[0].mxu0
    %v1124 = vadd.f32 0.0, %v1123
    %v1125 = vpop.f32.mrb[0].mxu0
    %1126 = vmatprep.mubr.f32.mxu0 0.0
    %1127 = vmatmul.mubr.f32.gmra.mrb[0].mxu0 %v206
    %v1128 = vpop.f32.mrb[0].mxu0
    %v1129 = vadd.f32 0.0, %v1128
    %v1130 = vpop.f32.mrb[0].mxu0
    %1131 = vmatprep.mubr.f32.mxu0 0.0
    %1132 = vmatmul.mubr.f32.gmra.mrb[0].mxu0 %v209
    %v1133 = vpop.f32.mrb[0].mxu0
    %v1134 = vadd.f32 0.0, %v1133
    %v1135 = vpop.f32.mrb[0].mxu0
    %1136 = vdwg.mxu0
    %v1137 = vadd.f32 %v1025, %v1119
    %v1138 = vadd.f32 %v1030, %v1124
    %v1139 = vadd.f32 %v1035, %v1129
    %v1140 = vadd.f32 %v1040, %v1134
    %s1141 = scalar_lea.vmem %s2, 128
    %v1142 = vld [vmem:[%s1141] sm:$0xff]
    %v1143 = vld [vmem:[%s1141 + $0x8] sm:$0xff]
    %v1144 = vld [vmem:[%s1141 + $0x10] sm:$0xff]
    %v1145 = vld [vmem:[%s1141 + $0x18] sm:$0xff]
    %v1147 = vsel %vm83, %v1142, 0
    %v1150 = vsel %vm83, %v1143, 0
    %v1153 = vsel %vm83, %v1144, 0
    %v1156 = vsel %vm83, %v1145, 0
    %1158 = vmatprep.subr.mxu0 0.0
    %1159 = vmatpush1.msra.mxu0 %v75
    %1160 = vmatprep.subr.mxu0 0.0
    %1161 = vmatpush1.msra.mxu0 %v76
    %1162 = vmatprep.subr.mxu0 0.0
    %1163 = vmatpush1.msra.mxu0 %v77
    %1164 = vmatprep.subr.mxu0 0.0
    %1165 = vmatpush1.msra.mxu0 %v78
    %1166 = vmatprep.subr.mxu0 0.0
    %1167 = vmatpush1.msra.mxu0 0.0
    %1168 = vmatprep.subr.mxu0 0.0
    %1169 = vmatpush1.msra.mxu0 0.0
    %1170 = vmatprep.subr.mxu0 0.0
    %1171 = vmatpush1.msra.mxu0 0.0
    %1172 = vmatprep.subr.mxu0 0.0
    %1173 = vmatpush1.msra.mxu0 0.0
    %1174 = vmatprep.subr.mxu0 0.0
    %1175 = vmatpush1.msra.mxu0 0.0
    %1176 = vmatprep.subr.mxu0 0.0
    %1177 = vmatpush1.msra.mxu0 0.0
    %1178 = vmatprep.subr.mxu0 0.0
    %1179 = vmatpush1.msra.mxu0 0.0
    %1180 = vmatprep.subr.mxu0 0.0
    %1181 = vmatpush1.msra.mxu0 0.0
    %1182 = vmatprep.subr.mxu0 0.0
    %1183 = vmatpush1.msra.mxu0 0.0
    %1184 = vmatprep.subr.mxu0 0.0
    %1185 = vmatpush1.msra.mxu0 0.0
    %1186 = vmatprep.subr.mxu0 0.0
    %1187 = vmatpush1.msra.mxu0 0.0
    %1188 = vmatprep.subr.mxu0 0.0
    %1189 = vmatpush1.msra.mxu0 0.0
    %1190 = vmatprep.subr.mxu0 0.0
    %1191 = vmatpush1.msra.mxu0 0.0
    %1192 = vmatprep.subr.mxu0 0.0
    %1193 = vmatpush1.msra.mxu0 0.0
    %1194 = vmatprep.subr.mxu0 0.0
    %1195 = vmatpush1.msra.mxu0 0.0
    %1196 = vmatprep.subr.mxu0 0.0
    %1197 = vmatpush1.msra.mxu0 0.0
    %1198 = vmatprep.subr.mxu0 0.0
    %1199 = vmatpush1.msra.mxu0 0.0
    %1200 = vmatprep.subr.mxu0 0.0
    %1201 = vmatpush1.msra.mxu0 0.0
    %1202 = vmatprep.subr.mxu0 0.0
    %1203 = vmatpush1.msra.mxu0 0.0
    %1204 = vmatprep.subr.mxu0 0.0
    %1205 = vmatpush1.msra.mxu0 0.0
    %1206 = vmatprep.subr.mxu0 0.0
    %1207 = vmatpush1.msra.mxu0 0.0
    %1208 = vmatprep.subr.mxu0 0.0
    %1209 = vmatpush1.msra.mxu0 0.0
    %1210 = vmatprep.subr.mxu0 0.0
    %1211 = vmatpush1.msra.mxu0 0.0
    %1212 = vmatprep.subr.mxu0 0.0
    %1213 = vmatpush1.msra.mxu0 0.0
    %1214 = vmatprep.subr.mxu0 0.0
    %1215 = vmatpush1.msra.mxu0 0.0
    %1216 = vmatprep.subr.mxu0 0.0
    %1217 = vmatpush1.msra.mxu0 0.0
    %1218 = vmatprep.subr.mxu0 0.0
    %1219 = vmatpush1.msra.mxu0 0.0
    %1220 = vmatprep.subr.mxu0 0.0
    %1221 = vmatpush1.msra.mxu0 0.0
    %1222 = vmatprep.mubr.f32.mxu0 0.0
    %1223 = vmatmul.mubr.f32.gmra.mrb[0].mxu0 %v1147
    %v1224 = vpop.f32.mrb[0].mxu0
    %v1225 = vadd.f32 0.0, %v1224
    %v1226 = vpop.f32.mrb[0].mxu0
    %1227 = vmatprep.mubr.f32.mxu0 0.0
    %1228 = vmatmul.mubr.f32.gmra.mrb[0].mxu0 %v1150
    %v1229 = vpop.f32.mrb[0].mxu0
    %v1230 = vadd.f32 0.0, %v1229
    %v1231 = vpop.f32.mrb[0].mxu0
    %1232 = vmatprep.mubr.f32.mxu0 0.0
    %1233 = vmatmul.mubr.f32.gmra.mrb[0].mxu0 %v1153
    %v1234 = vpop.f32.mrb[0].mxu0
    %v1235 = vadd.f32 0.0, %v1234
    %v1236 = vpop.f32.mrb[0].mxu0
    %1237 = vmatprep.mubr.f32.mxu0 0.0
    %1238 = vmatmul.mubr.f32.gmra.mrb[0].mxu0 %v1156
    %v1239 = vpop.f32.mrb[0].mxu0
    %v1240 = vadd.f32 0.0, %v1239
    %v1241 = vpop.f32.mrb[0].mxu0
    %1242 = vdwg.mxu0
    %s1243 = scalar_lea.vmem [#allocation3], 384
    %v1244 = vld [vmem:[%s1243] sm:$0xff]
    %v1245 = vld [vmem:[%s1243 + $0x8] sm:$0xff]
    %v1246 = vld [vmem:[%s1243 + $0x10] sm:$0xff]
    %v1247 = vld [vmem:[%s1243 + $0x18] sm:$0xff]
    %v1248 = vld [vmem:[%s1243 + $0x20] sm:$0xff]
    %v1249 = vld [vmem:[%s1243 + $0x28] sm:$0xff]
    %v1250 = vld [vmem:[%s1243 + $0x30] sm:$0xff]
    %v1251 = vld [vmem:[%s1243 + $0x38] sm:$0xff]
    %v1253 = vsel %vm198, %v1225, 0
    %v1256 = vsel %vm198, %v1230, 0
    %v1259 = vsel %vm198, %v1235, 0
    %v1262 = vsel %vm198, %v1240, 0
    %1264 = vmatprep.subr.mxu0 0.0
    %1265 = vmatpush1.msra.mxu0 %v1244
    %1266 = vmatprep.subr.mxu0 0.0
    %1267 = vmatpush1.msra.mxu0 %v1245
    %1268 = vmatprep.subr.mxu0 0.0
    %1269 = vmatpush1.msra.mxu0 %v1246
    %1270 = vmatprep.subr.mxu0 0.0
    %1271 = vmatpush1.msra.mxu0 %v1247
    %1272 = vmatprep.subr.mxu0 0.0
    %1273 = vmatpush1.msra.mxu0 %v1248
    %1274 = vmatprep.subr.mxu0 0.0
    %1275 = vmatpush1.msra.mxu0 %v1249
    %1276 = vmatprep.subr.mxu0 0.0
    %1277 = vmatpush1.msra.mxu0 %v1250
    %1278 = vmatprep.subr.mxu0 0.0
    %1279 = vmatpush1.msra.mxu0 %v1251
    %1280 = vmatprep.subr.mxu0 0.0
    %1281 = vmatpush1.msra.mxu0 0.0
    %1282 = vmatprep.subr.mxu0 0.0
    %1283 = vmatpush1.msra.mxu0 0.0
    %1284 = vmatprep.subr.mxu0 0.0
    %1285 = vmatpush1.msra.mxu0 0.0
    %1286 = vmatprep.subr.mxu0 0.0
    %1287 = vmatpush1.msra.mxu0 0.0
    %1288 = vmatprep.subr.mxu0 0.0
    %1289 = vmatpush1.msra.mxu0 0.0
    %1290 = vmatprep.subr.mxu0 0.0
    %1291 = vmatpush1.msra.mxu0 0.0
    %1292 = vmatprep.subr.mxu0 0.0
    %1293 = vmatpush1.msra.mxu0 0.0
    %1294 = vmatprep.subr.mxu0 0.0
    %1295 = vmatpush1.msra.mxu0 0.0
    %1296 = vmatprep.subr.mxu0 0.0
    %1297 = vmatpush1.msra.mxu0 0.0
    %1298 = vmatprep.subr.mxu0 0.0
    %1299 = vmatpush1.msra.mxu0 0.0
    %1300 = vmatprep.subr.mxu0 0.0
    %1301 = vmatpush1.msra.mxu0 0.0
    %1302 = vmatprep.subr.mxu0 0.0
    %1303 = vmatpush1.msra.mxu0 0.0
    %1304 = vmatprep.subr.mxu0 0.0
    %1305 = vmatpush1.msra.mxu0 0.0
    %1306 = vmatprep.subr.mxu0 0.0
    %1307 = vmatpush1.msra.mxu0 0.0
    %1308 = vmatprep.subr.mxu0 0.0
    %1309 = vmatpush1.msra.mxu0 0.0
    %1310 = vmatprep.subr.mxu0 0.0
    %1311 = vmatpush1.msra.mxu0 0.0
    %1312 = vmatprep.subr.mxu0 0.0
    %1313 = vmatpush1.msra.mxu0 0.0
    %1314 = vmatprep.subr.mxu0 0.0
    %1315 = vmatpush1.msra.mxu0 0.0
    %1316 = vmatprep.subr.mxu0 0.0
    %1317 = vmatpush1.msra.mxu0 0.0
    %1318 = vmatprep.subr.mxu0 0.0
    %1319 = vmatpush1.msra.mxu0 0.0
    %1320 = vmatprep.subr.mxu0 0.0
    %1321 = vmatpush1.msra.mxu0 0.0
    %1322 = vmatprep.subr.mxu0 0.0
    %1323 = vmatpush1.msra.mxu0 0.0
    %1324 = vmatprep.subr.mxu0 0.0
    %1325 = vmatpush1.msra.mxu0 0.0
    %1326 = vmatprep.subr.mxu0 0.0
    %1327 = vmatpush1.msra.mxu0 0.0
    %1328 = vmatprep.mubr.f32.mxu0 0.0
    %1329 = vmatmul.mubr.f32.gmra.mrb[0].mxu0 %v1253
    %v1330 = vpop.f32.mrb[0].mxu0
    %v1331 = vadd.f32 0.0, %v1330
    %v1332 = vpop.f32.mrb[0].mxu0
    %1333 = vmatprep.mubr.f32.mxu0 0.0
    %1334 = vmatmul.mubr.f32.gmra.mrb[0].mxu0 %v1256
    %v1335 = vpop.f32.mrb[0].mxu0
    %v1336 = vadd.f32 0.0, %v1335
    %v1337 = vpop.f32.mrb[0].mxu0
    %1338 = vmatprep.mubr.f32.mxu0 0.0
    %1339 = vmatmul.mubr.f32.gmra.mrb[0].mxu0 %v1259
    %v1340 = vpop.f32.mrb[0].mxu0
    %v1341 = vadd.f32 0.0, %v1340
    %v1342 = vpop.f32.mrb[0].mxu0
    %1343 = vmatprep.mubr.f32.mxu0 0.0
    %1344 = vmatmul.mubr.f32.gmra.mrb[0].mxu0 %v1262
    %v1345 = vpop.f32.mrb[0].mxu0
    %v1346 = vadd.f32 0.0, %v1345
    %v1347 = vpop.f32.mrb[0].mxu0
    %1348 = vdwg.mxu0
    %v1349 = vadd.f32 %v1137, %v1331
    %v1350 = vadd.f32 %v1138, %v1336
    %v1351 = vadd.f32 %v1139, %v1341
    %v1352 = vadd.f32 %v1140, %v1346
    %s1353 = scalar_lea.vmem %s2, 160
    %v1354 = vld [vmem:[%s1353] sm:$0xff]
    %v1355 = vld [vmem:[%s1353 + $0x8] sm:$0xff]
    %v1356 = vld [vmem:[%s1353 + $0x10] sm:$0xff]
    %v1357 = vld [vmem:[%s1353 + $0x18] sm:$0xff]
    %v1359 = vsel %vm83, %v1354, 0
    %v1362 = vsel %vm83, %v1355, 0
    %v1365 = vsel %vm83, %v1356, 0
    %v1368 = vsel %vm83, %v1357, 0
    %1370 = vmatprep.subr.mxu0 0.0
    %1371 = vmatpush1.msra.mxu0 %v75
    %1372 = vmatprep.subr.mxu0 0.0
    %1373 = vmatpush1.msra.mxu0 %v76
    %1374 = vmatprep.subr.mxu0 0.0
    %1375 = vmatpush1.msra.mxu0 %v77
    %1376 = vmatprep.subr.mxu0 0.0
    %1377 = vmatpush1.msra.mxu0 %v78
    %1378 = vmatprep.subr.mxu0 0.0
    %1379 = vmatpush1.msra.mxu0 0.0
    %1380 = vmatprep.subr.mxu0 0.0
    %1381 = vmatpush1.msra.mxu0 0.0
    %1382 = vmatprep.subr.mxu0 0.0
    %1383 = vmatpush1.msra.mxu0 0.0
    %1384 = vmatprep.subr.mxu0 0.0
    %1385 = vmatpush1.msra.mxu0 0.0
    %1386 = vmatprep.subr.mxu0 0.0
    %1387 = vmatpush1.msra.mxu0 0.0
    %1388 = vmatprep.subr.mxu0 0.0
    %1389 = vmatpush1.msra.mxu0 0.0
    %1390 = vmatprep.subr.mxu0 0.0
    %1391 = vmatpush1.msra.mxu0 0.0
    %1392 = vmatprep.subr.mxu0 0.0
    %1393 = vmatpush1.msra.mxu0 0.0
    %1394 = vmatprep.subr.mxu0 0.0
    %1395 = vmatpush1.msra.mxu0 0.0
    %1396 = vmatprep.subr.mxu0 0.0
    %1397 = vmatpush1.msra.mxu0 0.0
    %1398 = vmatprep.subr.mxu0 0.0
    %1399 = vmatpush1.msra.mxu0 0.0
    %1400 = vmatprep.subr.mxu0 0.0
    %1401 = vmatpush1.msra.mxu0 0.0
    %1402 = vmatprep.subr.mxu0 0.0
    %1403 = vmatpush1.msra.mxu0 0.0
    %1404 = vmatprep.subr.mxu0 0.0
    %1405 = vmatpush1.msra.mxu0 0.0
    %1406 = vmatprep.subr.mxu0 0.0
    %1407 = vmatpush1.msra.mxu0 0.0
    %1408 = vmatprep.subr.mxu0 0.0
    %1409 = vmatpush1.msra.mxu0 0.0
    %1410 = vmatprep.subr.mxu0 0.0
    %1411 = vmatpush1.msra.mxu0 0.0
    %1412 = vmatprep.subr.mxu0 0.0
    %1413 = vmatpush1.msra.mxu0 0.0
    %1414 = vmatprep.subr.mxu0 0.0
    %1415 = vmatpush1.msra.mxu0 0.0
    %1416 = vmatprep.subr.mxu0 0.0
    %1417 = vmatpush1.msra.mxu0 0.0
    %1418 = vmatprep.subr.mxu0 0.0
    %1419 = vmatpush1.msra.mxu0 0.0
    %1420 = vmatprep.subr.mxu0 0.0
    %1421 = vmatpush1.msra.mxu0 0.0
    %1422 = vmatprep.subr.mxu0 0.0
    %1423 = vmatpush1.msra.mxu0 0.0
    %1424 = vmatprep.subr.mxu0 0.0
    %1425 = vmatpush1.msra.mxu0 0.0
    %1426 = vmatprep.subr.mxu0 0.0
    %1427 = vmatpush1.msra.mxu0 0.0
    %1428 = vmatprep.subr.mxu0 0.0
    %1429 = vmatpush1.msra.mxu0 0.0
    %1430 = vmatprep.subr.mxu0 0.0
    %1431 = vmatpush1.msra.mxu0 0.0
    %1432 = vmatprep.subr.mxu0 0.0
    %1433 = vmatpush1.msra.mxu0 0.0
    %1434 = vmatprep.mubr.f32.mxu0 0.0
    %1435 = vmatmul.mubr.f32.gmra.mrb[0].mxu0 %v1359
    %v1436 = vpop.f32.mrb[0].mxu0
    %v1437 = vadd.f32 0.0, %v1436
    %v1438 = vpop.f32.mrb[0].mxu0
    %1439 = vmatprep.mubr.f32.mxu0 0.0
    %1440 = vmatmul.mubr.f32.gmra.mrb[0].mxu0 %v1362
    %v1441 = vpop.f32.mrb[0].mxu0
    %v1442 = vadd.f32 0.0, %v1441
    %v1443 = vpop.f32.mrb[0].mxu0
    %1444 = vmatprep.mubr.f32.mxu0 0.0
    %1445 = vmatmul.mubr.f32.gmra.mrb[0].mxu0 %v1365
    %v1446 = vpop.f32.mrb[0].mxu0
    %v1447 = vadd.f32 0.0, %v1446
    %v1448 = vpop.f32.mrb[0].mxu0
    %1449 = vmatprep.mubr.f32.mxu0 0.0
    %1450 = vmatmul.mubr.f32.gmra.mrb[0].mxu0 %v1368
    %v1451 = vpop.f32.mrb[0].mxu0
    %v1452 = vadd.f32 0.0, %v1451
    %v1453 = vpop.f32.mrb[0].mxu0
    %1454 = vdwg.mxu0
    %s1455 = scalar_lea.vmem [#allocation3], 448
    %v1456 = vld [vmem:[%s1455] sm:$0xff]
    %v1457 = vld [vmem:[%s1455 + $0x8] sm:$0xff]
    %v1458 = vld [vmem:[%s1455 + $0x10] sm:$0xff]
    %v1459 = vld [vmem:[%s1455 + $0x18] sm:$0xff]
    %v1460 = vld [vmem:[%s1455 + $0x20] sm:$0xff]
    %v1461 = vld [vmem:[%s1455 + $0x28] sm:$0xff]
    %v1462 = vld [vmem:[%s1455 + $0x30] sm:$0xff]
    %v1463 = vld [vmem:[%s1455 + $0x38] sm:$0xff]
    %v1465 = vsel %vm198, %v1437, 0
    %v1468 = vsel %vm198, %v1442, 0
    %v1471 = vsel %vm198, %v1447, 0
    %v1474 = vsel %vm198, %v1452, 0
    %1476 = vmatprep.subr.mxu0 0.0
    %1477 = vmatpush1.msra.mxu0 %v1456
    %1478 = vmatprep.subr.mxu0 0.0
    %1479 = vmatpush1.msra.mxu0 %v1457
    %1480 = vmatprep.subr.mxu0 0.0
    %1481 = vmatpush1.msra.mxu0 %v1458
    %1482 = vmatprep.subr.mxu0 0.0
    %1483 = vmatpush1.msra.mxu0 %v1459
    %1484 = vmatprep.subr.mxu0 0.0
    %1485 = vmatpush1.msra.mxu0 %v1460
    %1486 = vmatprep.subr.mxu0 0.0
    %1487 = vmatpush1.msra.mxu0 %v1461
    %1488 = vmatprep.subr.mxu0 0.0
    %1489 = vmatpush1.msra.mxu0 %v1462
    %1490 = vmatprep.subr.mxu0 0.0
    %1491 = vmatpush1.msra.mxu0 %v1463
    %1492 = vmatprep.subr.mxu0 0.0
    %1493 = vmatpush1.msra.mxu0 0.0
    %1494 = vmatprep.subr.mxu0 0.0
    %1495 = vmatpush1.msra.mxu0 0.0
    %1496 = vmatprep.subr.mxu0 0.0
    %1497 = vmatpush1.msra.mxu0 0.0
    %1498 = vmatprep.subr.mxu0 0.0
    %1499 = vmatpush1.msra.mxu0 0.0
    %1500 = vmatprep.subr.mxu0 0.0
    %1501 = vmatpush1.msra.mxu0 0.0
    %1502 = vmatprep.subr.mxu0 0.0
    %1503 = vmatpush1.msra.mxu0 0.0
    %1504 = vmatprep.subr.mxu0 0.0
    %1505 = vmatpush1.msra.mxu0 0.0
    %1506 = vmatprep.subr.mxu0 0.0
    %1507 = vmatpush1.msra.mxu0 0.0
    %1508 = vmatprep.subr.mxu0 0.0
    %1509 = vmatpush1.msra.mxu0 0.0
    %1510 = vmatprep.subr.mxu0 0.0
    %1511 = vmatpush1.msra.mxu0 0.0
    %1512 = vmatprep.subr.mxu0 0.0
    %1513 = vmatpush1.msra.mxu0 0.0
    %1514 = vmatprep.subr.mxu0 0.0
    %1515 = vmatpush1.msra.mxu0 0.0
    %1516 = vmatprep.subr.mxu0 0.0
    %1517 = vmatpush1.msra.mxu0 0.0
    %1518 = vmatprep.subr.mxu0 0.0
    %1519 = vmatpush1.msra.mxu0 0.0
    %1520 = vmatprep.subr.mxu0 0.0
    %1521 = vmatpush1.msra.mxu0 0.0
    %1522 = vmatprep.subr.mxu0 0.0
    %1523 = vmatpush1.msra.mxu0 0.0
    %1524 = vmatprep.subr.mxu0 0.0
    %1525 = vmatpush1.msra.mxu0 0.0
    %1526 = vmatprep.subr.mxu0 0.0
    %1527 = vmatpush1.msra.mxu0 0.0
    %1528 = vmatprep.subr.mxu0 0.0
    %1529 = vmatpush1.msra.mxu0 0.0
    %1530 = vmatprep.subr.mxu0 0.0
    %1531 = vmatpush1.msra.mxu0 0.0
    %1532 = vmatprep.subr.mxu0 0.0
    %1533 = vmatpush1.msra.mxu0 0.0
    %1534 = vmatprep.subr.mxu0 0.0
    %1535 = vmatpush1.msra.mxu0 0.0
    %1536 = vmatprep.subr.mxu0 0.0
    %1537 = vmatpush1.msra.mxu0 0.0
    %1538 = vmatprep.subr.mxu0 0.0
    %1539 = vmatpush1.msra.mxu0 0.0
    %1540 = vmatprep.mubr.f32.mxu0 0.0
    %1541 = vmatmul.mubr.f32.gmra.mrb[0].mxu0 %v1465
    %v1542 = vpop.f32.mrb[0].mxu0
    %v1543 = vadd.f32 0.0, %v1542
    %v1544 = vpop.f32.mrb[0].mxu0
    %1545 = vmatprep.mubr.f32.mxu0 0.0
    %1546 = vmatmul.mubr.f32.gmra.mrb[0].mxu0 %v1468
    %v1547 = vpop.f32.mrb[0].mxu0
    %v1548 = vadd.f32 0.0, %v1547
    %v1549 = vpop.f32.mrb[0].mxu0
    %1550 = vmatprep.mubr.f32.mxu0 0.0
    %1551 = vmatmul.mubr.f32.gmra.mrb[0].mxu0 %v1471
    %v1552 = vpop.f32.mrb[0].mxu0
    %v1553 = vadd.f32 0.0, %v1552
    %v1554 = vpop.f32.mrb[0].mxu0
    %1555 = vmatprep.mubr.f32.mxu0 0.0
    %1556 = vmatmul.mubr.f32.gmra.mrb[0].mxu0 %v1474
    %v1557 = vpop.f32.mrb[0].mxu0
    %v1558 = vadd.f32 0.0, %v1557
    %v1559 = vpop.f32.mrb[0].mxu0
    %1560 = vdwg.mxu0
    %v1561 = vadd.f32 %v1349, %v1543
    %v1562 = vadd.f32 %v1350, %v1548
    %v1563 = vadd.f32 %v1351, %v1553
    %v1564 = vadd.f32 %v1352, %v1558
    %v1565 = vld [vmem:[%s3 + $0x1] sm:$0x1]
    %v1566 = vlaneseq
    %v1567 = vshrl.u32 %v1566, 7
    %v1568 = vsub.s32 0, %v1567
    %v1569 = vrot.slane %v1565, %v1568
    %v1570 = vmul.f32 %v1561, %v1569
    %v1571 = vmul.f32 %v1562, %v1569
    %v1572 = vmul.f32 %v1563, %v1569
    %v1573 = vmul.f32 %v1564, %v1569
    %v1574 = vld [vmem:[%s4 + $0x1] sm:$0x1]
    %v1575 = vlaneseq
    %v1576 = vshrl.u32 %v1575, 7
    %v1577 = vsub.s32 0, %v1576
    %v1578 = vrot.slane %v1574, %v1577
    %v1579 = vadd.f32 %v1570, %v1578
    %v1580 = vadd.f32 %v1571, %v1578
    %v1581 = vadd.f32 %v1572, %v1578
    %v1582 = vadd.f32 %v1573, %v1578
    %v1583 = vmax.f32 %v1579, 0.0
    %v1584 = vmax.f32 %v1580, 0.0
    %v1585 = vmax.f32 %v1581, 0.0
    %v1586 = vmax.f32 %v1582, 0.0
    %v1587 = vld [vmem:[%s11] sm:$0x3]
    %v1589 = vsel %vm83, %v1587, 0
    %1591 = vmatprep.subr.mxu0 0.0
    %1592 = vmatpush1.msra.mxu0 %v623
    %1593 = vmatprep.subr.mxu0 0.0
    %1594 = vmatpush1.msra.mxu0 %v624
    %1595 = vmatprep.subr.mxu0 0.0
    %1596 = vmatpush1.msra.mxu0 %v625
    %1597 = vmatprep.subr.mxu0 0.0
    %1598 = vmatpush1.msra.mxu0 %v626
    %1599 = vmatprep.subr.mxu0 0.0
    %1600 = vmatpush1.msra.mxu0 0.0
    %1601 = vmatprep.subr.mxu0 0.0
    %1602 = vmatpush1.msra.mxu0 0.0
    %1603 = vmatprep.subr.mxu0 0.0
    %1604 = vmatpush1.msra.mxu0 0.0
    %1605 = vmatprep.subr.mxu0 0.0
    %1606 = vmatpush1.msra.mxu0 0.0
    %1607 = vmatprep.subr.mxu0 0.0
    %1608 = vmatpush1.msra.mxu0 0.0
    %1609 = vmatprep.subr.mxu0 0.0
    %1610 = vmatpush1.msra.mxu0 0.0
    %1611 = vmatprep.subr.mxu0 0.0
    %1612 = vmatpush1.msra.mxu0 0.0
    %1613 = vmatprep.subr.mxu0 0.0
    %1614 = vmatpush1.msra.mxu0 0.0
    %1615 = vmatprep.subr.mxu0 0.0
    %1616 = vmatpush1.msra.mxu0 0.0
    %1617 = vmatprep.subr.mxu0 0.0
    %1618 = vmatpush1.msra.mxu0 0.0
    %1619 = vmatprep.subr.mxu0 0.0
    %1620 = vmatpush1.msra.mxu0 0.0
    %1621 = vmatprep.subr.mxu0 0.0
    %1622 = vmatpush1.msra.mxu0 0.0
    %1623 = vmatprep.subr.mxu0 0.0
    %1624 = vmatpush1.msra.mxu0 0.0
    %1625 = vmatprep.subr.mxu0 0.0
    %1626 = vmatpush1.msra.mxu0 0.0
    %1627 = vmatprep.subr.mxu0 0.0
    %1628 = vmatpush1.msra.mxu0 0.0
    %1629 = vmatprep.subr.mxu0 0.0
    %1630 = vmatpush1.msra.mxu0 0.0
    %1631 = vmatprep.subr.mxu0 0.0
    %1632 = vmatpush1.msra.mxu0 0.0
    %1633 = vmatprep.subr.mxu0 0.0
    %1634 = vmatpush1.msra.mxu0 0.0
    %1635 = vmatprep.subr.mxu0 0.0
    %1636 = vmatpush1.msra.mxu0 0.0
    %1637 = vmatprep.subr.mxu0 0.0
    %1638 = vmatpush1.msra.mxu0 0.0
    %1639 = vmatprep.subr.mxu0 0.0
    %1640 = vmatpush1.msra.mxu0 0.0
    %1641 = vmatprep.subr.mxu0 0.0
    %1642 = vmatpush1.msra.mxu0 0.0
    %1643 = vmatprep.subr.mxu0 0.0
    %1644 = vmatpush1.msra.mxu0 0.0
    %1645 = vmatprep.subr.mxu0 0.0
    %1646 = vmatpush1.msra.mxu0 0.0
    %1647 = vmatprep.subr.mxu0 0.0
    %1648 = vmatpush1.msra.mxu0 0.0
    %1649 = vmatprep.subr.mxu0 0.0
    %1650 = vmatpush1.msra.mxu0 0.0
    %1651 = vmatprep.subr.mxu0 0.0
    %1652 = vmatpush1.msra.mxu0 0.0
    %1653 = vmatprep.subr.mxu0 0.0
    %1654 = vmatpush1.msra.mxu0 0.0
    %1655 = vmatprep.mubr.f32.mxu0 0.0
    %1656 = vmatmul.mubr.f32.gmra.mrb[0].mxu0 %v1589
    %v1657 = vpop.f32.mrb[0].mxu0
    %v1658 = vadd.f32 0.0, %v1657
    %v1659 = vpop.f32.mrb[0].mxu0
    %1660 = vdwg.mxu0
    %v1661 = vld [vmem:[%s12] sm:$0xff]
    %v1662 = vld [vmem:[%s12 + $0x8] sm:$0xff]
    %v1663 = vld [vmem:[%s12 + $0x10] sm:$0xff]
    %v1664 = vld [vmem:[%s12 + $0x18] sm:$0xff]
    %v1665 = vld [vmem:[%s12 + $0x20] sm:$0xff]
    %v1666 = vld [vmem:[%s12 + $0x28] sm:$0xff]
    %v1667 = vld [vmem:[%s12 + $0x30] sm:$0xff]
    %v1668 = vld [vmem:[%s12 + $0x38] sm:$0xff]
    %v1670 = vsel %vm198, %v1658, 0
    %1672 = vmatprep.subr.mxu0 0.0
    %1673 = vmatpush1.msra.mxu0 %v1661
    %1674 = vmatprep.subr.mxu0 0.0
    %1675 = vmatpush1.msra.mxu0 %v1662
    %1676 = vmatprep.subr.mxu0 0.0
    %1677 = vmatpush1.msra.mxu0 %v1663
    %1678 = vmatprep.subr.mxu0 0.0
    %1679 = vmatpush1.msra.mxu0 %v1664
    %1680 = vmatprep.subr.mxu0 0.0
    %1681 = vmatpush1.msra.mxu0 %v1665
    %1682 = vmatprep.subr.mxu0 0.0
    %1683 = vmatpush1.msra.mxu0 %v1666
    %1684 = vmatprep.subr.mxu0 0.0
    %1685 = vmatpush1.msra.mxu0 %v1667
    %1686 = vmatprep.subr.mxu0 0.0
    %1687 = vmatpush1.msra.mxu0 %v1668
    %1688 = vmatprep.subr.mxu0 0.0
    %1689 = vmatpush1.msra.mxu0 0.0
    %1690 = vmatprep.subr.mxu0 0.0
    %1691 = vmatpush1.msra.mxu0 0.0
    %1692 = vmatprep.subr.mxu0 0.0
    %1693 = vmatpush1.msra.mxu0 0.0
    %1694 = vmatprep.subr.mxu0 0.0
    %1695 = vmatpush1.msra.mxu0 0.0
    %1696 = vmatprep.subr.mxu0 0.0
    %1697 = vmatpush1.msra.mxu0 0.0
    %1698 = vmatprep.subr.mxu0 0.0
    %1699 = vmatpush1.msra.mxu0 0.0
    %1700 = vmatprep.subr.mxu0 0.0
    %1701 = vmatpush1.msra.mxu0 0.0
    %1702 = vmatprep.subr.mxu0 0.0
    %1703 = vmatpush1.msra.mxu0 0.0
    %1704 = vmatprep.subr.mxu0 0.0
    %1705 = vmatpush1.msra.mxu0 0.0
    %1706 = vmatprep.subr.mxu0 0.0
    %1707 = vmatpush1.msra.mxu0 0.0
    %1708 = vmatprep.subr.mxu0 0.0
    %1709 = vmatpush1.msra.mxu0 0.0
    %1710 = vmatprep.subr.mxu0 0.0
    %1711 = vmatpush1.msra.mxu0 0.0
    %1712 = vmatprep.subr.mxu0 0.0
    %1713 = vmatpush1.msra.mxu0 0.0
    %1714 = vmatprep.subr.mxu0 0.0
    %1715 = vmatpush1.msra.mxu0 0.0
    %1716 = vmatprep.subr.mxu0 0.0
    %1717 = vmatpush1.msra.mxu0 0.0
    %1718 = vmatprep.subr.mxu0 0.0
    %1719 = vmatpush1.msra.mxu0 0.0
    %1720 = vmatprep.subr.mxu0 0.0
    %1721 = vmatpush1.msra.mxu0 0.0
    %1722 = vmatprep.subr.mxu0 0.0
    %1723 = vmatpush1.msra.mxu0 0.0
    %1724 = vmatprep.subr.mxu0 0.0
    %1725 = vmatpush1.msra.mxu0 0.0
    %1726 = vmatprep.subr.mxu0 0.0
    %1727 = vmatpush1.msra.mxu0 0.0
    %1728 = vmatprep.subr.mxu0 0.0
    %1729 = vmatpush1.msra.mxu0 0.0
    %1730 = vmatprep.subr.mxu0 0.0
    %1731 = vmatpush1.msra.mxu0 0.0
    %1732 = vmatprep.subr.mxu0 0.0
    %1733 = vmatpush1.msra.mxu0 0.0
    %1734 = vmatprep.subr.mxu0 0.0
    %1735 = vmatpush1.msra.mxu0 0.0
    %1736 = vmatprep.mubr.f32.mxu0 0.0
    %1737 = vmatmul.mubr.f32.gmra.mrb[0].mxu0 %v1670
    %v1738 = vpop.f32.mrb[0].mxu0
    %v1739 = vadd.f32 0.0, %v1738
    %v1740 = vpop.f32.mrb[0].mxu0
    %1741 = vdwg.mxu0
    %1742 = vmatprep.subr.mxu0 0.0
    %1743 = vmatpush1.msra.mxu0 %v1583
    %1744 = vmatprep.subr.mxu0 0.0
    %1745 = vmatpush1.msra.mxu0 %v1584
    %1746 = vmatprep.subr.mxu0 0.0
    %1747 = vmatpush1.msra.mxu0 %v1585
    %1748 = vmatprep.subr.mxu0 0.0
    %1749 = vmatpush1.msra.mxu0 %v1586
    %1750 = vmatprep.subr.mxu0 0.0
    %1751 = vmatpush1.msra.mxu0 0.0
    %1752 = vmatprep.subr.mxu0 0.0
    %1753 = vmatpush1.msra.mxu0 0.0
    %1754 = vmatprep.subr.mxu0 0.0
    %1755 = vmatpush1.msra.mxu0 0.0
    %1756 = vmatprep.subr.mxu0 0.0
    %1757 = vmatpush1.msra.mxu0 0.0
    %1758 = vmatprep.subr.mxu0 0.0
    %1759 = vmatpush1.msra.mxu0 0.0
    %1760 = vmatprep.subr.mxu0 0.0
    %1761 = vmatpush1.msra.mxu0 0.0
    %1762 = vmatprep.subr.mxu0 0.0
    %1763 = vmatpush1.msra.mxu0 0.0
    %1764 = vmatprep.subr.mxu0 0.0
    %1765 = vmatpush1.msra.mxu0 0.0
    %1766 = vmatprep.subr.mxu0 0.0
    %1767 = vmatpush1.msra.mxu0 0.0
    %1768 = vmatprep.subr.mxu0 0.0
    %1769 = vmatpush1.msra.mxu0 0.0
    %1770 = vmatprep.subr.mxu0 0.0
    %1771 = vmatpush1.msra.mxu0 0.0
    %1772 = vmatprep.subr.mxu0 0.0
    %1773 = vmatpush1.msra.mxu0 0.0
    %1774 = vmatprep.subr.mxu0 0.0
    %1775 = vmatpush1.msra.mxu0 0.0
    %1776 = vmatprep.subr.mxu0 0.0
    %1777 = vmatpush1.msra.mxu0 0.0
    %1778 = vmatprep.subr.mxu0 0.0
    %1779 = vmatpush1.msra.mxu0 0.0
    %1780 = vmatprep.subr.mxu0 0.0
    %1781 = vmatpush1.msra.mxu0 0.0
    %1782 = vmatprep.subr.mxu0 0.0
    %1783 = vmatpush1.msra.mxu0 0.0
    %1784 = vmatprep.subr.mxu0 0.0
    %1785 = vmatpush1.msra.mxu0 0.0
    %1786 = vmatprep.subr.mxu0 0.0
    %1787 = vmatpush1.msra.mxu0 0.0
    %1788 = vmatprep.subr.mxu0 0.0
    %1789 = vmatpush1.msra.mxu0 0.0
    %1790 = vmatprep.subr.mxu0 0.0
    %1791 = vmatpush1.msra.mxu0 0.0
    %1792 = vmatprep.subr.mxu0 0.0
    %1793 = vmatpush1.msra.mxu0 0.0
    %1794 = vmatprep.subr.mxu0 0.0
    %1795 = vmatpush1.msra.mxu0 0.0
    %1796 = vmatprep.subr.mxu0 0.0
    %1797 = vmatpush1.msra.mxu0 0.0
    %1798 = vmatprep.subr.mxu0 0.0
    %1799 = vmatpush1.msra.mxu0 0.0
    %1800 = vmatprep.subr.mxu0 0.0
    %1801 = vmatpush1.msra.mxu0 0.0
    %1802 = vmatprep.subr.mxu0 0.0
    %1803 = vmatpush1.msra.mxu0 0.0
    %1804 = vmatprep.subr.mxu0 0.0
    %1805 = vmatpush1.msra.mxu0 0.0
    %1806 = vmatprep.mubr.f32.mxu0 0.0
    %1807 = vmatmul.mubr.f32.gmra.mrb[0].mxu0 %v1589
    %v1808 = vpop.f32.mrb[0].mxu0
    %v1809 = vadd.f32 0.0, %v1808
    %v1810 = vpop.f32.mrb[0].mxu0
    %1811 = vdwg.mxu0
    %v1813 = vsel %vm198, %v1809, 0
    %1815 = vmatprep.subr.mxu0 0.0
    %1816 = vmatpush1.msra.mxu0 %v1661
    %1817 = vmatprep.subr.mxu0 0.0
    %1818 = vmatpush1.msra.mxu0 %v1662
    %1819 = vmatprep.subr.mxu0 0.0
    %1820 = vmatpush1.msra.mxu0 %v1663
    %1821 = vmatprep.subr.mxu0 0.0
    %1822 = vmatpush1.msra.mxu0 %v1664
    %1823 = vmatprep.subr.mxu0 0.0
    %1824 = vmatpush1.msra.mxu0 %v1665
    %1825 = vmatprep.subr.mxu0 0.0
    %1826 = vmatpush1.msra.mxu0 %v1666
    %1827 = vmatprep.subr.mxu0 0.0
    %1828 = vmatpush1.msra.mxu0 %v1667
    %1829 = vmatprep.subr.mxu0 0.0
    %1830 = vmatpush1.msra.mxu0 %v1668
    %1831 = vmatprep.subr.mxu0 0.0
    %1832 = vmatpush1.msra.mxu0 0.0
    %1833 = vmatprep.subr.mxu0 0.0
    %1834 = vmatpush1.msra.mxu0 0.0
    %1835 = vmatprep.subr.mxu0 0.0
    %1836 = vmatpush1.msra.mxu0 0.0
    %1837 = vmatprep.subr.mxu0 0.0
    %1838 = vmatpush1.msra.mxu0 0.0
    %1839 = vmatprep.subr.mxu0 0.0
    %1840 = vmatpush1.msra.mxu0 0.0
    %1841 = vmatprep.subr.mxu0 0.0
    %1842 = vmatpush1.msra.mxu0 0.0
    %1843 = vmatprep.subr.mxu0 0.0
    %1844 = vmatpush1.msra.mxu0 0.0
    %1845 = vmatprep.subr.mxu0 0.0
    %1846 = vmatpush1.msra.mxu0 0.0
    %1847 = vmatprep.subr.mxu0 0.0
    %1848 = vmatpush1.msra.mxu0 0.0
    %1849 = vmatprep.subr.mxu0 0.0
    %1850 = vmatpush1.msra.mxu0 0.0
    %1851 = vmatprep.subr.mxu0 0.0
    %1852 = vmatpush1.msra.mxu0 0.0
    %1853 = vmatprep.subr.mxu0 0.0
    %1854 = vmatpush1.msra.mxu0 0.0
    %1855 = vmatprep.subr.mxu0 0.0
    %1856 = vmatpush1.msra.mxu0 0.0
    %1857 = vmatprep.subr.mxu0 0.0
    %1858 = vmatpush1.msra.mxu0 0.0
    %1859 = vmatprep.subr.mxu0 0.0
    %1860 = vmatpush1.msra.mxu0 0.0
    %1861 = vmatprep.subr.mxu0 0.0
    %1862 = vmatpush1.msra.mxu0 0.0
    %1863 = vmatprep.subr.mxu0 0.0
    %1864 = vmatpush1.msra.mxu0 0.0
    %1865 = vmatprep.subr.mxu0 0.0
    %1866 = vmatpush1.msra.mxu0 0.0
    %1867 = vmatprep.subr.mxu0 0.0
    %1868 = vmatpush1.msra.mxu0 0.0
    %1869 = vmatprep.subr.mxu0 0.0
    %1870 = vmatpush1.msra.mxu0 0.0
    %1871 = vmatprep.subr.mxu0 0.0
    %1872 = vmatpush1.msra.mxu0 0.0
    %1873 = vmatprep.subr.mxu0 0.0
    %1874 = vmatpush1.msra.mxu0 0.0
    %1875 = vmatprep.subr.mxu0 0.0
    %1876 = vmatpush1.msra.mxu0 0.0
    %1877 = vmatprep.subr.mxu0 0.0
    %1878 = vmatpush1.msra.mxu0 0.0
    %1879 = vmatprep.mubr.f32.mxu0 0.0
    %1880 = vmatmul.mubr.f32.gmra.mrb[0].mxu0 %v1813
    %v1881 = vpop.f32.mrb[0].mxu0
    %v1882 = vadd.f32 0.0, %v1881
    %v1883 = vpop.f32.mrb[0].mxu0
    %1884 = vdwg.mxu0
    %v1885 = vld [vmem:[%s5] sm:$0xff]
    %v1887 = vrot.slane %v1885, 4
    %vm1888 = vcmask 31744
    %v1890 = vsel %vm1888, %v1882, 0
    %vm1892 = vcmask 1043456
    %v1893 = vsel %vm1892, %v1887, 0
    %1895 = vmatprep.subr.mxu0 0.0
    %1896 = vmatpush1.msra.mxu0 %v1893
    %1897 = vmatprep.subr.mxu0 0.0
    %1898 = vmatpush1.msra.mxu0 0.0
    %1899 = vmatprep.subr.mxu0 0.0
    %1900 = vmatpush1.msra.mxu0 0.0
    %1901 = vmatprep.subr.mxu0 0.0
    %1902 = vmatpush1.msra.mxu0 0.0
    %1903 = vmatprep.subr.mxu0 0.0
    %1904 = vmatpush1.msra.mxu0 0.0
    %1905 = vmatprep.subr.mxu0 0.0
    %1906 = vmatpush1.msra.mxu0 0.0
    %1907 = vmatprep.subr.mxu0 0.0
    %1908 = vmatpush1.msra.mxu0 0.0
    %1909 = vmatprep.subr.mxu0 0.0
    %1910 = vmatpush1.msra.mxu0 0.0
    %1911 = vmatprep.subr.mxu0 0.0
    %1912 = vmatpush1.msra.mxu0 0.0
    %1913 = vmatprep.subr.mxu0 0.0
    %1914 = vmatpush1.msra.mxu0 0.0
    %1915 = vmatprep.subr.mxu0 0.0
    %1916 = vmatpush1.msra.mxu0 0.0
    %1917 = vmatprep.subr.mxu0 0.0
    %1918 = vmatpush1.msra.mxu0 0.0
    %1919 = vmatprep.subr.mxu0 0.0
    %1920 = vmatpush1.msra.mxu0 0.0
    %1921 = vmatprep.subr.mxu0 0.0
    %1922 = vmatpush1.msra.mxu0 0.0
    %1923 = vmatprep.subr.mxu0 0.0
    %1924 = vmatpush1.msra.mxu0 0.0
    %1925 = vmatprep.subr.mxu0 0.0
    %1926 = vmatpush1.msra.mxu0 0.0
    %1927 = vmatprep.subr.mxu0 0.0
    %1928 = vmatpush1.msra.mxu0 0.0
    %1929 = vmatprep.subr.mxu0 0.0
    %1930 = vmatpush1.msra.mxu0 0.0
    %1931 = vmatprep.subr.mxu0 0.0
    %1932 = vmatpush1.msra.mxu0 0.0
    %1933 = vmatprep.subr.mxu0 0.0
    %1934 = vmatpush1.msra.mxu0 0.0
    %1935 = vmatprep.subr.mxu0 0.0
    %1936 = vmatpush1.msra.mxu0 0.0
    %1937 = vmatprep.subr.mxu0 0.0
    %1938 = vmatpush1.msra.mxu0 0.0
    %1939 = vmatprep.subr.mxu0 0.0
    %1940 = vmatpush1.msra.mxu0 0.0
    %1941 = vmatprep.subr.mxu0 0.0
    %1942 = vmatpush1.msra.mxu0 0.0
    %1943 = vmatprep.subr.mxu0 0.0
    %1944 = vmatpush1.msra.mxu0 0.0
    %1945 = vmatprep.subr.mxu0 0.0
    %1946 = vmatpush1.msra.mxu0 0.0
    %1947 = vmatprep.subr.mxu0 0.0
    %1948 = vmatpush1.msra.mxu0 0.0
    %1949 = vmatprep.subr.mxu0 0.0
    %1950 = vmatpush1.msra.mxu0 0.0
    %1951 = vmatprep.subr.mxu0 0.0
    %1952 = vmatpush1.msra.mxu0 0.0
    %1953 = vmatprep.subr.mxu0 0.0
    %1954 = vmatpush1.msra.mxu0 0.0
    %1955 = vmatprep.subr.mxu0 0.0
    %1956 = vmatpush1.msra.mxu0 0.0
    %1957 = vmatprep.subr.mxu0 0.0
    %1958 = vmatpush1.msra.mxu0 0.0
    %1959 = vmatprep.mubr.f32.mxu0 0.0
    %1960 = vmatmul.mubr.f32.gmra.mrb[0].mxu0 %v1890
    %v1961 = vpop.f32.mrb[0].mxu0
    %v1962 = vadd.f32 0.0, %v1961
    %v1963 = vpop.f32.mrb[0].mxu0
    %1964 = vdwg.mxu0
    %v1966 = vsel %vm1888, %v1739, 0
    %v1968 = vsel %vm1892, %v1885, 0
    %1970 = vmatprep.subr.mxu0 0.0
    %1971 = vmatpush1.msra.mxu0 %v1968
    %1972 = vmatprep.subr.mxu0 0.0
    %1973 = vmatpush1.msra.mxu0 0.0
    %1974 = vmatprep.subr.mxu0 0.0
    %1975 = vmatpush1.msra.mxu0 0.0
    %1976 = vmatprep.subr.mxu0 0.0
    %1977 = vmatpush1.msra.mxu0 0.0
    %1978 = vmatprep.subr.mxu0 0.0
    %1979 = vmatpush1.msra.mxu0 0.0
    %1980 = vmatprep.subr.mxu0 0.0
    %1981 = vmatpush1.msra.mxu0 0.0
    %1982 = vmatprep.subr.mxu0 0.0
    %1983 = vmatpush1.msra.mxu0 0.0
    %1984 = vmatprep.subr.mxu0 0.0
    %1985 = vmatpush1.msra.mxu0 0.0
    %1986 = vmatprep.subr.mxu0 0.0
    %1987 = vmatpush1.msra.mxu0 0.0
    %1988 = vmatprep.subr.mxu0 0.0
    %1989 = vmatpush1.msra.mxu0 0.0
    %1990 = vmatprep.subr.mxu0 0.0
    %1991 = vmatpush1.msra.mxu0 0.0
    %1992 = vmatprep.subr.mxu0 0.0
    %1993 = vmatpush1.msra.mxu0 0.0
    %1994 = vmatprep.subr.mxu0 0.0
    %1995 = vmatpush1.msra.mxu0 0.0
    %1996 = vmatprep.subr.mxu0 0.0
    %1997 = vmatpush1.msra.mxu0 0.0
    %1998 = vmatprep.subr.mxu0 0.0
    %1999 = vmatpush1.msra.mxu0 0.0
    %2000 = vmatprep.subr.mxu0 0.0
    %2001 = vmatpush1.msra.mxu0 0.0
    %2002 = vmatprep.subr.mxu0 0.0
    %2003 = vmatpush1.msra.mxu0 0.0
    %2004 = vmatprep.subr.mxu0 0.0
    %2005 = vmatpush1.msra.mxu0 0.0
    %2006 = vmatprep.subr.mxu0 0.0
    %2007 = vmatpush1.msra.mxu0 0.0
    %2008 = vmatprep.subr.mxu0 0.0
    %2009 = vmatpush1.msra.mxu0 0.0
    %2010 = vmatprep.subr.mxu0 0.0
    %2011 = vmatpush1.msra.mxu0 0.0
    %2012 = vmatprep.subr.mxu0 0.0
    %2013 = vmatpush1.msra.mxu0 0.0
    %2014 = vmatprep.subr.mxu0 0.0
    %2015 = vmatpush1.msra.mxu0 0.0
    %2016 = vmatprep.subr.mxu0 0.0
    %2017 = vmatpush1.msra.mxu0 0.0
    %2018 = vmatprep.subr.mxu0 0.0
    %2019 = vmatpush1.msra.mxu0 0.0
    %2020 = vmatprep.subr.mxu0 0.0
    %2021 = vmatpush1.msra.mxu0 0.0
    %2022 = vmatprep.subr.mxu0 0.0
    %2023 = vmatpush1.msra.mxu0 0.0
    %2024 = vmatprep.subr.mxu0 0.0
    %2025 = vmatpush1.msra.mxu0 0.0
    %2026 = vmatprep.subr.mxu0 0.0
    %2027 = vmatpush1.msra.mxu0 0.0
    %2028 = vmatprep.subr.mxu0 0.0
    %2029 = vmatpush1.msra.mxu0 0.0
    %2030 = vmatprep.subr.mxu0 0.0
    %2031 = vmatpush1.msra.mxu0 0.0
    %2032 = vmatprep.subr.mxu0 0.0
    %2033 = vmatpush1.msra.mxu0 0.0
    %2034 = vmatprep.mubr.f32.mxu0 0.0
    %2035 = vmatmul.mubr.f32.gmra.mrb[0].mxu0 %v1966
    %v2036 = vpop.f32.mrb[0].mxu0
    %v2037 = vadd.f32 %v1962, %v2036
    %v2038 = vpop.f32.mrb[0].mxu0
    %2039 = vdwg.mxu0
    %v2040 = vld [vmem:[%s6] sm:$0x1]
    %v2042 = vlaneseq
    %v2043 = vshrl.u32 %v2042, 7
    %v2044 = vsub.s32 0, %v2043
    %v2045 = vrot.slane %v2040, %v2044
    %v2047 = vadd.f32 %v2037, %v2045
    %v2048 = vld [vmem:[%s7] sm:$0x1]
    %v2050 = vlaneseq
    %v2051 = vshrl.u32 %v2050, 7
    %v2052 = vsub.s32 0, %v2051
    %v2053 = vrot.slane %v2048, %v2052
    %v2055 = vmul.f32 %v2047, %v2053
    %v2056 = vld [vmem:[%s8] sm:$0x1]
    %v2058 = vlaneseq
    %v2059 = vshrl.u32 %v2058, 7
    %v2060 = vsub.s32 0, %v2059
    %v2061 = vrot.slane %v2056, %v2060
    %v2063 = vadd.f32 %v2055, %v2061
    %v2064 = vmax.f32 %v2063, 0.0
    %v2065 = vld [vmem:[%s9] sm:$0xf]
    %v2066 = vld [vmem:[%s10] sm:$0x1]
    %v2068 = vlaneseq
    %v2069 = vshrl.u32 %v2068, 7
    %v2070 = vsub.s32 0, %v2069
    %v2071 = vrot.slane %v2066, %v2070
    %v2074 = vsel %vm1888, %v2064, 0
    %v2077 = vsel %vm1892, %v2065, 0
    %2079 = vmatprep.subr.mxu0 0.0
    %2080 = vmatpush1.msra.mxu0 %v2077
    %2081 = vmatprep.subr.mxu0 0.0
    %2082 = vmatpush1.msra.mxu0 0.0
    %2083 = vmatprep.subr.mxu0 0.0
    %2084 = vmatpush1.msra.mxu0 0.0
    %2085 = vmatprep.subr.mxu0 0.0
    %2086 = vmatpush1.msra.mxu0 0.0
    %2087 = vmatprep.subr.mxu0 0.0
    %2088 = vmatpush1.msra.mxu0 0.0
    %2089 = vmatprep.subr.mxu0 0.0
    %2090 = vmatpush1.msra.mxu0 0.0
    %2091 = vmatprep.subr.mxu0 0.0
    %2092 = vmatpush1.msra.mxu0 0.0
    %2093 = vmatprep.subr.mxu0 0.0
    %2094 = vmatpush1.msra.mxu0 0.0
    %2095 = vmatprep.subr.mxu0 0.0
    %2096 = vmatpush1.msra.mxu0 0.0
    %2097 = vmatprep.subr.mxu0 0.0
    %2098 = vmatpush1.msra.mxu0 0.0
    %2099 = vmatprep.subr.mxu0 0.0
    %2100 = vmatpush1.msra.mxu0 0.0
    %2101 = vmatprep.subr.mxu0 0.0
    %2102 = vmatpush1.msra.mxu0 0.0
    %2103 = vmatprep.subr.mxu0 0.0
    %2104 = vmatpush1.msra.mxu0 0.0
    %2105 = vmatprep.subr.mxu0 0.0
    %2106 = vmatpush1.msra.mxu0 0.0
    %2107 = vmatprep.subr.mxu0 0.0
    %2108 = vmatpush1.msra.mxu0 0.0
    %2109 = vmatprep.subr.mxu0 0.0
    %2110 = vmatpush1.msra.mxu0 0.0
    %2111 = vmatprep.subr.mxu0 0.0
    %2112 = vmatpush1.msra.mxu0 0.0
    %2113 = vmatprep.subr.mxu0 0.0
    %2114 = vmatpush1.msra.mxu0 0.0
    %2115 = vmatprep.subr.mxu0 0.0
    %2116 = vmatpush1.msra.mxu0 0.0
    %2117 = vmatprep.subr.mxu0 0.0
    %2118 = vmatpush1.msra.mxu0 0.0
    %2119 = vmatprep.subr.mxu0 0.0
    %2120 = vmatpush1.msra.mxu0 0.0
    %2121 = vmatprep.subr.mxu0 0.0
    %2122 = vmatpush1.msra.mxu0 0.0
    %2123 = vmatprep.subr.mxu0 0.0
    %2124 = vmatpush1.msra.mxu0 0.0
    %2125 = vmatprep.subr.mxu0 0.0
    %2126 = vmatpush1.msra.mxu0 0.0
    %2127 = vmatprep.subr.mxu0 0.0
    %2128 = vmatpush1.msra.mxu0 0.0
    %2129 = vmatprep.subr.mxu0 0.0
    %2130 = vmatpush1.msra.mxu0 0.0
    %2131 = vmatprep.subr.mxu0 0.0
    %2132 = vmatpush1.msra.mxu0 0.0
    %2133 = vmatprep.subr.mxu0 0.0
    %2134 = vmatpush1.msra.mxu0 0.0
    %2135 = vmatprep.subr.mxu0 0.0
    %2136 = vmatpush1.msra.mxu0 0.0
    %2137 = vmatprep.subr.mxu0 0.0
    %2138 = vmatpush1.msra.mxu0 0.0
    %2139 = vmatprep.subr.mxu0 0.0
    %2140 = vmatpush1.msra.mxu0 0.0
    %2141 = vmatprep.subr.mxu0 0.0
    %2142 = vmatpush1.msra.mxu0 0.0
    %2143 = vmatprep.mubr.f32.mxu0 0.0
    %2144 = vmatmul.mubr.f32.gmra.mrb[0].mxu0 %v2074
    %v2145 = vpop.f32.mrb[0].mxu0
    %v2146 = vadd.f32 %v2071, %v2145
    %v2147 = vpop.f32.mrb[0].mxu0
    %2148 = vdwg.mxu0
    %v2149 = vxor.u32 %v2146, 2147483648
    %v2150 = vmul.f32 %v2149, 1.442695
    %v2151 = vpow.pop %v2150
    %v2152 = vadd.f32 %v2151, 1.0
    %v2153 = vrcp.pop %v2152
    %v2154 = vmul.f32 1.0, %v2153
    %v2155 = vld [vmem:[%s14] sm:$0xf]
    %v2157 = vsel %vm1888, %v2154, 0
    %v2160 = vsel %vm1892, %v2155, 0
    %2162 = vmatprep.subr.mxu0 0.0
    %2163 = vmatpush1.msra.mxu0 %v2160
    %2164 = vmatprep.subr.mxu0 0.0
    %2165 = vmatpush1.msra.mxu0 0.0
    %2166 = vmatprep.subr.mxu0 0.0
    %2167 = vmatpush1.msra.mxu0 0.0
    %2168 = vmatprep.subr.mxu0 0.0
    %2169 = vmatpush1.msra.mxu0 0.0
    %2170 = vmatprep.subr.mxu0 0.0
    %2171 = vmatpush1.msra.mxu0 0.0
    %2172 = vmatprep.subr.mxu0 0.0
    %2173 = vmatpush1.msra.mxu0 0.0
    %2174 = vmatprep.subr.mxu0 0.0
    %2175 = vmatpush1.msra.mxu0 0.0
    %2176 = vmatprep.subr.mxu0 0.0
    %2177 = vmatpush1.msra.mxu0 0.0
    %2178 = vmatprep.subr.mxu0 0.0
    %2179 = vmatpush1.msra.mxu0 0.0
    %2180 = vmatprep.subr.mxu0 0.0
    %2181 = vmatpush1.msra.mxu0 0.0
    %2182 = vmatprep.subr.mxu0 0.0
    %2183 = vmatpush1.msra.mxu0 0.0
    %2184 = vmatprep.subr.mxu0 0.0
    %2185 = vmatpush1.msra.mxu0 0.0
    %2186 = vmatprep.subr.mxu0 0.0
    %2187 = vmatpush1.msra.mxu0 0.0
    %2188 = vmatprep.subr.mxu0 0.0
    %2189 = vmatpush1.msra.mxu0 0.0
    %2190 = vmatprep.subr.mxu0 0.0
    %2191 = vmatpush1.msra.mxu0 0.0
    %2192 = vmatprep.subr.mxu0 0.0
    %2193 = vmatpush1.msra.mxu0 0.0
    %2194 = vmatprep.subr.mxu0 0.0
    %2195 = vmatpush1.msra.mxu0 0.0
    %2196 = vmatprep.subr.mxu0 0.0
    %2197 = vmatpush1.msra.mxu0 0.0
    %2198 = vmatprep.subr.mxu0 0.0
    %2199 = vmatpush1.msra.mxu0 0.0
    %2200 = vmatprep.subr.mxu0 0.0
    %2201 = vmatpush1.msra.mxu0 0.0
    %2202 = vmatprep.subr.mxu0 0.0
    %2203 = vmatpush1.msra.mxu0 0.0
    %2204 = vmatprep.subr.mxu0 0.0
    %2205 = vmatpush1.msra.mxu0 0.0
    %2206 = vmatprep.subr.mxu0 0.0
    %2207 = vmatpush1.msra.mxu0 0.0
    %2208 = vmatprep.subr.mxu0 0.0
    %2209 = vmatpush1.msra.mxu0 0.0
    %2210 = vmatprep.subr.mxu0 0.0
    %2211 = vmatpush1.msra.mxu0 0.0
    %2212 = vmatprep.subr.mxu0 0.0
    %2213 = vmatpush1.msra.mxu0 0.0
    %2214 = vmatprep.subr.mxu0 0.0
    %2215 = vmatpush1.msra.mxu0 0.0
    %2216 = vmatprep.subr.mxu0 0.0
    %2217 = vmatpush1.msra.mxu0 0.0
    %2218 = vmatprep.subr.mxu0 0.0
    %2219 = vmatpush1.msra.mxu0 0.0
    %2220 = vmatprep.subr.mxu0 0.0
    %2221 = vmatpush1.msra.mxu0 0.0
    %2222 = vmatprep.subr.mxu0 0.0
    %2223 = vmatpush1.msra.mxu0 0.0
    %2224 = vmatprep.subr.mxu0 0.0
    %2225 = vmatpush1.msra.mxu0 0.0
    %2226 = vmatprep.mubr.f32.mxu0 0.0
    %2227 = vmatmul.mubr.f32.gmra.mrb[0].mxu0 %v2157
    %v2228 = vpop.f32.mrb[0].mxu0
    %v2229 = vadd.f32 0.0, %v2228
    %v2230 = vpop.f32.mrb[0].mxu0
    %2231 = vdwg.mxu0
    %v2232 = vld [vmem:[%s13] sm:$0xff]
    %v2233 = vld [vmem:[%s13 + $0x8] sm:$0xff]
    %v2234 = vld [vmem:[%s13 + $0x10] sm:$0xff]
    %v2235 = vld [vmem:[%s13 + $0x18] sm:$0xff]
    %vm2236 = vcmask 15360
    %v2238 = vsel %vm2236, %v2232, 0
    %v2241 = vsel %vm2236, %v2233, 0
    %v2244 = vsel %vm2236, %v2234, 0
    %v2247 = vsel %vm2236, %v2235, 0
    %vm2249 = vcmask 1041408
    %v2251 = vsel %vm2249, %v2229, 0
    %2253 = vmatprep.subr.mxu0 0.0
    %2254 = vmatpush1.msra.mxu0 %v2251
    %2255 = vmatprep.subr.mxu0 0.0
    %2256 = vmatpush1.msra.mxu0 0.0
    %2257 = vmatprep.subr.mxu0 0.0
    %2258 = vmatpush1.msra.mxu0 0.0
    %2259 = vmatprep.subr.mxu0 0.0
    %2260 = vmatpush1.msra.mxu0 0.0
    %2261 = vmatprep.subr.mxu0 0.0
    %2262 = vmatpush1.msra.mxu0 0.0
    %2263 = vmatprep.subr.mxu0 0.0
    %2264 = vmatpush1.msra.mxu0 0.0
    %2265 = vmatprep.subr.mxu0 0.0
    %2266 = vmatpush1.msra.mxu0 0.0
    %2267 = vmatprep.subr.mxu0 0.0
    %2268 = vmatpush1.msra.mxu0 0.0
    %2269 = vmatprep.subr.mxu0 0.0
    %2270 = vmatpush1.msra.mxu0 0.0
    %2271 = vmatprep.subr.mxu0 0.0
    %2272 = vmatpush1.msra.mxu0 0.0
    %2273 = vmatprep.subr.mxu0 0.0
    %2274 = vmatpush1.msra.mxu0 0.0
    %2275 = vmatprep.subr.mxu0 0.0
    %2276 = vmatpush1.msra.mxu0 0.0
    %2277 = vmatprep.subr.mxu0 0.0
    %2278 = vmatpush1.msra.mxu0 0.0
    %2279 = vmatprep.subr.mxu0 0.0
    %2280 = vmatpush1.msra.mxu0 0.0
    %2281 = vmatprep.subr.mxu0 0.0
    %2282 = vmatpush1.msra.mxu0 0.0
    %2283 = vmatprep.subr.mxu0 0.0
    %2284 = vmatpush1.msra.mxu0 0.0
    %2285 = vmatprep.subr.mxu0 0.0
    %2286 = vmatpush1.msra.mxu0 0.0
    %2287 = vmatprep.subr.mxu0 0.0
    %2288 = vmatpush1.msra.mxu0 0.0
    %2289 = vmatprep.subr.mxu0 0.0
    %2290 = vmatpush1.msra.mxu0 0.0
    %2291 = vmatprep.subr.mxu0 0.0
    %2292 = vmatpush1.msra.mxu0 0.0
    %2293 = vmatprep.subr.mxu0 0.0
    %2294 = vmatpush1.msra.mxu0 0.0
    %2295 = vmatprep.subr.mxu0 0.0
    %2296 = vmatpush1.msra.mxu0 0.0
    %2297 = vmatprep.subr.mxu0 0.0
    %2298 = vmatpush1.msra.mxu0 0.0
    %2299 = vmatprep.subr.mxu0 0.0
    %2300 = vmatpush1.msra.mxu0 0.0
    %2301 = vmatprep.subr.mxu0 0.0
    %2302 = vmatpush1.msra.mxu0 0.0
    %2303 = vmatprep.subr.mxu0 0.0
    %2304 = vmatpush1.msra.mxu0 0.0
    %2305 = vmatprep.subr.mxu0 0.0
    %2306 = vmatpush1.msra.mxu0 0.0
    %2307 = vmatprep.subr.mxu0 0.0
    %2308 = vmatpush1.msra.mxu0 0.0
    %2309 = vmatprep.subr.mxu0 0.0
    %2310 = vmatpush1.msra.mxu0 0.0
    %2311 = vmatprep.subr.mxu0 0.0
    %2312 = vmatpush1.msra.mxu0 0.0
    %2313 = vmatprep.subr.mxu0 0.0
    %2314 = vmatpush1.msra.mxu0 0.0
    %2315 = vmatprep.subr.mxu0 0.0
    %2316 = vmatpush1.msra.mxu0 0.0
    %2317 = vmatprep.mubr.f32.mxu0 0.0
    %2318 = vmatmul.mubr.f32.gmra.mrb[0].mxu0 %v2238
    %v2319 = vpop.f32.mrb[0].mxu0
    %v2320 = vadd.f32 0.0, %v2319
    %v2321 = vpop.f32.mrb[0].mxu0
    %2322 = vmatprep.mubr.f32.mxu0 0.0
    %2323 = vmatmul.mubr.f32.gmra.mrb[0].mxu0 %v2241
    %v2324 = vpop.f32.mrb[0].mxu0
    %v2325 = vadd.f32 0.0, %v2324
    %v2326 = vpop.f32.mrb[0].mxu0
    %2327 = vmatprep.mubr.f32.mxu0 0.0
    %2328 = vmatmul.mubr.f32.gmra.mrb[0].mxu0 %v2244
    %v2329 = vpop.f32.mrb[0].mxu0
    %v2330 = vadd.f32 0.0, %v2329
    %v2331 = vpop.f32.mrb[0].mxu0
    %2332 = vmatprep.mubr.f32.mxu0 0.0
    %2333 = vmatmul.mubr.f32.gmra.mrb[0].mxu0 %v2247
    %v2334 = vpop.f32.mrb[0].mxu0
    %v2335 = vadd.f32 0.0, %v2334
    %v2336 = vpop.f32.mrb[0].mxu0
    %2337 = vdwg.mxu0
    %v2338 = vmul.f32 %v623, %v2320
    %v2339 = vmul.f32 %v624, %v2325
    %v2340 = vmul.f32 %v625, %v2330
    %v2341 = vmul.f32 %v626, %v2335
    %v2342 = vsub.f32 1.0, %v2320
    %v2343 = vsub.f32 1.0, %v2325
    %v2344 = vsub.f32 1.0, %v2330
    %v2345 = vsub.f32 1.0, %v2335
    %v2346 = vmul.f32 %v1583, %v2342
    %v2347 = vmul.f32 %v1584, %v2343
    %v2348 = vmul.f32 %v1585, %v2344
    %v2349 = vmul.f32 %v1586, %v2345
    %s2350 = scalar_lea.vmem [#allocation3], 1024
    %v2351 = vld [vmem:[%s2350] sm:$0xff]
    %v2352 = vld [vmem:[%s2350 + $0x8] sm:$0xff]
    %v2353 = vld [vmem:[%s2350 + $0x10] sm:$0xff]
    %v2354 = vld [vmem:[%s2350 + $0x18] sm:$0xff]
    %v2355 = vld [vmem:[%s2350 + $0x20] sm:$0xff]
    %v2356 = vld [vmem:[%s2350 + $0x28] sm:$0xff]
    %v2357 = vld [vmem:[%s2350 + $0x30] sm:$0xff]
    %v2358 = vld [vmem:[%s2350 + $0x38] sm:$0xff]
    %s2359 = scalar_lea.vmem [#allocation3], 1088
    %v2360 = vld [vmem:[%s2359] sm:$0xff]
    %v2361 = vld [vmem:[%s2359 + $0x8] sm:$0xff]
    %v2362 = vld [vmem:[%s2359 + $0x10] sm:$0xff]
    %v2363 = vld [vmem:[%s2359 + $0x18] sm:$0xff]
    %v2364 = vld [vmem:[%s2359 + $0x20] sm:$0xff]
    %v2365 = vld [vmem:[%s2359 + $0x28] sm:$0xff]
    %v2366 = vld [vmem:[%s2359 + $0x30] sm:$0xff]
    %v2367 = vld [vmem:[%s2359 + $0x38] sm:$0xff]
    %v2369 = vsel %vm198, %v2346, 0
    %v2372 = vsel %vm198, %v2347, 0
    %v2375 = vsel %vm198, %v2348, 0
    %v2378 = vsel %vm198, %v2349, 0
    %2380 = vmatprep.subr.mxu0 0.0
    %2381 = vmatpush1.msra.mxu0 %v2360
    %2382 = vmatprep.subr.mxu0 0.0
    %2383 = vmatpush1.msra.mxu0 %v2361
    %2384 = vmatprep.subr.mxu0 0.0
    %2385 = vmatpush1.msra.mxu0 %v2362
    %2386 = vmatprep.subr.mxu0 0.0
    %2387 = vmatpush1.msra.mxu0 %v2363
    %2388 = vmatprep.subr.mxu0 0.0
    %2389 = vmatpush1.msra.mxu0 %v2364
    %2390 = vmatprep.subr.mxu0 0.0
    %2391 = vmatpush1.msra.mxu0 %v2365
    %2392 = vmatprep.subr.mxu0 0.0
    %2393 = vmatpush1.msra.mxu0 %v2366
    %2394 = vmatprep.subr.mxu0 0.0
    %2395 = vmatpush1.msra.mxu0 %v2367
    %2396 = vmatprep.subr.mxu0 0.0
    %2397 = vmatpush1.msra.mxu0 0.0
    %2398 = vmatprep.subr.mxu0 0.0
    %2399 = vmatpush1.msra.mxu0 0.0
    %2400 = vmatprep.subr.mxu0 0.0
    %2401 = vmatpush1.msra.mxu0 0.0
    %2402 = vmatprep.subr.mxu0 0.0
    %2403 = vmatpush1.msra.mxu0 0.0
    %2404 = vmatprep.subr.mxu0 0.0
    %2405 = vmatpush1.msra.mxu0 0.0
    %2406 = vmatprep.subr.mxu0 0.0
    %2407 = vmatpush1.msra.mxu0 0.0
    %2408 = vmatprep.subr.mxu0 0.0
    %2409 = vmatpush1.msra.mxu0 0.0
    %2410 = vmatprep.subr.mxu0 0.0
    %2411 = vmatpush1.msra.mxu0 0.0
    %2412 = vmatprep.subr.mxu0 0.0
    %2413 = vmatpush1.msra.mxu0 0.0
    %2414 = vmatprep.subr.mxu0 0.0
    %2415 = vmatpush1.msra.mxu0 0.0
    %2416 = vmatprep.subr.mxu0 0.0
    %2417 = vmatpush1.msra.mxu0 0.0
    %2418 = vmatprep.subr.mxu0 0.0
    %2419 = vmatpush1.msra.mxu0 0.0
    %2420 = vmatprep.subr.mxu0 0.0
    %2421 = vmatpush1.msra.mxu0 0.0
    %2422 = vmatprep.subr.mxu0 0.0
    %2423 = vmatpush1.msra.mxu0 0.0
    %2424 = vmatprep.subr.mxu0 0.0
    %2425 = vmatpush1.msra.mxu0 0.0
    %2426 = vmatprep.subr.mxu0 0.0
    %2427 = vmatpush1.msra.mxu0 0.0
    %2428 = vmatprep.subr.mxu0 0.0
    %2429 = vmatpush1.msra.mxu0 0.0
    %2430 = vmatprep.subr.mxu0 0.0
    %2431 = vmatpush1.msra.mxu0 0.0
    %2432 = vmatprep.subr.mxu0 0.0
    %2433 = vmatpush1.msra.mxu0 0.0
    %2434 = vmatprep.subr.mxu0 0.0
    %2435 = vmatpush1.msra.mxu0 0.0
    %2436 = vmatprep.subr.mxu0 0.0
    %2437 = vmatpush1.msra.mxu0 0.0
    %2438 = vmatprep.subr.mxu0 0.0
    %2439 = vmatpush1.msra.mxu0 0.0
    %2440 = vmatprep.subr.mxu0 0.0
    %2441 = vmatpush1.msra.mxu0 0.0
    %2442 = vmatprep.subr.mxu0 0.0
    %2443 = vmatpush1.msra.mxu0 0.0
    %2444 = vmatprep.mubr.f32.mxu0 0.0
    %2445 = vmatmul.mubr.f32.gmra.mrb[0].mxu0 %v2369
    %v2446 = vpop.f32.mrb[0].mxu0
    %v2447 = vadd.f32 0.0, %v2446
    %v2448 = vpop.f32.mrb[0].mxu0
    %2449 = vmatprep.mubr.f32.mxu0 0.0
    %2450 = vmatmul.mubr.f32.gmra.mrb[0].mxu0 %v2372
    %v2451 = vpop.f32.mrb[0].mxu0
    %v2452 = vadd.f32 0.0, %v2451
    %v2453 = vpop.f32.mrb[0].mxu0
    %2454 = vmatprep.mubr.f32.mxu0 0.0
    %2455 = vmatmul.mubr.f32.gmra.mrb[0].mxu0 %v2375
    %v2456 = vpop.f32.mrb[0].mxu0
    %v2457 = vadd.f32 0.0, %v2456
    %v2458 = vpop.f32.mrb[0].mxu0
    %2459 = vmatprep.mubr.f32.mxu0 0.0
    %2460 = vmatmul.mubr.f32.gmra.mrb[0].mxu0 %v2378
    %v2461 = vpop.f32.mrb[0].mxu0
    %v2462 = vadd.f32 0.0, %v2461
    %v2463 = vpop.f32.mrb[0].mxu0
    %2464 = vdwg.mxu0
    %v2466 = vsel %vm198, %v2338, 0
    %v2469 = vsel %vm198, %v2339, 0
    %v2472 = vsel %vm198, %v2340, 0
    %v2475 = vsel %vm198, %v2341, 0
    %2477 = vmatprep.subr.mxu0 0.0
    %2478 = vmatpush1.msra.mxu0 %v2351
    %2479 = vmatprep.subr.mxu0 0.0
    %2480 = vmatpush1.msra.mxu0 %v2352
    %2481 = vmatprep.subr.mxu0 0.0
    %2482 = vmatpush1.msra.mxu0 %v2353
    %2483 = vmatprep.subr.mxu0 0.0
    %2484 = vmatpush1.msra.mxu0 %v2354
    %2485 = vmatprep.subr.mxu0 0.0
    %2486 = vmatpush1.msra.mxu0 %v2355
    %2487 = vmatprep.subr.mxu0 0.0
    %2488 = vmatpush1.msra.mxu0 %v2356
    %2489 = vmatprep.subr.mxu0 0.0
    %2490 = vmatpush1.msra.mxu0 %v2357
    %2491 = vmatprep.subr.mxu0 0.0
    %2492 = vmatpush1.msra.mxu0 %v2358
    %2493 = vmatprep.subr.mxu0 0.0
    %2494 = vmatpush1.msra.mxu0 0.0
    %2495 = vmatprep.subr.mxu0 0.0
    %2496 = vmatpush1.msra.mxu0 0.0
    %2497 = vmatprep.subr.mxu0 0.0
    %2498 = vmatpush1.msra.mxu0 0.0
    %2499 = vmatprep.subr.mxu0 0.0
    %2500 = vmatpush1.msra.mxu0 0.0
    %2501 = vmatprep.subr.mxu0 0.0
    %2502 = vmatpush1.msra.mxu0 0.0
    %2503 = vmatprep.subr.mxu0 0.0
    %2504 = vmatpush1.msra.mxu0 0.0
    %2505 = vmatprep.subr.mxu0 0.0
    %2506 = vmatpush1.msra.mxu0 0.0
    %2507 = vmatprep.subr.mxu0 0.0
    %2508 = vmatpush1.msra.mxu0 0.0
    %2509 = vmatprep.subr.mxu0 0.0
    %2510 = vmatpush1.msra.mxu0 0.0
    %2511 = vmatprep.subr.mxu0 0.0
    %2512 = vmatpush1.msra.mxu0 0.0
    %2513 = vmatprep.subr.mxu0 0.0
    %2514 = vmatpush1.msra.mxu0 0.0
    %2515 = vmatprep.subr.mxu0 0.0
    %2516 = vmatpush1.msra.mxu0 0.0
    %2517 = vmatprep.subr.mxu0 0.0
    %2518 = vmatpush1.msra.mxu0 0.0
    %2519 = vmatprep.subr.mxu0 0.0
    %2520 = vmatpush1.msra.mxu0 0.0
    %2521 = vmatprep.subr.mxu0 0.0
    %2522 = vmatpush1.msra.mxu0 0.0
    %2523 = vmatprep.subr.mxu0 0.0
    %2524 = vmatpush1.msra.mxu0 0.0
    %2525 = vmatprep.subr.mxu0 0.0
    %2526 = vmatpush1.msra.mxu0 0.0
    %2527 = vmatprep.subr.mxu0 0.0
    %2528 = vmatpush1.msra.mxu0 0.0
    %2529 = vmatprep.subr.mxu0 0.0
    %2530 = vmatpush1.msra.mxu0 0.0
    %2531 = vmatprep.subr.mxu0 0.0
    %2532 = vmatpush1.msra.mxu0 0.0
    %2533 = vmatprep.subr.mxu0 0.0
    %2534 = vmatpush1.msra.mxu0 0.0
    %2535 = vmatprep.subr.mxu0 0.0
    %2536 = vmatpush1.msra.mxu0 0.0
    %2537 = vmatprep.subr.mxu0 0.0
    %2538 = vmatpush1.msra.mxu0 0.0
    %2539 = vmatprep.subr.mxu0 0.0
    %2540 = vmatpush1.msra.mxu0 0.0
    %2541 = vmatprep.mubr.f32.mxu0 0.0
    %2542 = vmatmul.mubr.f32.gmra.mrb[0].mxu0 %v2466
    %v2543 = vpop.f32.mrb[0].mxu0
    %v2544 = vadd.f32 %v2447, %v2543
    %v2545 = vpop.f32.mrb[0].mxu0
    %2546 = vmatprep.mubr.f32.mxu0 0.0
    %2547 = vmatmul.mubr.f32.gmra.mrb[0].mxu0 %v2469
    %v2548 = vpop.f32.mrb[0].mxu0
    %v2549 = vadd.f32 %v2452, %v2548
    %v2550 = vpop.f32.mrb[0].mxu0
    %2551 = vmatprep.mubr.f32.mxu0 0.0
    %2552 = vmatmul.mubr.f32.gmra.mrb[0].mxu0 %v2472
    %v2553 = vpop.f32.mrb[0].mxu0
    %v2554 = vadd.f32 %v2457, %v2553
    %v2555 = vpop.f32.mrb[0].mxu0
    %2556 = vmatprep.mubr.f32.mxu0 0.0
    %2557 = vmatmul.mubr.f32.gmra.mrb[0].mxu0 %v2475
    %v2558 = vpop.f32.mrb[0].mxu0
    %v2559 = vadd.f32 %v2462, %v2558
    %v2560 = vpop.f32.mrb[0].mxu0
    %2561 = vdwg.mxu0
    %v2562 = vld [vmem:[%s3 + $0x2] sm:$0x1]
    %v2563 = vlaneseq
    %v2564 = vshrl.u32 %v2563, 7
    %v2565 = vsub.s32 0, %v2564
    %v2566 = vrot.slane %v2562, %v2565
    %v2567 = vmul.f32 %v2544, %v2566
    %v2568 = vmul.f32 %v2549, %v2566
    %v2569 = vmul.f32 %v2554, %v2566
    %v2570 = vmul.f32 %v2559, %v2566
    %v2571 = vld [vmem:[%s4 + $0x2] sm:$0x1]
    %v2572 = vlaneseq
    %v2573 = vshrl.u32 %v2572, 7
    %v2574 = vsub.s32 0, %v2573
    %v2575 = vrot.slane %v2571, %v2574
    %v2576 = vadd.f32 %v2567, %v2575
    %v2577 = vadd.f32 %v2568, %v2575
    %v2578 = vadd.f32 %v2569, %v2575
    %v2579 = vadd.f32 %v2570, %v2575
    %v2580 = vmax.f32 %v2576, 0.0
    %v2581 = vmax.f32 %v2577, 0.0
    %v2582 = vmax.f32 %v2578, 0.0
    %v2583 = vmax.f32 %v2579, 0.0
    %s2584 = scalar_lea.vmem [#allocation3], 512
    %v2585 = vld [vmem:[%s2584] sm:$0xff]
    %v2586 = vld [vmem:[%s2584 + $0x8] sm:$0xff]
    %v2587 = vld [vmem:[%s2584 + $0x10] sm:$0xff]
    %v2588 = vld [vmem:[%s2584 + $0x18] sm:$0xff]
    %v2589 = vld [vmem:[%s2584 + $0x20] sm:$0xff]
    %v2590 = vld [vmem:[%s2584 + $0x28] sm:$0xff]
    %v2591 = vld [vmem:[%s2584 + $0x30] sm:$0xff]
    %v2592 = vld [vmem:[%s2584 + $0x38] sm:$0xff]
    %s2593 = scalar_lea.vmem [#allocation3], 576
    %v2594 = vld [vmem:[%s2593] sm:$0xff]
    %v2595 = vld [vmem:[%s2593 + $0x8] sm:$0xff]
    %v2596 = vld [vmem:[%s2593 + $0x10] sm:$0xff]
    %v2597 = vld [vmem:[%s2593 + $0x18] sm:$0xff]
    %v2598 = vld [vmem:[%s2593 + $0x20] sm:$0xff]
    %v2599 = vld [vmem:[%s2593 + $0x28] sm:$0xff]
    %v2600 = vld [vmem:[%s2593 + $0x30] sm:$0xff]
    %v2601 = vld [vmem:[%s2593 + $0x38] sm:$0xff]
    %2602 = vmatprep.subr.mxu0 0.0
    %2603 = vmatpush1.msra.mxu0 %v2594
    %2604 = vmatprep.subr.mxu0 0.0
    %2605 = vmatpush1.msra.mxu0 %v2595
    %2606 = vmatprep.subr.mxu0 0.0
    %2607 = vmatpush1.msra.mxu0 %v2596
    %2608 = vmatprep.subr.mxu0 0.0
    %2609 = vmatpush1.msra.mxu0 %v2597
    %2610 = vmatprep.subr.mxu0 0.0
    %2611 = vmatpush1.msra.mxu0 %v2598
    %2612 = vmatprep.subr.mxu0 0.0
    %2613 = vmatpush1.msra.mxu0 %v2599
    %2614 = vmatprep.subr.mxu0 0.0
    %2615 = vmatpush1.msra.mxu0 %v2600
    %2616 = vmatprep.subr.mxu0 0.0
    %2617 = vmatpush1.msra.mxu0 %v2601
    %2618 = vmatprep.subr.mxu0 0.0
    %2619 = vmatpush1.msra.mxu0 0.0
    %2620 = vmatprep.subr.mxu0 0.0
    %2621 = vmatpush1.msra.mxu0 0.0
    %2622 = vmatprep.subr.mxu0 0.0
    %2623 = vmatpush1.msra.mxu0 0.0
    %2624 = vmatprep.subr.mxu0 0.0
    %2625 = vmatpush1.msra.mxu0 0.0
    %2626 = vmatprep.subr.mxu0 0.0
    %2627 = vmatpush1.msra.mxu0 0.0
    %2628 = vmatprep.subr.mxu0 0.0
    %2629 = vmatpush1.msra.mxu0 0.0
    %2630 = vmatprep.subr.mxu0 0.0
    %2631 = vmatpush1.msra.mxu0 0.0
    %2632 = vmatprep.subr.mxu0 0.0
    %2633 = vmatpush1.msra.mxu0 0.0
    %2634 = vmatprep.subr.mxu0 0.0
    %2635 = vmatpush1.msra.mxu0 0.0
    %2636 = vmatprep.subr.mxu0 0.0
    %2637 = vmatpush1.msra.mxu0 0.0
    %2638 = vmatprep.subr.mxu0 0.0
    %2639 = vmatpush1.msra.mxu0 0.0
    %2640 = vmatprep.subr.mxu0 0.0
    %2641 = vmatpush1.msra.mxu0 0.0
    %2642 = vmatprep.subr.mxu0 0.0
    %2643 = vmatpush1.msra.mxu0 0.0
    %2644 = vmatprep.subr.mxu0 0.0
    %2645 = vmatpush1.msra.mxu0 0.0
    %2646 = vmatprep.subr.mxu0 0.0
    %2647 = vmatpush1.msra.mxu0 0.0
    %2648 = vmatprep.subr.mxu0 0.0
    %2649 = vmatpush1.msra.mxu0 0.0
    %2650 = vmatprep.subr.mxu0 0.0
    %2651 = vmatpush1.msra.mxu0 0.0
    %2652 = vmatprep.subr.mxu0 0.0
    %2653 = vmatpush1.msra.mxu0 0.0
    %2654 = vmatprep.subr.mxu0 0.0
    %2655 = vmatpush1.msra.mxu0 0.0
    %2656 = vmatprep.subr.mxu0 0.0
    %2657 = vmatpush1.msra.mxu0 0.0
    %2658 = vmatprep.subr.mxu0 0.0
    %2659 = vmatpush1.msra.mxu0 0.0
    %2660 = vmatprep.subr.mxu0 0.0
    %2661 = vmatpush1.msra.mxu0 0.0
    %2662 = vmatprep.subr.mxu0 0.0
    %2663 = vmatpush1.msra.mxu0 0.0
    %2664 = vmatprep.subr.mxu0 0.0
    %2665 = vmatpush1.msra.mxu0 0.0
    %2666 = vmatprep.mubr.f32.mxu0 0.0
    %2667 = vmatmul.mubr.f32.gmra.mrb[0].mxu0 %v200
    %v2668 = vpop.f32.mrb[0].mxu0
    %v2669 = vadd.f32 0.0, %v2668
    %v2670 = vpop.f32.mrb[0].mxu0
    %2671 = vmatprep.mubr.f32.mxu0 0.0
    %2672 = vmatmul.mubr.f32.gmra.mrb[0].mxu0 %v203
    %v2673 = vpop.f32.mrb[0].mxu0
    %v2674 = vadd.f32 0.0, %v2673
    %v2675 = vpop.f32.mrb[0].mxu0
    %2676 = vmatprep.mubr.f32.mxu0 0.0
    %2677 = vmatmul.mubr.f32.gmra.mrb[0].mxu0 %v206
    %v2678 = vpop.f32.mrb[0].mxu0
    %v2679 = vadd.f32 0.0, %v2678
    %v2680 = vpop.f32.mrb[0].mxu0
    %2681 = vmatprep.mubr.f32.mxu0 0.0
    %2682 = vmatmul.mubr.f32.gmra.mrb[0].mxu0 %v209
    %v2683 = vpop.f32.mrb[0].mxu0
    %v2684 = vadd.f32 0.0, %v2683
    %v2685 = vpop.f32.mrb[0].mxu0
    %2686 = vdwg.mxu0
    %2687 = vmatprep.subr.mxu0 0.0
    %2688 = vmatpush1.msra.mxu0 %v2585
    %2689 = vmatprep.subr.mxu0 0.0
    %2690 = vmatpush1.msra.mxu0 %v2586
    %2691 = vmatprep.subr.mxu0 0.0
    %2692 = vmatpush1.msra.mxu0 %v2587
    %2693 = vmatprep.subr.mxu0 0.0
    %2694 = vmatpush1.msra.mxu0 %v2588
    %2695 = vmatprep.subr.mxu0 0.0
    %2696 = vmatpush1.msra.mxu0 %v2589
    %2697 = vmatprep.subr.mxu0 0.0
    %2698 = vmatpush1.msra.mxu0 %v2590
    %2699 = vmatprep.subr.mxu0 0.0
    %2700 = vmatpush1.msra.mxu0 %v2591
    %2701 = vmatprep.subr.mxu0 0.0
    %2702 = vmatpush1.msra.mxu0 %v2592
    %2703 = vmatprep.subr.mxu0 0.0
    %2704 = vmatpush1.msra.mxu0 0.0
    %2705 = vmatprep.subr.mxu0 0.0
    %2706 = vmatpush1.msra.mxu0 0.0
    %2707 = vmatprep.subr.mxu0 0.0
    %2708 = vmatpush1.msra.mxu0 0.0
    %2709 = vmatprep.subr.mxu0 0.0
    %2710 = vmatpush1.msra.mxu0 0.0
    %2711 = vmatprep.subr.mxu0 0.0
    %2712 = vmatpush1.msra.mxu0 0.0
    %2713 = vmatprep.subr.mxu0 0.0
    %2714 = vmatpush1.msra.mxu0 0.0
    %2715 = vmatprep.subr.mxu0 0.0
    %2716 = vmatpush1.msra.mxu0 0.0
    %2717 = vmatprep.subr.mxu0 0.0
    %2718 = vmatpush1.msra.mxu0 0.0
    %2719 = vmatprep.subr.mxu0 0.0
    %2720 = vmatpush1.msra.mxu0 0.0
    %2721 = vmatprep.subr.mxu0 0.0
    %2722 = vmatpush1.msra.mxu0 0.0
    %2723 = vmatprep.subr.mxu0 0.0
    %2724 = vmatpush1.msra.mxu0 0.0
    %2725 = vmatprep.subr.mxu0 0.0
    %2726 = vmatpush1.msra.mxu0 0.0
    %2727 = vmatprep.subr.mxu0 0.0
    %2728 = vmatpush1.msra.mxu0 0.0
    %2729 = vmatprep.subr.mxu0 0.0
    %2730 = vmatpush1.msra.mxu0 0.0
    %2731 = vmatprep.subr.mxu0 0.0
    %2732 = vmatpush1.msra.mxu0 0.0
    %2733 = vmatprep.subr.mxu0 0.0
    %2734 = vmatpush1.msra.mxu0 0.0
    %2735 = vmatprep.subr.mxu0 0.0
    %2736 = vmatpush1.msra.mxu0 0.0
    %2737 = vmatprep.subr.mxu0 0.0
    %2738 = vmatpush1.msra.mxu0 0.0
    %2739 = vmatprep.subr.mxu0 0.0
    %2740 = vmatpush1.msra.mxu0 0.0
    %2741 = vmatprep.subr.mxu0 0.0
    %2742 = vmatpush1.msra.mxu0 0.0
    %2743 = vmatprep.subr.mxu0 0.0
    %2744 = vmatpush1.msra.mxu0 0.0
    %2745 = vmatprep.subr.mxu0 0.0
    %2746 = vmatpush1.msra.mxu0 0.0
    %2747 = vmatprep.subr.mxu0 0.0
    %2748 = vmatpush1.msra.mxu0 0.0
    %2749 = vmatprep.subr.mxu0 0.0
    %2750 = vmatpush1.msra.mxu0 0.0
    %2751 = vmatprep.mubr.f32.mxu0 0.0
    %2752 = vmatmul.mubr.f32.gmra.mrb[0].mxu0 %v850
    %v2753 = vpop.f32.mrb[0].mxu0
    %v2754 = vadd.f32 %v2669, %v2753
    %v2755 = vpop.f32.mrb[0].mxu0
    %2756 = vmatprep.mubr.f32.mxu0 0.0
    %2757 = vmatmul.mubr.f32.gmra.mrb[0].mxu0 %v853
    %v2758 = vpop.f32.mrb[0].mxu0
    %v2759 = vadd.f32 %v2674, %v2758
    %v2760 = vpop.f32.mrb[0].mxu0
    %2761 = vmatprep.mubr.f32.mxu0 0.0
    %2762 = vmatmul.mubr.f32.gmra.mrb[0].mxu0 %v856
    %v2763 = vpop.f32.mrb[0].mxu0
    %v2764 = vadd.f32 %v2679, %v2763
    %v2765 = vpop.f32.mrb[0].mxu0
    %2766 = vmatprep.mubr.f32.mxu0 0.0
    %2767 = vmatmul.mubr.f32.gmra.mrb[0].mxu0 %v859
    %v2768 = vpop.f32.mrb[0].mxu0
    %v2769 = vadd.f32 %v2684, %v2768
    %v2770 = vpop.f32.mrb[0].mxu0
    %2771 = vdwg.mxu0
    %s2772 = scalar_lea.vmem [#allocation3], 640
    %v2773 = vld [vmem:[%s2772] sm:$0xff]
    %v2774 = vld [vmem:[%s2772 + $0x8] sm:$0xff]
    %v2775 = vld [vmem:[%s2772 + $0x10] sm:$0xff]
    %v2776 = vld [vmem:[%s2772 + $0x18] sm:$0xff]
    %v2777 = vld [vmem:[%s2772 + $0x20] sm:$0xff]
    %v2778 = vld [vmem:[%s2772 + $0x28] sm:$0xff]
    %v2779 = vld [vmem:[%s2772 + $0x30] sm:$0xff]
    %v2780 = vld [vmem:[%s2772 + $0x38] sm:$0xff]
    %2781 = vmatprep.subr.mxu0 0.0
    %2782 = vmatpush1.msra.mxu0 %v2773
    %2783 = vmatprep.subr.mxu0 0.0
    %2784 = vmatpush1.msra.mxu0 %v2774
    %2785 = vmatprep.subr.mxu0 0.0
    %2786 = vmatpush1.msra.mxu0 %v2775
    %2787 = vmatprep.subr.mxu0 0.0
    %2788 = vmatpush1.msra.mxu0 %v2776
    %2789 = vmatprep.subr.mxu0 0.0
    %2790 = vmatpush1.msra.mxu0 %v2777
    %2791 = vmatprep.subr.mxu0 0.0
    %2792 = vmatpush1.msra.mxu0 %v2778
    %2793 = vmatprep.subr.mxu0 0.0
    %2794 = vmatpush1.msra.mxu0 %v2779
    %2795 = vmatprep.subr.mxu0 0.0
    %2796 = vmatpush1.msra.mxu0 %v2780
    %2797 = vmatprep.subr.mxu0 0.0
    %2798 = vmatpush1.msra.mxu0 0.0
    %2799 = vmatprep.subr.mxu0 0.0
    %2800 = vmatpush1.msra.mxu0 0.0
    %2801 = vmatprep.subr.mxu0 0.0
    %2802 = vmatpush1.msra.mxu0 0.0
    %2803 = vmatprep.subr.mxu0 0.0
    %2804 = vmatpush1.msra.mxu0 0.0
    %2805 = vmatprep.subr.mxu0 0.0
    %2806 = vmatpush1.msra.mxu0 0.0
    %2807 = vmatprep.subr.mxu0 0.0
    %2808 = vmatpush1.msra.mxu0 0.0
    %2809 = vmatprep.subr.mxu0 0.0
    %2810 = vmatpush1.msra.mxu0 0.0
    %2811 = vmatprep.subr.mxu0 0.0
    %2812 = vmatpush1.msra.mxu0 0.0
    %2813 = vmatprep.subr.mxu0 0.0
    %2814 = vmatpush1.msra.mxu0 0.0
    %2815 = vmatprep.subr.mxu0 0.0
    %2816 = vmatpush1.msra.mxu0 0.0
    %2817 = vmatprep.subr.mxu0 0.0
    %2818 = vmatpush1.msra.mxu0 0.0
    %2819 = vmatprep.subr.mxu0 0.0
    %2820 = vmatpush1.msra.mxu0 0.0
    %2821 = vmatprep.subr.mxu0 0.0
    %2822 = vmatpush1.msra.mxu0 0.0
    %2823 = vmatprep.subr.mxu0 0.0
    %2824 = vmatpush1.msra.mxu0 0.0
    %2825 = vmatprep.subr.mxu0 0.0
    %2826 = vmatpush1.msra.mxu0 0.0
    %2827 = vmatprep.subr.mxu0 0.0
    %2828 = vmatpush1.msra.mxu0 0.0
    %2829 = vmatprep.subr.mxu0 0.0
    %2830 = vmatpush1.msra.mxu0 0.0
    %2831 = vmatprep.subr.mxu0 0.0
    %2832 = vmatpush1.msra.mxu0 0.0
    %2833 = vmatprep.subr.mxu0 0.0
    %2834 = vmatpush1.msra.mxu0 0.0
    %2835 = vmatprep.subr.mxu0 0.0
    %2836 = vmatpush1.msra.mxu0 0.0
    %2837 = vmatprep.subr.mxu0 0.0
    %2838 = vmatpush1.msra.mxu0 0.0
    %2839 = vmatprep.subr.mxu0 0.0
    %2840 = vmatpush1.msra.mxu0 0.0
    %2841 = vmatprep.subr.mxu0 0.0
    %2842 = vmatpush1.msra.mxu0 0.0
    %2843 = vmatprep.subr.mxu0 0.0
    %2844 = vmatpush1.msra.mxu0 0.0
    %2845 = vmatprep.mubr.f32.mxu0 0.0
    %2846 = vmatmul.mubr.f32.gmra.mrb[0].mxu0 %v1253
    %v2847 = vpop.f32.mrb[0].mxu0
    %v2848 = vadd.f32 0.0, %v2847
    %v2849 = vpop.f32.mrb[0].mxu0
    %2850 = vmatprep.mubr.f32.mxu0 0.0
    %2851 = vmatmul.mubr.f32.gmra.mrb[0].mxu0 %v1256
    %v2852 = vpop.f32.mrb[0].mxu0
    %v2853 = vadd.f32 0.0, %v2852
    %v2854 = vpop.f32.mrb[0].mxu0
    %2855 = vmatprep.mubr.f32.mxu0 0.0
    %2856 = vmatmul.mubr.f32.gmra.mrb[0].mxu0 %v1259
    %v2857 = vpop.f32.mrb[0].mxu0
    %v2858 = vadd.f32 0.0, %v2857
    %v2859 = vpop.f32.mrb[0].mxu0
    %2860 = vmatprep.mubr.f32.mxu0 0.0
    %2861 = vmatmul.mubr.f32.gmra.mrb[0].mxu0 %v1262
    %v2862 = vpop.f32.mrb[0].mxu0
    %v2863 = vadd.f32 0.0, %v2862
    %v2864 = vpop.f32.mrb[0].mxu0
    %2865 = vdwg.mxu0
    %v2866 = vadd.f32 %v2754, %v2848
    %v2867 = vadd.f32 %v2759, %v2853
    %v2868 = vadd.f32 %v2764, %v2858
    %v2869 = vadd.f32 %v2769, %v2863
    %v2870 = vld [vmem:[%s3 + $0x3] sm:$0x1]
    %v2871 = vlaneseq
    %v2872 = vshrl.u32 %v2871, 7
    %v2873 = vsub.s32 0, %v2872
    %v2874 = vrot.slane %v2870, %v2873
    %v2875 = vmul.f32 %v2866, %v2874
    %v2876 = vmul.f32 %v2867, %v2874
    %v2877 = vmul.f32 %v2868, %v2874
    %v2878 = vmul.f32 %v2869, %v2874
    %v2879 = vld [vmem:[%s4 + $0x3] sm:$0x1]
    %v2880 = vlaneseq
    %v2881 = vshrl.u32 %v2880, 7
    %v2882 = vsub.s32 0, %v2881
    %v2883 = vrot.slane %v2879, %v2882
    %v2884 = vadd.f32 %v2875, %v2883
    %v2885 = vadd.f32 %v2876, %v2883
    %v2886 = vadd.f32 %v2877, %v2883
    %v2887 = vadd.f32 %v2878, %v2883
    %v2888 = vmax.f32 %v2884, 0.0
    %v2889 = vmax.f32 %v2885, 0.0
    %v2890 = vmax.f32 %v2886, 0.0
    %v2891 = vmax.f32 %v2887, 0.0
    %2892 = vmatprep.subr.mxu0 0.0
    %2893 = vmatpush1.msra.mxu0 %v2888
    %2894 = vmatprep.subr.mxu0 0.0
    %2895 = vmatpush1.msra.mxu0 %v2889
    %2896 = vmatprep.subr.mxu0 0.0
    %2897 = vmatpush1.msra.mxu0 %v2890
    %2898 = vmatprep.subr.mxu0 0.0
    %2899 = vmatpush1.msra.mxu0 %v2891
    %2900 = vmatprep.subr.mxu0 0.0
    %2901 = vmatpush1.msra.mxu0 0.0
    %2902 = vmatprep.subr.mxu0 0.0
    %2903 = vmatpush1.msra.mxu0 0.0
    %2904 = vmatprep.subr.mxu0 0.0
    %2905 = vmatpush1.msra.mxu0 0.0
    %2906 = vmatprep.subr.mxu0 0.0
    %2907 = vmatpush1.msra.mxu0 0.0
    %2908 = vmatprep.subr.mxu0 0.0
    %2909 = vmatpush1.msra.mxu0 0.0
    %2910 = vmatprep.subr.mxu0 0.0
    %2911 = vmatpush1.msra.mxu0 0.0
    %2912 = vmatprep.subr.mxu0 0.0
    %2913 = vmatpush1.msra.mxu0 0.0
    %2914 = vmatprep.subr.mxu0 0.0
    %2915 = vmatpush1.msra.mxu0 0.0
    %2916 = vmatprep.subr.mxu0 0.0
    %2917 = vmatpush1.msra.mxu0 0.0
    %2918 = vmatprep.subr.mxu0 0.0
    %2919 = vmatpush1.msra.mxu0 0.0
    %2920 = vmatprep.subr.mxu0 0.0
    %2921 = vmatpush1.msra.mxu0 0.0
    %2922 = vmatprep.subr.mxu0 0.0
    %2923 = vmatpush1.msra.mxu0 0.0
    %2924 = vmatprep.subr.mxu0 0.0
    %2925 = vmatpush1.msra.mxu0 0.0
    %2926 = vmatprep.subr.mxu0 0.0
    %2927 = vmatpush1.msra.mxu0 0.0
    %2928 = vmatprep.subr.mxu0 0.0
    %2929 = vmatpush1.msra.mxu0 0.0
    %2930 = vmatprep.subr.mxu0 0.0
    %2931 = vmatpush1.msra.mxu0 0.0
    %2932 = vmatprep.subr.mxu0 0.0
    %2933 = vmatpush1.msra.mxu0 0.0
    %2934 = vmatprep.subr.mxu0 0.0
    %2935 = vmatpush1.msra.mxu0 0.0
    %2936 = vmatprep.subr.mxu0 0.0
    %2937 = vmatpush1.msra.mxu0 0.0
    %2938 = vmatprep.subr.mxu0 0.0
    %2939 = vmatpush1.msra.mxu0 0.0
    %2940 = vmatprep.subr.mxu0 0.0
    %2941 = vmatpush1.msra.mxu0 0.0
    %2942 = vmatprep.subr.mxu0 0.0
    %2943 = vmatpush1.msra.mxu0 0.0
    %2944 = vmatprep.subr.mxu0 0.0
    %2945 = vmatpush1.msra.mxu0 0.0
    %2946 = vmatprep.subr.mxu0 0.0
    %2947 = vmatpush1.msra.mxu0 0.0
    %2948 = vmatprep.subr.mxu0 0.0
    %2949 = vmatpush1.msra.mxu0 0.0
    %2950 = vmatprep.subr.mxu0 0.0
    %2951 = vmatpush1.msra.mxu0 0.0
    %2952 = vmatprep.subr.mxu0 0.0
    %2953 = vmatpush1.msra.mxu0 0.0
    %2954 = vmatprep.subr.mxu0 0.0
    %2955 = vmatpush1.msra.mxu0 0.0
    %2956 = vmatprep.mubr.f32.mxu0 0.0
    %2957 = vmatmul.mubr.f32.gmra.mrb[0].mxu0 %v633
    %v2958 = vpop.f32.mrb[0].mxu0
    %v2959 = vadd.f32 0.0, %v2958
    %v2960 = vpop.f32.mrb[0].mxu0
    %2961 = vmatprep.mubr.f32.mxu0 0.0
    %2962 = vmatmul.mubr.f32.gmra.mrb[0].mxu0 %v636
    %v2963 = vpop.f32.mrb[0].mxu0
    %v2964 = vadd.f32 0.0, %v2963
    %v2965 = vpop.f32.mrb[0].mxu0
    %2966 = vmatprep.mubr.f32.mxu0 0.0
    %2967 = vmatmul.mubr.f32.gmra.mrb[0].mxu0 %v639
    %v2968 = vpop.f32.mrb[0].mxu0
    %v2969 = vadd.f32 0.0, %v2968
    %v2970 = vpop.f32.mrb[0].mxu0
    %2971 = vmatprep.mubr.f32.mxu0 0.0
    %2972 = vmatmul.mubr.f32.gmra.mrb[0].mxu0 %v642
    %v2973 = vpop.f32.mrb[0].mxu0
    %v2974 = vadd.f32 0.0, %v2973
    %v2975 = vpop.f32.mrb[0].mxu0
    %2976 = vdwg.mxu0
    %s2977 = scalar_lea.vmem [#allocation3], 704
    %v2978 = vld [vmem:[%s2977] sm:$0xff]
    %v2979 = vld [vmem:[%s2977 + $0x8] sm:$0xff]
    %v2980 = vld [vmem:[%s2977 + $0x10] sm:$0xff]
    %v2981 = vld [vmem:[%s2977 + $0x18] sm:$0xff]
    %v2982 = vld [vmem:[%s2977 + $0x20] sm:$0xff]
    %v2983 = vld [vmem:[%s2977 + $0x28] sm:$0xff]
    %v2984 = vld [vmem:[%s2977 + $0x30] sm:$0xff]
    %v2985 = vld [vmem:[%s2977 + $0x38] sm:$0xff]
    %2986 = vmatprep.subr.mxu0 0.0
    %2987 = vmatpush1.msra.mxu0 %v2888
    %2988 = vmatprep.subr.mxu0 0.0
    %2989 = vmatpush1.msra.mxu0 %v2889
    %2990 = vmatprep.subr.mxu0 0.0
    %2991 = vmatpush1.msra.mxu0 %v2890
    %2992 = vmatprep.subr.mxu0 0.0
    %2993 = vmatpush1.msra.mxu0 %v2891
    %2994 = vmatprep.subr.mxu0 0.0
    %2995 = vmatpush1.msra.mxu0 0.0
    %2996 = vmatprep.subr.mxu0 0.0
    %2997 = vmatpush1.msra.mxu0 0.0
    %2998 = vmatprep.subr.mxu0 0.0
    %2999 = vmatpush1.msra.mxu0 0.0
    %3000 = vmatprep.subr.mxu0 0.0
    %3001 = vmatpush1.msra.mxu0 0.0
    %3002 = vmatprep.subr.mxu0 0.0
    %3003 = vmatpush1.msra.mxu0 0.0
    %3004 = vmatprep.subr.mxu0 0.0
    %3005 = vmatpush1.msra.mxu0 0.0
    %3006 = vmatprep.subr.mxu0 0.0
    %3007 = vmatpush1.msra.mxu0 0.0
    %3008 = vmatprep.subr.mxu0 0.0
    %3009 = vmatpush1.msra.mxu0 0.0
    %3010 = vmatprep.subr.mxu0 0.0
    %3011 = vmatpush1.msra.mxu0 0.0
    %3012 = vmatprep.subr.mxu0 0.0
    %3013 = vmatpush1.msra.mxu0 0.0
    %3014 = vmatprep.subr.mxu0 0.0
    %3015 = vmatpush1.msra.mxu0 0.0
    %3016 = vmatprep.subr.mxu0 0.0
    %3017 = vmatpush1.msra.mxu0 0.0
    %3018 = vmatprep.subr.mxu0 0.0
    %3019 = vmatpush1.msra.mxu0 0.0
    %3020 = vmatprep.subr.mxu0 0.0
    %3021 = vmatpush1.msra.mxu0 0.0
    %3022 = vmatprep.subr.mxu0 0.0
    %3023 = vmatpush1.msra.mxu0 0.0
    %3024 = vmatprep.subr.mxu0 0.0
    %3025 = vmatpush1.msra.mxu0 0.0
    %3026 = vmatprep.subr.mxu0 0.0
    %3027 = vmatpush1.msra.mxu0 0.0
    %3028 = vmatprep.subr.mxu0 0.0
    %3029 = vmatpush1.msra.mxu0 0.0
    %3030 = vmatprep.subr.mxu0 0.0
    %3031 = vmatpush1.msra.mxu0 0.0
    %3032 = vmatprep.subr.mxu0 0.0
    %3033 = vmatpush1.msra.mxu0 0.0
    %3034 = vmatprep.subr.mxu0 0.0
    %3035 = vmatpush1.msra.mxu0 0.0
    %3036 = vmatprep.subr.mxu0 0.0
    %3037 = vmatpush1.msra.mxu0 0.0
    %3038 = vmatprep.subr.mxu0 0.0
    %3039 = vmatpush1.msra.mxu0 0.0
    %3040 = vmatprep.subr.mxu0 0.0
    %3041 = vmatpush1.msra.mxu0 0.0
    %3042 = vmatprep.subr.mxu0 0.0
    %3043 = vmatpush1.msra.mxu0 0.0
    %3044 = vmatprep.subr.mxu0 0.0
    %3045 = vmatpush1.msra.mxu0 0.0
    %3046 = vmatprep.subr.mxu0 0.0
    %3047 = vmatpush1.msra.mxu0 0.0
    %3048 = vmatprep.subr.mxu0 0.0
    %3049 = vmatpush1.msra.mxu0 0.0
    %3050 = vmatprep.mubr.f32.mxu0 0.0
    %3051 = vmatmul.mubr.f32.gmra.mrb[0].mxu0 %v744
    %v3052 = vpop.f32.mrb[0].mxu0
    %v3053 = vadd.f32 0.0, %v3052
    %v3054 = vpop.f32.mrb[0].mxu0
    %3055 = vmatprep.mubr.f32.mxu0 0.0
    %3056 = vmatmul.mubr.f32.gmra.mrb[0].mxu0 %v747
    %v3057 = vpop.f32.mrb[0].mxu0
    %v3058 = vadd.f32 0.0, %v3057
    %v3059 = vpop.f32.mrb[0].mxu0
    %3060 = vmatprep.mubr.f32.mxu0 0.0
    %3061 = vmatmul.mubr.f32.gmra.mrb[0].mxu0 %v750
    %v3062 = vpop.f32.mrb[0].mxu0
    %v3063 = vadd.f32 0.0, %v3062
    %v3064 = vpop.f32.mrb[0].mxu0
    %3065 = vmatprep.mubr.f32.mxu0 0.0
    %3066 = vmatmul.mubr.f32.gmra.mrb[0].mxu0 %v753
    %v3067 = vpop.f32.mrb[0].mxu0
    %v3068 = vadd.f32 0.0, %v3067
    %v3069 = vpop.f32.mrb[0].mxu0
    %3070 = vdwg.mxu0
    %s3071 = scalar_lea.vmem [#allocation3], 768
    %v3072 = vld [vmem:[%s3071] sm:$0xff]
    %v3073 = vld [vmem:[%s3071 + $0x8] sm:$0xff]
    %v3074 = vld [vmem:[%s3071 + $0x10] sm:$0xff]
    %v3075 = vld [vmem:[%s3071 + $0x18] sm:$0xff]
    %v3076 = vld [vmem:[%s3071 + $0x20] sm:$0xff]
    %v3077 = vld [vmem:[%s3071 + $0x28] sm:$0xff]
    %v3078 = vld [vmem:[%s3071 + $0x30] sm:$0xff]
    %v3079 = vld [vmem:[%s3071 + $0x38] sm:$0xff]
    %v3081 = vsel %vm198, %v3053, 0
    %v3084 = vsel %vm198, %v3058, 0
    %v3087 = vsel %vm198, %v3063, 0
    %v3090 = vsel %vm198, %v3068, 0
    %3092 = vmatprep.subr.mxu0 0.0
    %3093 = vmatpush1.msra.mxu0 %v3072
    %3094 = vmatprep.subr.mxu0 0.0
    %3095 = vmatpush1.msra.mxu0 %v3073
    %3096 = vmatprep.subr.mxu0 0.0
    %3097 = vmatpush1.msra.mxu0 %v3074
    %3098 = vmatprep.subr.mxu0 0.0
    %3099 = vmatpush1.msra.mxu0 %v3075
    %3100 = vmatprep.subr.mxu0 0.0
    %3101 = vmatpush1.msra.mxu0 %v3076
    %3102 = vmatprep.subr.mxu0 0.0
    %3103 = vmatpush1.msra.mxu0 %v3077
    %3104 = vmatprep.subr.mxu0 0.0
    %3105 = vmatpush1.msra.mxu0 %v3078
    %3106 = vmatprep.subr.mxu0 0.0
    %3107 = vmatpush1.msra.mxu0 %v3079
    %3108 = vmatprep.subr.mxu0 0.0
    %3109 = vmatpush1.msra.mxu0 0.0
    %3110 = vmatprep.subr.mxu0 0.0
    %3111 = vmatpush1.msra.mxu0 0.0
    %3112 = vmatprep.subr.mxu0 0.0
    %3113 = vmatpush1.msra.mxu0 0.0
    %3114 = vmatprep.subr.mxu0 0.0
    %3115 = vmatpush1.msra.mxu0 0.0
    %3116 = vmatprep.subr.mxu0 0.0
    %3117 = vmatpush1.msra.mxu0 0.0
    %3118 = vmatprep.subr.mxu0 0.0
    %3119 = vmatpush1.msra.mxu0 0.0
    %3120 = vmatprep.subr.mxu0 0.0
    %3121 = vmatpush1.msra.mxu0 0.0
    %3122 = vmatprep.subr.mxu0 0.0
    %3123 = vmatpush1.msra.mxu0 0.0
    %3124 = vmatprep.subr.mxu0 0.0
    %3125 = vmatpush1.msra.mxu0 0.0
    %3126 = vmatprep.subr.mxu0 0.0
    %3127 = vmatpush1.msra.mxu0 0.0
    %3128 = vmatprep.subr.mxu0 0.0
    %3129 = vmatpush1.msra.mxu0 0.0
    %3130 = vmatprep.subr.mxu0 0.0
    %3131 = vmatpush1.msra.mxu0 0.0
    %3132 = vmatprep.subr.mxu0 0.0
    %3133 = vmatpush1.msra.mxu0 0.0
    %3134 = vmatprep.subr.mxu0 0.0
    %3135 = vmatpush1.msra.mxu0 0.0
    %3136 = vmatprep.subr.mxu0 0.0
    %3137 = vmatpush1.msra.mxu0 0.0
    %3138 = vmatprep.subr.mxu0 0.0
    %3139 = vmatpush1.msra.mxu0 0.0
    %3140 = vmatprep.subr.mxu0 0.0
    %3141 = vmatpush1.msra.mxu0 0.0
    %3142 = vmatprep.subr.mxu0 0.0
    %3143 = vmatpush1.msra.mxu0 0.0
    %3144 = vmatprep.subr.mxu0 0.0
    %3145 = vmatpush1.msra.mxu0 0.0
    %3146 = vmatprep.subr.mxu0 0.0
    %3147 = vmatpush1.msra.mxu0 0.0
    %3148 = vmatprep.subr.mxu0 0.0
    %3149 = vmatpush1.msra.mxu0 0.0
    %3150 = vmatprep.subr.mxu0 0.0
    %3151 = vmatpush1.msra.mxu0 0.0
    %3152 = vmatprep.subr.mxu0 0.0
    %3153 = vmatpush1.msra.mxu0 0.0
    %3154 = vmatprep.subr.mxu0 0.0
    %3155 = vmatpush1.msra.mxu0 0.0
    %3156 = vmatprep.mubr.f32.mxu0 0.0
    %3157 = vmatmul.mubr.f32.gmra.mrb[0].mxu0 %v3081
    %v3158 = vpop.f32.mrb[0].mxu0
    %v3159 = vadd.f32 0.0, %v3158
    %v3160 = vpop.f32.mrb[0].mxu0
    %3161 = vmatprep.mubr.f32.mxu0 0.0
    %3162 = vmatmul.mubr.f32.gmra.mrb[0].mxu0 %v3084
    %v3163 = vpop.f32.mrb[0].mxu0
    %v3164 = vadd.f32 0.0, %v3163
    %v3165 = vpop.f32.mrb[0].mxu0
    %3166 = vmatprep.mubr.f32.mxu0 0.0
    %3167 = vmatmul.mubr.f32.gmra.mrb[0].mxu0 %v3087
    %v3168 = vpop.f32.mrb[0].mxu0
    %v3169 = vadd.f32 0.0, %v3168
    %v3170 = vpop.f32.mrb[0].mxu0
    %3171 = vmatprep.mubr.f32.mxu0 0.0
    %3172 = vmatmul.mubr.f32.gmra.mrb[0].mxu0 %v3090
    %v3173 = vpop.f32.mrb[0].mxu0
    %v3174 = vadd.f32 0.0, %v3173
    %v3175 = vpop.f32.mrb[0].mxu0
    %3176 = vdwg.mxu0
    %v3178 = vsel %vm198, %v2959, 0
    %v3181 = vsel %vm198, %v2964, 0
    %v3184 = vsel %vm198, %v2969, 0
    %v3187 = vsel %vm198, %v2974, 0
    %3189 = vmatprep.subr.mxu0 0.0
    %3190 = vmatpush1.msra.mxu0 %v2978
    %3191 = vmatprep.subr.mxu0 0.0
    %3192 = vmatpush1.msra.mxu0 %v2979
    %3193 = vmatprep.subr.mxu0 0.0
    %3194 = vmatpush1.msra.mxu0 %v2980
    %3195 = vmatprep.subr.mxu0 0.0
    %3196 = vmatpush1.msra.mxu0 %v2981
    %3197 = vmatprep.subr.mxu0 0.0
    %3198 = vmatpush1.msra.mxu0 %v2982
    %3199 = vmatprep.subr.mxu0 0.0
    %3200 = vmatpush1.msra.mxu0 %v2983
    %3201 = vmatprep.subr.mxu0 0.0
    %3202 = vmatpush1.msra.mxu0 %v2984
    %3203 = vmatprep.subr.mxu0 0.0
    %3204 = vmatpush1.msra.mxu0 %v2985
    %3205 = vmatprep.subr.mxu0 0.0
    %3206 = vmatpush1.msra.mxu0 0.0
    %3207 = vmatprep.subr.mxu0 0.0
    %3208 = vmatpush1.msra.mxu0 0.0
    %3209 = vmatprep.subr.mxu0 0.0
    %3210 = vmatpush1.msra.mxu0 0.0
    %3211 = vmatprep.subr.mxu0 0.0
    %3212 = vmatpush1.msra.mxu0 0.0
    %3213 = vmatprep.subr.mxu0 0.0
    %3214 = vmatpush1.msra.mxu0 0.0
    %3215 = vmatprep.subr.mxu0 0.0
    %3216 = vmatpush1.msra.mxu0 0.0
    %3217 = vmatprep.subr.mxu0 0.0
    %3218 = vmatpush1.msra.mxu0 0.0
    %3219 = vmatprep.subr.mxu0 0.0
    %3220 = vmatpush1.msra.mxu0 0.0
    %3221 = vmatprep.subr.mxu0 0.0
    %3222 = vmatpush1.msra.mxu0 0.0
    %3223 = vmatprep.subr.mxu0 0.0
    %3224 = vmatpush1.msra.mxu0 0.0
    %3225 = vmatprep.subr.mxu0 0.0
    %3226 = vmatpush1.msra.mxu0 0.0
    %3227 = vmatprep.subr.mxu0 0.0
    %3228 = vmatpush1.msra.mxu0 0.0
    %3229 = vmatprep.subr.mxu0 0.0
    %3230 = vmatpush1.msra.mxu0 0.0
    %3231 = vmatprep.subr.mxu0 0.0
    %3232 = vmatpush1.msra.mxu0 0.0
    %3233 = vmatprep.subr.mxu0 0.0
    %3234 = vmatpush1.msra.mxu0 0.0
    %3235 = vmatprep.subr.mxu0 0.0
    %3236 = vmatpush1.msra.mxu0 0.0
    %3237 = vmatprep.subr.mxu0 0.0
    %3238 = vmatpush1.msra.mxu0 0.0
    %3239 = vmatprep.subr.mxu0 0.0
    %3240 = vmatpush1.msra.mxu0 0.0
    %3241 = vmatprep.subr.mxu0 0.0
    %3242 = vmatpush1.msra.mxu0 0.0
    %3243 = vmatprep.subr.mxu0 0.0
    %3244 = vmatpush1.msra.mxu0 0.0
    %3245 = vmatprep.subr.mxu0 0.0
    %3246 = vmatpush1.msra.mxu0 0.0
    %3247 = vmatprep.subr.mxu0 0.0
    %3248 = vmatpush1.msra.mxu0 0.0
    %3249 = vmatprep.subr.mxu0 0.0
    %3250 = vmatpush1.msra.mxu0 0.0
    %3251 = vmatprep.subr.mxu0 0.0
    %3252 = vmatpush1.msra.mxu0 0.0
    %3253 = vmatprep.mubr.f32.mxu0 0.0
    %3254 = vmatmul.mubr.f32.gmra.mrb[0].mxu0 %v3178
    %v3255 = vpop.f32.mrb[0].mxu0
    %v3256 = vadd.f32 %v3159, %v3255
    %v3257 = vpop.f32.mrb[0].mxu0
    %3258 = vmatprep.mubr.f32.mxu0 0.0
    %3259 = vmatmul.mubr.f32.gmra.mrb[0].mxu0 %v3181
    %v3260 = vpop.f32.mrb[0].mxu0
    %v3261 = vadd.f32 %v3164, %v3260
    %v3262 = vpop.f32.mrb[0].mxu0
    %3263 = vmatprep.mubr.f32.mxu0 0.0
    %3264 = vmatmul.mubr.f32.gmra.mrb[0].mxu0 %v3184
    %v3265 = vpop.f32.mrb[0].mxu0
    %v3266 = vadd.f32 %v3169, %v3265
    %v3267 = vpop.f32.mrb[0].mxu0
    %3268 = vmatprep.mubr.f32.mxu0 0.0
    %3269 = vmatmul.mubr.f32.gmra.mrb[0].mxu0 %v3187
    %v3270 = vpop.f32.mrb[0].mxu0
    %v3271 = vadd.f32 %v3174, %v3270
    %v3272 = vpop.f32.mrb[0].mxu0
    %3273 = vdwg.mxu0
    %s3274 = scalar_lea.vmem [#allocation3], 832
    %v3275 = vld [vmem:[%s3274] sm:$0xff]
    %v3276 = vld [vmem:[%s3274 + $0x8] sm:$0xff]
    %v3277 = vld [vmem:[%s3274 + $0x10] sm:$0xff]
    %v3278 = vld [vmem:[%s3274 + $0x18] sm:$0xff]
    %v3279 = vld [vmem:[%s3274 + $0x20] sm:$0xff]
    %v3280 = vld [vmem:[%s3274 + $0x28] sm:$0xff]
    %v3281 = vld [vmem:[%s3274 + $0x30] sm:$0xff]
    %v3282 = vld [vmem:[%s3274 + $0x38] sm:$0xff]
    %v3284 = vsel %vm198, %v2888, 0
    %v3287 = vsel %vm198, %v2889, 0
    %v3290 = vsel %vm198, %v2890, 0
    %v3293 = vsel %vm198, %v2891, 0
    %3295 = vmatprep.subr.mxu0 0.0
    %3296 = vmatpush1.msra.mxu0 %v3275
    %3297 = vmatprep.subr.mxu0 0.0
    %3298 = vmatpush1.msra.mxu0 %v3276
    %3299 = vmatprep.subr.mxu0 0.0
    %3300 = vmatpush1.msra.mxu0 %v3277
    %3301 = vmatprep.subr.mxu0 0.0
    %3302 = vmatpush1.msra.mxu0 %v3278
    %3303 = vmatprep.subr.mxu0 0.0
    %3304 = vmatpush1.msra.mxu0 %v3279
    %3305 = vmatprep.subr.mxu0 0.0
    %3306 = vmatpush1.msra.mxu0 %v3280
    %3307 = vmatprep.subr.mxu0 0.0
    %3308 = vmatpush1.msra.mxu0 %v3281
    %3309 = vmatprep.subr.mxu0 0.0
    %3310 = vmatpush1.msra.mxu0 %v3282
    %3311 = vmatprep.subr.mxu0 0.0
    %3312 = vmatpush1.msra.mxu0 0.0
    %3313 = vmatprep.subr.mxu0 0.0
    %3314 = vmatpush1.msra.mxu0 0.0
    %3315 = vmatprep.subr.mxu0 0.0
    %3316 = vmatpush1.msra.mxu0 0.0
    %3317 = vmatprep.subr.mxu0 0.0
    %3318 = vmatpush1.msra.mxu0 0.0
    %3319 = vmatprep.subr.mxu0 0.0
    %3320 = vmatpush1.msra.mxu0 0.0
    %3321 = vmatprep.subr.mxu0 0.0
    %3322 = vmatpush1.msra.mxu0 0.0
    %3323 = vmatprep.subr.mxu0 0.0
    %3324 = vmatpush1.msra.mxu0 0.0
    %3325 = vmatprep.subr.mxu0 0.0
    %3326 = vmatpush1.msra.mxu0 0.0
    %3327 = vmatprep.subr.mxu0 0.0
    %3328 = vmatpush1.msra.mxu0 0.0
    %3329 = vmatprep.subr.mxu0 0.0
    %3330 = vmatpush1.msra.mxu0 0.0
    %3331 = vmatprep.subr.mxu0 0.0
    %3332 = vmatpush1.msra.mxu0 0.0
    %3333 = vmatprep.subr.mxu0 0.0
    %3334 = vmatpush1.msra.mxu0 0.0
    %3335 = vmatprep.subr.mxu0 0.0
    %3336 = vmatpush1.msra.mxu0 0.0
    %3337 = vmatprep.subr.mxu0 0.0
    %3338 = vmatpush1.msra.mxu0 0.0
    %3339 = vmatprep.subr.mxu0 0.0
    %3340 = vmatpush1.msra.mxu0 0.0
    %3341 = vmatprep.subr.mxu0 0.0
    %3342 = vmatpush1.msra.mxu0 0.0
    %3343 = vmatprep.subr.mxu0 0.0
    %3344 = vmatpush1.msra.mxu0 0.0
    %3345 = vmatprep.subr.mxu0 0.0
    %3346 = vmatpush1.msra.mxu0 0.0
    %3347 = vmatprep.subr.mxu0 0.0
    %3348 = vmatpush1.msra.mxu0 0.0
    %3349 = vmatprep.subr.mxu0 0.0
    %3350 = vmatpush1.msra.mxu0 0.0
    %3351 = vmatprep.subr.mxu0 0.0
    %3352 = vmatpush1.msra.mxu0 0.0
    %3353 = vmatprep.subr.mxu0 0.0
    %3354 = vmatpush1.msra.mxu0 0.0
    %3355 = vmatprep.subr.mxu0 0.0
    %3356 = vmatpush1.msra.mxu0 0.0
    %3357 = vmatprep.subr.mxu0 0.0
    %3358 = vmatpush1.msra.mxu0 0.0
    %3359 = vmatprep.mubr.f32.mxu0 0.0
    %3360 = vmatmul.mubr.f32.gmra.mrb[0].mxu0 %v3284
    %v3361 = vpop.f32.mrb[0].mxu0
    %v3362 = vadd.f32 0.0, %v3361
    %v3363 = vpop.f32.mrb[0].mxu0
    %3364 = vmatprep.mubr.f32.mxu0 0.0
    %3365 = vmatmul.mubr.f32.gmra.mrb[0].mxu0 %v3287
    %v3366 = vpop.f32.mrb[0].mxu0
    %v3367 = vadd.f32 0.0, %v3366
    %v3368 = vpop.f32.mrb[0].mxu0
    %3369 = vmatprep.mubr.f32.mxu0 0.0
    %3370 = vmatmul.mubr.f32.gmra.mrb[0].mxu0 %v3290
    %v3371 = vpop.f32.mrb[0].mxu0
    %v3372 = vadd.f32 0.0, %v3371
    %v3373 = vpop.f32.mrb[0].mxu0
    %3374 = vmatprep.mubr.f32.mxu0 0.0
    %3375 = vmatmul.mubr.f32.gmra.mrb[0].mxu0 %v3293
    %v3376 = vpop.f32.mrb[0].mxu0
    %v3377 = vadd.f32 0.0, %v3376
    %v3378 = vpop.f32.mrb[0].mxu0
    %3379 = vdwg.mxu0
    %v3380 = vadd.f32 %v3256, %v3362
    %v3381 = vadd.f32 %v3261, %v3367
    %v3382 = vadd.f32 %v3266, %v3372
    %v3383 = vadd.f32 %v3271, %v3377
    %3384 = vmatprep.subr.mxu0 0.0
    %3385 = vmatpush1.msra.mxu0 %v2888
    %3386 = vmatprep.subr.mxu0 0.0
    %3387 = vmatpush1.msra.mxu0 %v2889
    %3388 = vmatprep.subr.mxu0 0.0
    %3389 = vmatpush1.msra.mxu0 %v2890
    %3390 = vmatprep.subr.mxu0 0.0
    %3391 = vmatpush1.msra.mxu0 %v2891
    %3392 = vmatprep.subr.mxu0 0.0
    %3393 = vmatpush1.msra.mxu0 0.0
    %3394 = vmatprep.subr.mxu0 0.0
    %3395 = vmatpush1.msra.mxu0 0.0
    %3396 = vmatprep.subr.mxu0 0.0
    %3397 = vmatpush1.msra.mxu0 0.0
    %3398 = vmatprep.subr.mxu0 0.0
    %3399 = vmatpush1.msra.mxu0 0.0
    %3400 = vmatprep.subr.mxu0 0.0
    %3401 = vmatpush1.msra.mxu0 0.0
    %3402 = vmatprep.subr.mxu0 0.0
    %3403 = vmatpush1.msra.mxu0 0.0
    %3404 = vmatprep.subr.mxu0 0.0
    %3405 = vmatpush1.msra.mxu0 0.0
    %3406 = vmatprep.subr.mxu0 0.0
    %3407 = vmatpush1.msra.mxu0 0.0
    %3408 = vmatprep.subr.mxu0 0.0
    %3409 = vmatpush1.msra.mxu0 0.0
    %3410 = vmatprep.subr.mxu0 0.0
    %3411 = vmatpush1.msra.mxu0 0.0
    %3412 = vmatprep.subr.mxu0 0.0
    %3413 = vmatpush1.msra.mxu0 0.0
    %3414 = vmatprep.subr.mxu0 0.0
    %3415 = vmatpush1.msra.mxu0 0.0
    %3416 = vmatprep.subr.mxu0 0.0
    %3417 = vmatpush1.msra.mxu0 0.0
    %3418 = vmatprep.subr.mxu0 0.0
    %3419 = vmatpush1.msra.mxu0 0.0
    %3420 = vmatprep.subr.mxu0 0.0
    %3421 = vmatpush1.msra.mxu0 0.0
    %3422 = vmatprep.subr.mxu0 0.0
    %3423 = vmatpush1.msra.mxu0 0.0
    %3424 = vmatprep.subr.mxu0 0.0
    %3425 = vmatpush1.msra.mxu0 0.0
    %3426 = vmatprep.subr.mxu0 0.0
    %3427 = vmatpush1.msra.mxu0 0.0
    %3428 = vmatprep.subr.mxu0 0.0
    %3429 = vmatpush1.msra.mxu0 0.0
    %3430 = vmatprep.subr.mxu0 0.0
    %3431 = vmatpush1.msra.mxu0 0.0
    %3432 = vmatprep.subr.mxu0 0.0
    %3433 = vmatpush1.msra.mxu0 0.0
    %3434 = vmatprep.subr.mxu0 0.0
    %3435 = vmatpush1.msra.mxu0 0.0
    %3436 = vmatprep.subr.mxu0 0.0
    %3437 = vmatpush1.msra.mxu0 0.0
    %3438 = vmatprep.subr.mxu0 0.0
    %3439 = vmatpush1.msra.mxu0 0.0
    %3440 = vmatprep.subr.mxu0 0.0
    %3441 = vmatpush1.msra.mxu0 0.0
    %3442 = vmatprep.subr.mxu0 0.0
    %3443 = vmatpush1.msra.mxu0 0.0
    %3444 = vmatprep.subr.mxu0 0.0
    %3445 = vmatpush1.msra.mxu0 0.0
    %3446 = vmatprep.subr.mxu0 0.0
    %3447 = vmatpush1.msra.mxu0 0.0
    %3448 = vmatprep.mubr.f32.mxu0 0.0
    %3449 = vmatmul.mubr.f32.gmra.mrb[0].mxu0 %v1147
    %v3450 = vpop.f32.mrb[0].mxu0
    %v3451 = vadd.f32 0.0, %v3450
    %v3452 = vpop.f32.mrb[0].mxu0
    %3453 = vmatprep.mubr.f32.mxu0 0.0
    %3454 = vmatmul.mubr.f32.gmra.mrb[0].mxu0 %v1150
    %v3455 = vpop.f32.mrb[0].mxu0
    %v3456 = vadd.f32 0.0, %v3455
    %v3457 = vpop.f32.mrb[0].mxu0
    %3458 = vmatprep.mubr.f32.mxu0 0.0
    %3459 = vmatmul.mubr.f32.gmra.mrb[0].mxu0 %v1153
    %v3460 = vpop.f32.mrb[0].mxu0
    %v3461 = vadd.f32 0.0, %v3460
    %v3462 = vpop.f32.mrb[0].mxu0
    %3463 = vmatprep.mubr.f32.mxu0 0.0
    %3464 = vmatmul.mubr.f32.gmra.mrb[0].mxu0 %v1156
    %v3465 = vpop.f32.mrb[0].mxu0
    %v3466 = vadd.f32 0.0, %v3465
    %v3467 = vpop.f32.mrb[0].mxu0
    %3468 = vdwg.mxu0
    %s3469 = scalar_lea.vmem [#allocation3], 896
    %v3470 = vld [vmem:[%s3469] sm:$0xff]
    %v3471 = vld [vmem:[%s3469 + $0x8] sm:$0xff]
    %v3472 = vld [vmem:[%s3469 + $0x10] sm:$0xff]
    %v3473 = vld [vmem:[%s3469 + $0x18] sm:$0xff]
    %v3474 = vld [vmem:[%s3469 + $0x20] sm:$0xff]
    %v3475 = vld [vmem:[%s3469 + $0x28] sm:$0xff]
    %v3476 = vld [vmem:[%s3469 + $0x30] sm:$0xff]
    %v3477 = vld [vmem:[%s3469 + $0x38] sm:$0xff]
    %v3479 = vsel %vm198, %v3451, 0
    %v3482 = vsel %vm198, %v3456, 0
    %v3485 = vsel %vm198, %v3461, 0
    %v3488 = vsel %vm198, %v3466, 0
    %3490 = vmatprep.subr.mxu0 0.0
    %3491 = vmatpush1.msra.mxu0 %v3470
    %3492 = vmatprep.subr.mxu0 0.0
    %3493 = vmatpush1.msra.mxu0 %v3471
    %3494 = vmatprep.subr.mxu0 0.0
    %3495 = vmatpush1.msra.mxu0 %v3472
    %3496 = vmatprep.subr.mxu0 0.0
    %3497 = vmatpush1.msra.mxu0 %v3473
    %3498 = vmatprep.subr.mxu0 0.0
    %3499 = vmatpush1.msra.mxu0 %v3474
    %3500 = vmatprep.subr.mxu0 0.0
    %3501 = vmatpush1.msra.mxu0 %v3475
    %3502 = vmatprep.subr.mxu0 0.0
    %3503 = vmatpush1.msra.mxu0 %v3476
    %3504 = vmatprep.subr.mxu0 0.0
    %3505 = vmatpush1.msra.mxu0 %v3477
    %3506 = vmatprep.subr.mxu0 0.0
    %3507 = vmatpush1.msra.mxu0 0.0
    %3508 = vmatprep.subr.mxu0 0.0
    %3509 = vmatpush1.msra.mxu0 0.0
    %3510 = vmatprep.subr.mxu0 0.0
    %3511 = vmatpush1.msra.mxu0 0.0
    %3512 = vmatprep.subr.mxu0 0.0
    %3513 = vmatpush1.msra.mxu0 0.0
    %3514 = vmatprep.subr.mxu0 0.0
    %3515 = vmatpush1.msra.mxu0 0.0
    %3516 = vmatprep.subr.mxu0 0.0
    %3517 = vmatpush1.msra.mxu0 0.0
    %3518 = vmatprep.subr.mxu0 0.0
    %3519 = vmatpush1.msra.mxu0 0.0
    %3520 = vmatprep.subr.mxu0 0.0
    %3521 = vmatpush1.msra.mxu0 0.0
    %3522 = vmatprep.subr.mxu0 0.0
    %3523 = vmatpush1.msra.mxu0 0.0
    %3524 = vmatprep.subr.mxu0 0.0
    %3525 = vmatpush1.msra.mxu0 0.0
    %3526 = vmatprep.subr.mxu0 0.0
    %3527 = vmatpush1.msra.mxu0 0.0
    %3528 = vmatprep.subr.mxu0 0.0
    %3529 = vmatpush1.msra.mxu0 0.0
    %3530 = vmatprep.subr.mxu0 0.0
    %3531 = vmatpush1.msra.mxu0 0.0
    %3532 = vmatprep.subr.mxu0 0.0
    %3533 = vmatpush1.msra.mxu0 0.0
    %3534 = vmatprep.subr.mxu0 0.0
    %3535 = vmatpush1.msra.mxu0 0.0
    %3536 = vmatprep.subr.mxu0 0.0
    %3537 = vmatpush1.msra.mxu0 0.0
    %3538 = vmatprep.subr.mxu0 0.0
    %3539 = vmatpush1.msra.mxu0 0.0
    %3540 = vmatprep.subr.mxu0 0.0
    %3541 = vmatpush1.msra.mxu0 0.0
    %3542 = vmatprep.subr.mxu0 0.0
    %3543 = vmatpush1.msra.mxu0 0.0
    %3544 = vmatprep.subr.mxu0 0.0
    %3545 = vmatpush1.msra.mxu0 0.0
    %3546 = vmatprep.subr.mxu0 0.0
    %3547 = vmatpush1.msra.mxu0 0.0
    %3548 = vmatprep.subr.mxu0 0.0
    %3549 = vmatpush1.msra.mxu0 0.0
    %3550 = vmatprep.subr.mxu0 0.0
    %3551 = vmatpush1.msra.mxu0 0.0
    %3552 = vmatprep.subr.mxu0 0.0
    %3553 = vmatpush1.msra.mxu0 0.0
    %3554 = vmatprep.mubr.f32.mxu0 0.0
    %3555 = vmatmul.mubr.f32.gmra.mrb[0].mxu0 %v3479
    %v3556 = vpop.f32.mrb[0].mxu0
    %v3557 = vadd.f32 0.0, %v3556
    %v3558 = vpop.f32.mrb[0].mxu0
    %3559 = vmatprep.mubr.f32.mxu0 0.0
    %3560 = vmatmul.mubr.f32.gmra.mrb[0].mxu0 %v3482
    %v3561 = vpop.f32.mrb[0].mxu0
    %v3562 = vadd.f32 0.0, %v3561
    %v3563 = vpop.f32.mrb[0].mxu0
    %3564 = vmatprep.mubr.f32.mxu0 0.0
    %3565 = vmatmul.mubr.f32.gmra.mrb[0].mxu0 %v3485
    %v3566 = vpop.f32.mrb[0].mxu0
    %v3567 = vadd.f32 0.0, %v3566
    %v3568 = vpop.f32.mrb[0].mxu0
    %3569 = vmatprep.mubr.f32.mxu0 0.0
    %3570 = vmatmul.mubr.f32.gmra.mrb[0].mxu0 %v3488
    %v3571 = vpop.f32.mrb[0].mxu0
    %v3572 = vadd.f32 0.0, %v3571
    %v3573 = vpop.f32.mrb[0].mxu0
    %3574 = vdwg.mxu0
    %v3575 = vadd.f32 %v3380, %v3557
    %v3576 = vadd.f32 %v3381, %v3562
    %v3577 = vadd.f32 %v3382, %v3567
    %v3578 = vadd.f32 %v3383, %v3572
    %3579 = vmatprep.subr.mxu0 0.0
    %3580 = vmatpush1.msra.mxu0 %v2888
    %3581 = vmatprep.subr.mxu0 0.0
    %3582 = vmatpush1.msra.mxu0 %v2889
    %3583 = vmatprep.subr.mxu0 0.0
    %3584 = vmatpush1.msra.mxu0 %v2890
    %3585 = vmatprep.subr.mxu0 0.0
    %3586 = vmatpush1.msra.mxu0 %v2891
    %3587 = vmatprep.subr.mxu0 0.0
    %3588 = vmatpush1.msra.mxu0 0.0
    %3589 = vmatprep.subr.mxu0 0.0
    %3590 = vmatpush1.msra.mxu0 0.0
    %3591 = vmatprep.subr.mxu0 0.0
    %3592 = vmatpush1.msra.mxu0 0.0
    %3593 = vmatprep.subr.mxu0 0.0
    %3594 = vmatpush1.msra.mxu0 0.0
    %3595 = vmatprep.subr.mxu0 0.0
    %3596 = vmatpush1.msra.mxu0 0.0
    %3597 = vmatprep.subr.mxu0 0.0
    %3598 = vmatpush1.msra.mxu0 0.0
    %3599 = vmatprep.subr.mxu0 0.0
    %3600 = vmatpush1.msra.mxu0 0.0
    %3601 = vmatprep.subr.mxu0 0.0
    %3602 = vmatpush1.msra.mxu0 0.0
    %3603 = vmatprep.subr.mxu0 0.0
    %3604 = vmatpush1.msra.mxu0 0.0
    %3605 = vmatprep.subr.mxu0 0.0
    %3606 = vmatpush1.msra.mxu0 0.0
    %3607 = vmatprep.subr.mxu0 0.0
    %3608 = vmatpush1.msra.mxu0 0.0
    %3609 = vmatprep.subr.mxu0 0.0
    %3610 = vmatpush1.msra.mxu0 0.0
    %3611 = vmatprep.subr.mxu0 0.0
    %3612 = vmatpush1.msra.mxu0 0.0
    %3613 = vmatprep.subr.mxu0 0.0
    %3614 = vmatpush1.msra.mxu0 0.0
    %3615 = vmatprep.subr.mxu0 0.0
    %3616 = vmatpush1.msra.mxu0 0.0
    %3617 = vmatprep.subr.mxu0 0.0
    %3618 = vmatpush1.msra.mxu0 0.0
    %3619 = vmatprep.subr.mxu0 0.0
    %3620 = vmatpush1.msra.mxu0 0.0
    %3621 = vmatprep.subr.mxu0 0.0
    %3622 = vmatpush1.msra.mxu0 0.0
    %3623 = vmatprep.subr.mxu0 0.0
    %3624 = vmatpush1.msra.mxu0 0.0
    %3625 = vmatprep.subr.mxu0 0.0
    %3626 = vmatpush1.msra.mxu0 0.0
    %3627 = vmatprep.subr.mxu0 0.0
    %3628 = vmatpush1.msra.mxu0 0.0
    %3629 = vmatprep.subr.mxu0 0.0
    %3630 = vmatpush1.msra.mxu0 0.0
    %3631 = vmatprep.subr.mxu0 0.0
    %3632 = vmatpush1.msra.mxu0 0.0
    %3633 = vmatprep.subr.mxu0 0.0
    %3634 = vmatpush1.msra.mxu0 0.0
    %3635 = vmatprep.subr.mxu0 0.0
    %3636 = vmatpush1.msra.mxu0 0.0
    %3637 = vmatprep.subr.mxu0 0.0
    %3638 = vmatpush1.msra.mxu0 0.0
    %3639 = vmatprep.subr.mxu0 0.0
    %3640 = vmatpush1.msra.mxu0 0.0
    %3641 = vmatprep.subr.mxu0 0.0
    %3642 = vmatpush1.msra.mxu0 0.0
    %3643 = vmatprep.mubr.f32.mxu0 0.0
    %3644 = vmatmul.mubr.f32.gmra.mrb[0].mxu0 %v1359
    %v3645 = vpop.f32.mrb[0].mxu0
    %v3646 = vadd.f32 0.0, %v3645
    %v3647 = vpop.f32.mrb[0].mxu0
    %3648 = vmatprep.mubr.f32.mxu0 0.0
    %3649 = vmatmul.mubr.f32.gmra.mrb[0].mxu0 %v1362
    %v3650 = vpop.f32.mrb[0].mxu0
    %v3651 = vadd.f32 0.0, %v3650
    %v3652 = vpop.f32.mrb[0].mxu0
    %3653 = vmatprep.mubr.f32.mxu0 0.0
    %3654 = vmatmul.mubr.f32.gmra.mrb[0].mxu0 %v1365
    %v3655 = vpop.f32.mrb[0].mxu0
    %v3656 = vadd.f32 0.0, %v3655
    %v3657 = vpop.f32.mrb[0].mxu0
    %3658 = vmatprep.mubr.f32.mxu0 0.0
    %3659 = vmatmul.mubr.f32.gmra.mrb[0].mxu0 %v1368
    %v3660 = vpop.f32.mrb[0].mxu0
    %v3661 = vadd.f32 0.0, %v3660
    %v3662 = vpop.f32.mrb[0].mxu0
    %3663 = vdwg.mxu0
    %s3664 = scalar_lea.vmem [#allocation3], 960
    %v3665 = vld [vmem:[%s3664] sm:$0xff]
    %v3666 = vld [vmem:[%s3664 + $0x8] sm:$0xff]
    %v3667 = vld [vmem:[%s3664 + $0x10] sm:$0xff]
    %v3668 = vld [vmem:[%s3664 + $0x18] sm:$0xff]
    %v3669 = vld [vmem:[%s3664 + $0x20] sm:$0xff]
    %v3670 = vld [vmem:[%s3664 + $0x28] sm:$0xff]
    %v3671 = vld [vmem:[%s3664 + $0x30] sm:$0xff]
    %v3672 = vld [vmem:[%s3664 + $0x38] sm:$0xff]
    %v3674 = vsel %vm198, %v3646, 0
    %v3677 = vsel %vm198, %v3651, 0
    %v3680 = vsel %vm198, %v3656, 0
    %v3683 = vsel %vm198, %v3661, 0
    %3685 = vmatprep.subr.mxu0 0.0
    %3686 = vmatpush1.msra.mxu0 %v3665
    %3687 = vmatprep.subr.mxu0 0.0
    %3688 = vmatpush1.msra.mxu0 %v3666
    %3689 = vmatprep.subr.mxu0 0.0
    %3690 = vmatpush1.msra.mxu0 %v3667
    %3691 = vmatprep.subr.mxu0 0.0
    %3692 = vmatpush1.msra.mxu0 %v3668
    %3693 = vmatprep.subr.mxu0 0.0
    %3694 = vmatpush1.msra.mxu0 %v3669
    %3695 = vmatprep.subr.mxu0 0.0
    %3696 = vmatpush1.msra.mxu0 %v3670
    %3697 = vmatprep.subr.mxu0 0.0
    %3698 = vmatpush1.msra.mxu0 %v3671
    %3699 = vmatprep.subr.mxu0 0.0
    %3700 = vmatpush1.msra.mxu0 %v3672
    %3701 = vmatprep.subr.mxu0 0.0
    %3702 = vmatpush1.msra.mxu0 0.0
    %3703 = vmatprep.subr.mxu0 0.0
    %3704 = vmatpush1.msra.mxu0 0.0
    %3705 = vmatprep.subr.mxu0 0.0
    %3706 = vmatpush1.msra.mxu0 0.0
    %3707 = vmatprep.subr.mxu0 0.0
    %3708 = vmatpush1.msra.mxu0 0.0
    %3709 = vmatprep.subr.mxu0 0.0
    %3710 = vmatpush1.msra.mxu0 0.0
    %3711 = vmatprep.subr.mxu0 0.0
    %3712 = vmatpush1.msra.mxu0 0.0
    %3713 = vmatprep.subr.mxu0 0.0
    %3714 = vmatpush1.msra.mxu0 0.0
    %3715 = vmatprep.subr.mxu0 0.0
    %3716 = vmatpush1.msra.mxu0 0.0
    %3717 = vmatprep.subr.mxu0 0.0
    %3718 = vmatpush1.msra.mxu0 0.0
    %3719 = vmatprep.subr.mxu0 0.0
    %3720 = vmatpush1.msra.mxu0 0.0
    %3721 = vmatprep.subr.mxu0 0.0
    %3722 = vmatpush1.msra.mxu0 0.0
    %3723 = vmatprep.subr.mxu0 0.0
    %3724 = vmatpush1.msra.mxu0 0.0
    %3725 = vmatprep.subr.mxu0 0.0
    %3726 = vmatpush1.msra.mxu0 0.0
    %3727 = vmatprep.subr.mxu0 0.0
    %3728 = vmatpush1.msra.mxu0 0.0
    %3729 = vmatprep.subr.mxu0 0.0
    %3730 = vmatpush1.msra.mxu0 0.0
    %3731 = vmatprep.subr.mxu0 0.0
    %3732 = vmatpush1.msra.mxu0 0.0
    %3733 = vmatprep.subr.mxu0 0.0
    %3734 = vmatpush1.msra.mxu0 0.0
    %3735 = vmatprep.subr.mxu0 0.0
    %3736 = vmatpush1.msra.mxu0 0.0
    %3737 = vmatprep.subr.mxu0 0.0
    %3738 = vmatpush1.msra.mxu0 0.0
    %3739 = vmatprep.subr.mxu0 0.0
    %3740 = vmatpush1.msra.mxu0 0.0
    %3741 = vmatprep.subr.mxu0 0.0
    %3742 = vmatpush1.msra.mxu0 0.0
    %3743 = vmatprep.subr.mxu0 0.0
    %3744 = vmatpush1.msra.mxu0 0.0
    %3745 = vmatprep.subr.mxu0 0.0
    %3746 = vmatpush1.msra.mxu0 0.0
    %3747 = vmatprep.subr.mxu0 0.0
    %3748 = vmatpush1.msra.mxu0 0.0
    %3749 = vmatprep.mubr.f32.mxu0 0.0
    %3750 = vmatmul.mubr.f32.gmra.mrb[0].mxu0 %v3674
    %v3751 = vpop.f32.mrb[0].mxu0
    %v3752 = vadd.f32 0.0, %v3751
    %v3753 = vpop.f32.mrb[0].mxu0
    %3754 = vmatprep.mubr.f32.mxu0 0.0
    %3755 = vmatmul.mubr.f32.gmra.mrb[0].mxu0 %v3677
    %v3756 = vpop.f32.mrb[0].mxu0
    %v3757 = vadd.f32 0.0, %v3756
    %v3758 = vpop.f32.mrb[0].mxu0
    %3759 = vmatprep.mubr.f32.mxu0 0.0
    %3760 = vmatmul.mubr.f32.gmra.mrb[0].mxu0 %v3680
    %v3761 = vpop.f32.mrb[0].mxu0
    %v3762 = vadd.f32 0.0, %v3761
    %v3763 = vpop.f32.mrb[0].mxu0
    %3764 = vmatprep.mubr.f32.mxu0 0.0
    %3765 = vmatmul.mubr.f32.gmra.mrb[0].mxu0 %v3683
    %v3766 = vpop.f32.mrb[0].mxu0
    %v3767 = vadd.f32 0.0, %v3766
    %v3768 = vpop.f32.mrb[0].mxu0
    %3769 = vdwg.mxu0
    %v3770 = vadd.f32 %v3575, %v3752
    %v3771 = vadd.f32 %v3576, %v3757
    %v3772 = vadd.f32 %v3577, %v3762
    %v3773 = vadd.f32 %v3578, %v3767
    %v3774 = vld [vmem:[%s3 + $0x4] sm:$0x1]
    %v3775 = vlaneseq
    %v3776 = vshrl.u32 %v3775, 7
    %v3777 = vsub.s32 0, %v3776
    %v3778 = vrot.slane %v3774, %v3777
    %v3779 = vmul.f32 %v3770, %v3778
    %v3780 = vmul.f32 %v3771, %v3778
    %v3781 = vmul.f32 %v3772, %v3778
    %v3782 = vmul.f32 %v3773, %v3778
    %v3783 = vld [vmem:[%s4 + $0x4] sm:$0x1]
    %v3784 = vlaneseq
    %v3785 = vshrl.u32 %v3784, 7
    %v3786 = vsub.s32 0, %v3785
    %v3787 = vrot.slane %v3783, %v3786
    %v3788 = vadd.f32 %v3779, %v3787
    %v3789 = vadd.f32 %v3780, %v3787
    %v3790 = vadd.f32 %v3781, %v3787
    %v3791 = vadd.f32 %v3782, %v3787
    %v3792 = vmax.f32 %v3788, 0.0
    %v3793 = vmax.f32 %v3789, 0.0
    %v3794 = vmax.f32 %v3790, 0.0
    %v3795 = vmax.f32 %v3791, 0.0
    %v3796 = vadd.f32 %v2580, %v3792
    %v3797 = vadd.f32 %v2581, %v3793
    %v3798 = vadd.f32 %v2582, %v3794
    %v3799 = vadd.f32 %v2583, %v3795
    %v3800 = vmax.f32 %v3796, 0.0
    %v3801 = vmax.f32 %v3797, 0.0
    %v3802 = vmax.f32 %v3798, 0.0
    %v3803 = vmax.f32 %v3799, 0.0
    %v3804 = vld [vmem:[%s15] sm:$0xff]
    %v3805 = vld [vmem:[%s15 + $0x8] sm:$0xff]
    %v3806 = vld [vmem:[%s15 + $0x10] sm:$0xff]
    %v3807 = vld [vmem:[%s15 + $0x18] sm:$0xff]
    %v3808 = vld [vmem:[%s15 + $0x20] sm:$0xff]
    %v3809 = vld [vmem:[%s15 + $0x28] sm:$0xff]
    %v3810 = vld [vmem:[%s15 + $0x30] sm:$0xff]
    %v3811 = vld [vmem:[%s15 + $0x38] sm:$0xff]
    %v3812 = vld [vmem:[#allocation2] sm:$0x1]
    %v3814 = vlaneseq
    %v3815 = vshrl.u32 %v3814, 7
    %v3816 = vsub.s32 0, %v3815
    %v3817 = vrot.slane %v3812, %v3816
    %3818 = vset.pattern.permute.xlu0 0
    %3819 = vperm.xlu0 %3818, %v3817
    %v3820 = vpop.permute.xlu0 %3819
    %v3823 = vsel %vm198, %v3800, 0
    %v3826 = vsel %vm198, %v3801, 0
    %v3829 = vsel %vm198, %v3802, 0
    %v3832 = vsel %vm198, %v3803, 0
    %3834 = vmatprep.subr.mxu0 0.0
    %3835 = vmatpush1.msra.mxu0 %v3804
    %3836 = vmatprep.subr.mxu0 0.0
    %3837 = vmatpush1.msra.mxu0 %v3805
    %3838 = vmatprep.subr.mxu0 0.0
    %3839 = vmatpush1.msra.mxu0 %v3806
    %3840 = vmatprep.subr.mxu0 0.0
    %3841 = vmatpush1.msra.mxu0 %v3807
    %3842 = vmatprep.subr.mxu0 0.0
    %3843 = vmatpush1.msra.mxu0 %v3808
    %3844 = vmatprep.subr.mxu0 0.0
    %3845 = vmatpush1.msra.mxu0 %v3809
    %3846 = vmatprep.subr.mxu0 0.0
    %3847 = vmatpush1.msra.mxu0 %v3810
    %3848 = vmatprep.subr.mxu0 0.0
    %3849 = vmatpush1.msra.mxu0 %v3811
    %3850 = vmatprep.subr.mxu0 0.0
    %3851 = vmatpush1.msra.mxu0 0.0
    %3852 = vmatprep.subr.mxu0 0.0
    %3853 = vmatpush1.msra.mxu0 0.0
    %3854 = vmatprep.subr.mxu0 0.0
    %3855 = vmatpush1.msra.mxu0 0.0
    %3856 = vmatprep.subr.mxu0 0.0
    %3857 = vmatpush1.msra.mxu0 0.0
    %3858 = vmatprep.subr.mxu0 0.0
    %3859 = vmatpush1.msra.mxu0 0.0
    %3860 = vmatprep.subr.mxu0 0.0
    %3861 = vmatpush1.msra.mxu0 0.0
    %3862 = vmatprep.subr.mxu0 0.0
    %3863 = vmatpush1.msra.mxu0 0.0
    %3864 = vmatprep.subr.mxu0 0.0
    %3865 = vmatpush1.msra.mxu0 0.0
    %3866 = vmatprep.subr.mxu0 0.0
    %3867 = vmatpush1.msra.mxu0 0.0
    %3868 = vmatprep.subr.mxu0 0.0
    %3869 = vmatpush1.msra.mxu0 0.0
    %3870 = vmatprep.subr.mxu0 0.0
    %3871 = vmatpush1.msra.mxu0 0.0
    %3872 = vmatprep.subr.mxu0 0.0
    %3873 = vmatpush1.msra.mxu0 0.0
    %3874 = vmatprep.subr.mxu0 0.0
    %3875 = vmatpush1.msra.mxu0 0.0
    %3876 = vmatprep.subr.mxu0 0.0
    %3877 = vmatpush1.msra.mxu0 0.0
    %3878 = vmatprep.subr.mxu0 0.0
    %3879 = vmatpush1.msra.mxu0 0.0
    %3880 = vmatprep.subr.mxu0 0.0
    %3881 = vmatpush1.msra.mxu0 0.0
    %3882 = vmatprep.subr.mxu0 0.0
    %3883 = vmatpush1.msra.mxu0 0.0
    %3884 = vmatprep.subr.mxu0 0.0
    %3885 = vmatpush1.msra.mxu0 0.0
    %3886 = vmatprep.subr.mxu0 0.0
    %3887 = vmatpush1.msra.mxu0 0.0
    %3888 = vmatprep.subr.mxu0 0.0
    %3889 = vmatpush1.msra.mxu0 0.0
    %3890 = vmatprep.subr.mxu0 0.0
    %3891 = vmatpush1.msra.mxu0 0.0
    %3892 = vmatprep.subr.mxu0 0.0
    %3893 = vmatpush1.msra.mxu0 0.0
    %3894 = vmatprep.subr.mxu0 0.0
    %3895 = vmatpush1.msra.mxu0 0.0
    %3896 = vmatprep.subr.mxu0 0.0
    %3897 = vmatpush1.msra.mxu0 0.0
    %3898 = vmatprep.mubr.f32.mxu0 0.0
    %3899 = vmatmul.mubr.f32.gmra.mrb[0].mxu0 %v3823
    %v3900 = vpop.f32.mrb[0].mxu0
    %v3901 = vadd.f32 %v3820, %v3900
    %v3902 = vpop.f32.mrb[0].mxu0
    %3903 = vmatprep.mubr.f32.mxu0 0.0
    %3904 = vmatmul.mubr.f32.gmra.mrb[0].mxu0 %v3826
    %v3905 = vpop.f32.mrb[0].mxu0
    %v3906 = vadd.f32 %v3820, %v3905
    %v3907 = vpop.f32.mrb[0].mxu0
    %3908 = vmatprep.mubr.f32.mxu0 0.0
    %3909 = vmatmul.mubr.f32.gmra.mrb[0].mxu0 %v3829
    %v3910 = vpop.f32.mrb[0].mxu0
    %v3911 = vadd.f32 %v3820, %v3910
    %v3912 = vpop.f32.mrb[0].mxu0
    %3913 = vmatprep.mubr.f32.mxu0 0.0
    %3914 = vmatmul.mubr.f32.gmra.mrb[0].mxu0 %v3832
    %v3915 = vpop.f32.mrb[0].mxu0
    %v3916 = vadd.f32 %v3820, %v3915
    %v3917 = vpop.f32.mrb[0].mxu0
    %3918 = vdwg.mxu0
    %v3919 = vxor.u32 %v3901, 2147483648
    %v3920 = vxor.u32 %v3906, 2147483648
    %v3921 = vxor.u32 %v3911, 2147483648
    %v3922 = vxor.u32 %v3916, 2147483648
    %v3923 = vmul.f32 %v3919, 1.442695
    %v3924 = vpow.pop %v3923
    %v3925 = vmul.f32 %v3920, 1.442695
    %v3926 = vpow.pop %v3925
    %v3927 = vmul.f32 %v3921, 1.442695
    %v3928 = vpow.pop %v3927
    %v3929 = vmul.f32 %v3922, 1.442695
    %v3930 = vpow.pop %v3929
    %v3931 = vadd.f32 %v3924, 1.0
    %v3932 = vadd.f32 %v3926, 1.0
    %v3933 = vadd.f32 %v3928, 1.0
    %v3934 = vadd.f32 %v3930, 1.0
    %v3935 = vrcp.pop %v3931
    %v3936 = vmul.f32 1.0, %v3935
    %v3937 = vrcp.pop %v3932
    %v3938 = vmul.f32 1.0, %v3937
    %v3939 = vrcp.pop %v3933
    %v3940 = vmul.f32 1.0, %v3939
    %v3941 = vrcp.pop %v3934
    %v3942 = vmul.f32 1.0, %v3941
    %v3943 = vld [vmem:[%s16] sm:$0xff]
    %v3944 = vld [vmem:[%s16 + $0x8] sm:$0xff]
    %vm3945 = vcmask 130048
    %v3947 = vsel %vm3945, %v3936, 0
    %v3950 = vsel %vm3945, %v3938, 0
    %v3953 = vsel %vm3945, %v3940, 0
    %v3956 = vsel %vm3945, %v3942, 0
    %3958 = vmatprep.subr.mxu0 0.0
    %3959 = vmatpush1.msra.mxu0 %v3943
    %3960 = vmatprep.subr.mxu0 0.0
    %3961 = vmatpush1.msra.mxu0 %v3944
    %3962 = vmatprep.subr.mxu0 0.0
    %3963 = vmatpush1.msra.mxu0 0.0
    %3964 = vmatprep.subr.mxu0 0.0
    %3965 = vmatpush1.msra.mxu0 0.0
    %3966 = vmatprep.subr.mxu0 0.0
    %3967 = vmatpush1.msra.mxu0 0.0
    %3968 = vmatprep.subr.mxu0 0.0
    %3969 = vmatpush1.msra.mxu0 0.0
    %3970 = vmatprep.subr.mxu0 0.0
    %3971 = vmatpush1.msra.mxu0 0.0
    %3972 = vmatprep.subr.mxu0 0.0
    %3973 = vmatpush1.msra.mxu0 0.0
    %3974 = vmatprep.subr.mxu0 0.0
    %3975 = vmatpush1.msra.mxu0 0.0
    %3976 = vmatprep.subr.mxu0 0.0
    %3977 = vmatpush1.msra.mxu0 0.0
    %3978 = vmatprep.subr.mxu0 0.0
    %3979 = vmatpush1.msra.mxu0 0.0
    %3980 = vmatprep.subr.mxu0 0.0
    %3981 = vmatpush1.msra.mxu0 0.0
    %3982 = vmatprep.subr.mxu0 0.0
    %3983 = vmatpush1.msra.mxu0 0.0
    %3984 = vmatprep.subr.mxu0 0.0
    %3985 = vmatpush1.msra.mxu0 0.0
    %3986 = vmatprep.subr.mxu0 0.0
    %3987 = vmatpush1.msra.mxu0 0.0
    %3988 = vmatprep.subr.mxu0 0.0
    %3989 = vmatpush1.msra.mxu0 0.0
    %3990 = vmatprep.subr.mxu0 0.0
    %3991 = vmatpush1.msra.mxu0 0.0
    %3992 = vmatprep.subr.mxu0 0.0
    %3993 = vmatpush1.msra.mxu0 0.0
    %3994 = vmatprep.subr.mxu0 0.0
    %3995 = vmatpush1.msra.mxu0 0.0
    %3996 = vmatprep.subr.mxu0 0.0
    %3997 = vmatpush1.msra.mxu0 0.0
    %3998 = vmatprep.subr.mxu0 0.0
    %3999 = vmatpush1.msra.mxu0 0.0
    %4000 = vmatprep.subr.mxu0 0.0
    %4001 = vmatpush1.msra.mxu0 0.0
    %4002 = vmatprep.subr.mxu0 0.0
    %4003 = vmatpush1.msra.mxu0 0.0
    %4004 = vmatprep.subr.mxu0 0.0
    %4005 = vmatpush1.msra.mxu0 0.0
    %4006 = vmatprep.subr.mxu0 0.0
    %4007 = vmatpush1.msra.mxu0 0.0
    %4008 = vmatprep.subr.mxu0 0.0
    %4009 = vmatpush1.msra.mxu0 0.0
    %4010 = vmatprep.subr.mxu0 0.0
    %4011 = vmatpush1.msra.mxu0 0.0
    %4012 = vmatprep.subr.mxu0 0.0
    %4013 = vmatpush1.msra.mxu0 0.0
    %4014 = vmatprep.subr.mxu0 0.0
    %4015 = vmatpush1.msra.mxu0 0.0
    %4016 = vmatprep.subr.mxu0 0.0
    %4017 = vmatpush1.msra.mxu0 0.0
    %4018 = vmatprep.subr.mxu0 0.0
    %4019 = vmatpush1.msra.mxu0 0.0
    %4020 = vmatprep.subr.mxu0 0.0
    %4021 = vmatpush1.msra.mxu0 0.0
    %4022 = vmatprep.mubr.f32.mxu0 0.0
    %4023 = vmatmul.mubr.f32.gmra.mrb[0].mxu0 %v3947
    %v4024 = vpop.f32.mrb[0].mxu0
    %v4025 = vadd.f32 0.0, %v4024
    %v4026 = vpop.f32.mrb[0].mxu0
    %4027 = vmatprep.mubr.f32.mxu0 0.0
    %4028 = vmatmul.mubr.f32.gmra.mrb[0].mxu0 %v3950
    %v4029 = vpop.f32.mrb[0].mxu0
    %v4030 = vadd.f32 0.0, %v4029
    %v4031 = vpop.f32.mrb[0].mxu0
    %4032 = vmatprep.mubr.f32.mxu0 0.0
    %4033 = vmatmul.mubr.f32.gmra.mrb[0].mxu0 %v3953
    %v4034 = vpop.f32.mrb[0].mxu0
    %v4035 = vadd.f32 0.0, %v4034
    %v4036 = vpop.f32.mrb[0].mxu0
    %4037 = vmatprep.mubr.f32.mxu0 0.0
    %4038 = vmatmul.mubr.f32.gmra.mrb[0].mxu0 %v3956
    %v4039 = vpop.f32.mrb[0].mxu0
    %v4040 = vadd.f32 0.0, %v4039
    %v4041 = vpop.f32.mrb[0].mxu0
    %4042 = vdwg.mxu0
    %v4043 = vmul.f32 %v4025, %v2580
    %v4044 = vmul.f32 %v4030, %v2581
    %v4045 = vmul.f32 %v4035, %v2582
    %v4046 = vmul.f32 %v4040, %v2583
    %v4047 = vsub.f32 1.0, %v4025
    %v4048 = vsub.f32 1.0, %v4030
    %v4049 = vsub.f32 1.0, %v4035
    %v4050 = vsub.f32 1.0, %v4040
    %v4051 = vmul.f32 %v4047, %v3792
    %v4052 = vmul.f32 %v4048, %v3793
    %v4053 = vmul.f32 %v4049, %v3794
    %v4054 = vmul.f32 %v4050, %v3795
    %4055 = vmatprep.subr.mxu0 0.0
    %4056 = vmatpush1.msra.mxu0 %v4043
    %4057 = vmatprep.subr.mxu0 0.0
    %4058 = vmatpush1.msra.mxu0 %v4044
    %4059 = vmatprep.subr.mxu0 0.0
    %4060 = vmatpush1.msra.mxu0 %v4045
    %4061 = vmatprep.subr.mxu0 0.0
    %4062 = vmatpush1.msra.mxu0 %v4046
    %4063 = vmatprep.subr.mxu0 0.0
    %4064 = vmatpush1.msra.mxu0 0.0
    %4065 = vmatprep.subr.mxu0 0.0
    %4066 = vmatpush1.msra.mxu0 0.0
    %4067 = vmatprep.subr.mxu0 0.0
    %4068 = vmatpush1.msra.mxu0 0.0
    %4069 = vmatprep.subr.mxu0 0.0
    %4070 = vmatpush1.msra.mxu0 0.0
    %4071 = vmatprep.subr.mxu0 0.0
    %4072 = vmatpush1.msra.mxu0 0.0
    %4073 = vmatprep.subr.mxu0 0.0
    %4074 = vmatpush1.msra.mxu0 0.0
    %4075 = vmatprep.subr.mxu0 0.0
    %4076 = vmatpush1.msra.mxu0 0.0
    %4077 = vmatprep.subr.mxu0 0.0
    %4078 = vmatpush1.msra.mxu0 0.0
    %4079 = vmatprep.subr.mxu0 0.0
    %4080 = vmatpush1.msra.mxu0 0.0
    %4081 = vmatprep.subr.mxu0 0.0
    %4082 = vmatpush1.msra.mxu0 0.0
    %4083 = vmatprep.subr.mxu0 0.0
    %4084 = vmatpush1.msra.mxu0 0.0
    %4085 = vmatprep.subr.mxu0 0.0
    %4086 = vmatpush1.msra.mxu0 0.0
    %4087 = vmatprep.subr.mxu0 0.0
    %4088 = vmatpush1.msra.mxu0 0.0
    %4089 = vmatprep.subr.mxu0 0.0
    %4090 = vmatpush1.msra.mxu0 0.0
    %4091 = vmatprep.subr.mxu0 0.0
    %4092 = vmatpush1.msra.mxu0 0.0
    %4093 = vmatprep.subr.mxu0 0.0
    %4094 = vmatpush1.msra.mxu0 0.0
    %4095 = vmatprep.subr.mxu0 0.0
    %4096 = vmatpush1.msra.mxu0 0.0
    %4097 = vmatprep.subr.mxu0 0.0
    %4098 = vmatpush1.msra.mxu0 0.0
    %4099 = vmatprep.subr.mxu0 0.0
    %4100 = vmatpush1.msra.mxu0 0.0
    %4101 = vmatprep.subr.mxu0 0.0
    %4102 = vmatpush1.msra.mxu0 0.0
    %4103 = vmatprep.subr.mxu0 0.0
    %4104 = vmatpush1.msra.mxu0 0.0
    %4105 = vmatprep.subr.mxu0 0.0
    %4106 = vmatpush1.msra.mxu0 0.0
    %4107 = vmatprep.subr.mxu0 0.0
    %4108 = vmatpush1.msra.mxu0 0.0
    %4109 = vmatprep.subr.mxu0 0.0
    %4110 = vmatpush1.msra.mxu0 0.0
    %4111 = vmatprep.subr.mxu0 0.0
    %4112 = vmatpush1.msra.mxu0 0.0
    %4113 = vmatprep.subr.mxu0 0.0
    %4114 = vmatpush1.msra.mxu0 0.0
    %4115 = vmatprep.subr.mxu0 0.0
    %4116 = vmatpush1.msra.mxu0 0.0
    %4117 = vmatprep.subr.mxu0 0.0
    %4118 = vmatpush1.msra.mxu0 0.0
    %4119 = vmatprep.mubr.f32.mxu0 0.0
    %4120 = vmatmul.mubr.f32.gmra.mrb[0].mxu0 %v744
    %v4121 = vpop.f32.mrb[0].mxu0
    %v4122 = vadd.f32 0.0, %v4121
    %v4123 = vpop.f32.mrb[0].mxu0
    %4124 = vmatprep.mubr.f32.mxu0 0.0
    %4125 = vmatmul.mubr.f32.gmra.mrb[0].mxu0 %v747
    %v4126 = vpop.f32.mrb[0].mxu0
    %v4127 = vadd.f32 0.0, %v4126
    %v4128 = vpop.f32.mrb[0].mxu0
    %4129 = vmatprep.mubr.f32.mxu0 0.0
    %4130 = vmatmul.mubr.f32.gmra.mrb[0].mxu0 %v750
    %v4131 = vpop.f32.mrb[0].mxu0
    %v4132 = vadd.f32 0.0, %v4131
    %v4133 = vpop.f32.mrb[0].mxu0
    %4134 = vmatprep.mubr.f32.mxu0 0.0
    %4135 = vmatmul.mubr.f32.gmra.mrb[0].mxu0 %v753
    %v4136 = vpop.f32.mrb[0].mxu0
    %v4137 = vadd.f32 0.0, %v4136
    %v4138 = vpop.f32.mrb[0].mxu0
    %4139 = vdwg.mxu0
    %s4140 = scalar_lea.vmem [#allocation3], 1152
    %v4141 = vld [vmem:[%s4140] sm:$0xff]
    %v4142 = vld [vmem:[%s4140 + $0x8] sm:$0xff]
    %v4143 = vld [vmem:[%s4140 + $0x10] sm:$0xff]
    %v4144 = vld [vmem:[%s4140 + $0x18] sm:$0xff]
    %v4145 = vld [vmem:[%s4140 + $0x20] sm:$0xff]
    %v4146 = vld [vmem:[%s4140 + $0x28] sm:$0xff]
    %v4147 = vld [vmem:[%s4140 + $0x30] sm:$0xff]
    %v4148 = vld [vmem:[%s4140 + $0x38] sm:$0xff]
    %4149 = vmatprep.subr.mxu0 0.0
    %4150 = vmatpush1.msra.mxu0 %v4051
    %4151 = vmatprep.subr.mxu0 0.0
    %4152 = vmatpush1.msra.mxu0 %v4052
    %4153 = vmatprep.subr.mxu0 0.0
    %4154 = vmatpush1.msra.mxu0 %v4053
    %4155 = vmatprep.subr.mxu0 0.0
    %4156 = vmatpush1.msra.mxu0 %v4054
    %4157 = vmatprep.subr.mxu0 0.0
    %4158 = vmatpush1.msra.mxu0 0.0
    %4159 = vmatprep.subr.mxu0 0.0
    %4160 = vmatpush1.msra.mxu0 0.0
    %4161 = vmatprep.subr.mxu0 0.0
    %4162 = vmatpush1.msra.mxu0 0.0
    %4163 = vmatprep.subr.mxu0 0.0
    %4164 = vmatpush1.msra.mxu0 0.0
    %4165 = vmatprep.subr.mxu0 0.0
    %4166 = vmatpush1.msra.mxu0 0.0
    %4167 = vmatprep.subr.mxu0 0.0
    %4168 = vmatpush1.msra.mxu0 0.0
    %4169 = vmatprep.subr.mxu0 0.0
    %4170 = vmatpush1.msra.mxu0 0.0
    %4171 = vmatprep.subr.mxu0 0.0
    %4172 = vmatpush1.msra.mxu0 0.0
    %4173 = vmatprep.subr.mxu0 0.0
    %4174 = vmatpush1.msra.mxu0 0.0
    %4175 = vmatprep.subr.mxu0 0.0
    %4176 = vmatpush1.msra.mxu0 0.0
    %4177 = vmatprep.subr.mxu0 0.0
    %4178 = vmatpush1.msra.mxu0 0.0
    %4179 = vmatprep.subr.mxu0 0.0
    %4180 = vmatpush1.msra.mxu0 0.0
    %4181 = vmatprep.subr.mxu0 0.0
    %4182 = vmatpush1.msra.mxu0 0.0
    %4183 = vmatprep.subr.mxu0 0.0
    %4184 = vmatpush1.msra.mxu0 0.0
    %4185 = vmatprep.subr.mxu0 0.0
    %4186 = vmatpush1.msra.mxu0 0.0
    %4187 = vmatprep.subr.mxu0 0.0
    %4188 = vmatpush1.msra.mxu0 0.0
    %4189 = vmatprep.subr.mxu0 0.0
    %4190 = vmatpush1.msra.mxu0 0.0
    %4191 = vmatprep.subr.mxu0 0.0
    %4192 = vmatpush1.msra.mxu0 0.0
    %4193 = vmatprep.subr.mxu0 0.0
    %4194 = vmatpush1.msra.mxu0 0.0
    %4195 = vmatprep.subr.mxu0 0.0
    %4196 = vmatpush1.msra.mxu0 0.0
    %4197 = vmatprep.subr.mxu0 0.0
    %4198 = vmatpush1.msra.mxu0 0.0
    %4199 = vmatprep.subr.mxu0 0.0
    %4200 = vmatpush1.msra.mxu0 0.0
    %4201 = vmatprep.subr.mxu0 0.0
    %4202 = vmatpush1.msra.mxu0 0.0
    %4203 = vmatprep.subr.mxu0 0.0
    %4204 = vmatpush1.msra.mxu0 0.0
    %4205 = vmatprep.subr.mxu0 0.0
    %4206 = vmatpush1.msra.mxu0 0.0
    %4207 = vmatprep.subr.mxu0 0.0
    %4208 = vmatpush1.msra.mxu0 0.0
    %4209 = vmatprep.subr.mxu0 0.0
    %4210 = vmatpush1.msra.mxu0 0.0
    %4211 = vmatprep.subr.mxu0 0.0
    %4212 = vmatpush1.msra.mxu0 0.0
    %4213 = vmatprep.mubr.f32.mxu0 0.0
    %4214 = vmatmul.mubr.f32.gmra.mrb[0].mxu0 %v744
    %v4215 = vpop.f32.mrb[0].mxu0
    %v4216 = vadd.f32 0.0, %v4215
    %v4217 = vpop.f32.mrb[0].mxu0
    %4218 = vmatprep.mubr.f32.mxu0 0.0
    %4219 = vmatmul.mubr.f32.gmra.mrb[0].mxu0 %v747
    %v4220 = vpop.f32.mrb[0].mxu0
    %v4221 = vadd.f32 0.0, %v4220
    %v4222 = vpop.f32.mrb[0].mxu0
    %4223 = vmatprep.mubr.f32.mxu0 0.0
    %4224 = vmatmul.mubr.f32.gmra.mrb[0].mxu0 %v750
    %v4225 = vpop.f32.mrb[0].mxu0
    %v4226 = vadd.f32 0.0, %v4225
    %v4227 = vpop.f32.mrb[0].mxu0
    %4228 = vmatprep.mubr.f32.mxu0 0.0
    %4229 = vmatmul.mubr.f32.gmra.mrb[0].mxu0 %v753
    %v4230 = vpop.f32.mrb[0].mxu0
    %v4231 = vadd.f32 0.0, %v4230
    %v4232 = vpop.f32.mrb[0].mxu0
    %4233 = vdwg.mxu0
    %s4234 = scalar_lea.vmem [#allocation3], 1344
    %v4235 = vld [vmem:[%s4234] sm:$0xff]
    %v4236 = vld [vmem:[%s4234 + $0x8] sm:$0xff]
    %v4237 = vld [vmem:[%s4234 + $0x10] sm:$0xff]
    %v4238 = vld [vmem:[%s4234 + $0x18] sm:$0xff]
    %v4239 = vld [vmem:[%s4234 + $0x20] sm:$0xff]
    %v4240 = vld [vmem:[%s4234 + $0x28] sm:$0xff]
    %v4241 = vld [vmem:[%s4234 + $0x30] sm:$0xff]
    %v4242 = vld [vmem:[%s4234 + $0x38] sm:$0xff]
    %v4244 = vsel %vm198, %v4216, 0
    %v4247 = vsel %vm198, %v4221, 0
    %v4250 = vsel %vm198, %v4226, 0
    %v4253 = vsel %vm198, %v4231, 0
    %4255 = vmatprep.subr.mxu0 0.0
    %4256 = vmatpush1.msra.mxu0 %v4235
    %4257 = vmatprep.subr.mxu0 0.0
    %4258 = vmatpush1.msra.mxu0 %v4236
    %4259 = vmatprep.subr.mxu0 0.0
    %4260 = vmatpush1.msra.mxu0 %v4237
    %4261 = vmatprep.subr.mxu0 0.0
    %4262 = vmatpush1.msra.mxu0 %v4238
    %4263 = vmatprep.subr.mxu0 0.0
    %4264 = vmatpush1.msra.mxu0 %v4239
    %4265 = vmatprep.subr.mxu0 0.0
    %4266 = vmatpush1.msra.mxu0 %v4240
    %4267 = vmatprep.subr.mxu0 0.0
    %4268 = vmatpush1.msra.mxu0 %v4241
    %4269 = vmatprep.subr.mxu0 0.0
    %4270 = vmatpush1.msra.mxu0 %v4242
    %4271 = vmatprep.subr.mxu0 0.0
    %4272 = vmatpush1.msra.mxu0 0.0
    %4273 = vmatprep.subr.mxu0 0.0
    %4274 = vmatpush1.msra.mxu0 0.0
    %4275 = vmatprep.subr.mxu0 0.0
    %4276 = vmatpush1.msra.mxu0 0.0
    %4277 = vmatprep.subr.mxu0 0.0
    %4278 = vmatpush1.msra.mxu0 0.0
    %4279 = vmatprep.subr.mxu0 0.0
    %4280 = vmatpush1.msra.mxu0 0.0
    %4281 = vmatprep.subr.mxu0 0.0
    %4282 = vmatpush1.msra.mxu0 0.0
    %4283 = vmatprep.subr.mxu0 0.0
    %4284 = vmatpush1.msra.mxu0 0.0
    %4285 = vmatprep.subr.mxu0 0.0
    %4286 = vmatpush1.msra.mxu0 0.0
    %4287 = vmatprep.subr.mxu0 0.0
    %4288 = vmatpush1.msra.mxu0 0.0
    %4289 = vmatprep.subr.mxu0 0.0
    %4290 = vmatpush1.msra.mxu0 0.0
    %4291 = vmatprep.subr.mxu0 0.0
    %4292 = vmatpush1.msra.mxu0 0.0
    %4293 = vmatprep.subr.mxu0 0.0
    %4294 = vmatpush1.msra.mxu0 0.0
    %4295 = vmatprep.subr.mxu0 0.0
    %4296 = vmatpush1.msra.mxu0 0.0
    %4297 = vmatprep.subr.mxu0 0.0
    %4298 = vmatpush1.msra.mxu0 0.0
    %4299 = vmatprep.subr.mxu0 0.0
    %4300 = vmatpush1.msra.mxu0 0.0
    %4301 = vmatprep.subr.mxu0 0.0
    %4302 = vmatpush1.msra.mxu0 0.0
    %4303 = vmatprep.subr.mxu0 0.0
    %4304 = vmatpush1.msra.mxu0 0.0
    %4305 = vmatprep.subr.mxu0 0.0
    %4306 = vmatpush1.msra.mxu0 0.0
    %4307 = vmatprep.subr.mxu0 0.0
    %4308 = vmatpush1.msra.mxu0 0.0
    %4309 = vmatprep.subr.mxu0 0.0
    %4310 = vmatpush1.msra.mxu0 0.0
    %4311 = vmatprep.subr.mxu0 0.0
    %4312 = vmatpush1.msra.mxu0 0.0
    %4313 = vmatprep.subr.mxu0 0.0
    %4314 = vmatpush1.msra.mxu0 0.0
    %4315 = vmatprep.subr.mxu0 0.0
    %4316 = vmatpush1.msra.mxu0 0.0
    %4317 = vmatprep.subr.mxu0 0.0
    %4318 = vmatpush1.msra.mxu0 0.0
    %4319 = vmatprep.mubr.f32.mxu0 0.0
    %4320 = vmatmul.mubr.f32.gmra.mrb[0].mxu0 %v4244
    %v4321 = vpop.f32.mrb[0].mxu0
    %v4322 = vadd.f32 0.0, %v4321
    %v4323 = vpop.f32.mrb[0].mxu0
    %4324 = vmatprep.mubr.f32.mxu0 0.0
    %4325 = vmatmul.mubr.f32.gmra.mrb[0].mxu0 %v4247
    %v4326 = vpop.f32.mrb[0].mxu0
    %v4327 = vadd.f32 0.0, %v4326
    %v4328 = vpop.f32.mrb[0].mxu0
    %4329 = vmatprep.mubr.f32.mxu0 0.0
    %4330 = vmatmul.mubr.f32.gmra.mrb[0].mxu0 %v4250
    %v4331 = vpop.f32.mrb[0].mxu0
    %v4332 = vadd.f32 0.0, %v4331
    %v4333 = vpop.f32.mrb[0].mxu0
    %4334 = vmatprep.mubr.f32.mxu0 0.0
    %4335 = vmatmul.mubr.f32.gmra.mrb[0].mxu0 %v4253
    %v4336 = vpop.f32.mrb[0].mxu0
    %v4337 = vadd.f32 0.0, %v4336
    %v4338 = vpop.f32.mrb[0].mxu0
    %4339 = vdwg.mxu0
    %v4341 = vsel %vm198, %v4122, 0
    %v4344 = vsel %vm198, %v4127, 0
    %v4347 = vsel %vm198, %v4132, 0
    %v4350 = vsel %vm198, %v4137, 0
    %4352 = vmatprep.subr.mxu0 0.0
    %4353 = vmatpush1.msra.mxu0 %v4141
    %4354 = vmatprep.subr.mxu0 0.0
    %4355 = vmatpush1.msra.mxu0 %v4142
    %4356 = vmatprep.subr.mxu0 0.0
    %4357 = vmatpush1.msra.mxu0 %v4143
    %4358 = vmatprep.subr.mxu0 0.0
    %4359 = vmatpush1.msra.mxu0 %v4144
    %4360 = vmatprep.subr.mxu0 0.0
    %4361 = vmatpush1.msra.mxu0 %v4145
    %4362 = vmatprep.subr.mxu0 0.0
    %4363 = vmatpush1.msra.mxu0 %v4146
    %4364 = vmatprep.subr.mxu0 0.0
    %4365 = vmatpush1.msra.mxu0 %v4147
    %4366 = vmatprep.subr.mxu0 0.0
    %4367 = vmatpush1.msra.mxu0 %v4148
    %4368 = vmatprep.subr.mxu0 0.0
    %4369 = vmatpush1.msra.mxu0 0.0
    %4370 = vmatprep.subr.mxu0 0.0
    %4371 = vmatpush1.msra.mxu0 0.0
    %4372 = vmatprep.subr.mxu0 0.0
    %4373 = vmatpush1.msra.mxu0 0.0
    %4374 = vmatprep.subr.mxu0 0.0
    %4375 = vmatpush1.msra.mxu0 0.0
    %4376 = vmatprep.subr.mxu0 0.0
    %4377 = vmatpush1.msra.mxu0 0.0
    %4378 = vmatprep.subr.mxu0 0.0
    %4379 = vmatpush1.msra.mxu0 0.0
    %4380 = vmatprep.subr.mxu0 0.0
    %4381 = vmatpush1.msra.mxu0 0.0
    %4382 = vmatprep.subr.mxu0 0.0
    %4383 = vmatpush1.msra.mxu0 0.0
    %4384 = vmatprep.subr.mxu0 0.0
    %4385 = vmatpush1.msra.mxu0 0.0
    %4386 = vmatprep.subr.mxu0 0.0
    %4387 = vmatpush1.msra.mxu0 0.0
    %4388 = vmatprep.subr.mxu0 0.0
    %4389 = vmatpush1.msra.mxu0 0.0
    %4390 = vmatprep.subr.mxu0 0.0
    %4391 = vmatpush1.msra.mxu0 0.0
    %4392 = vmatprep.subr.mxu0 0.0
    %4393 = vmatpush1.msra.mxu0 0.0
    %4394 = vmatprep.subr.mxu0 0.0
    %4395 = vmatpush1.msra.mxu0 0.0
    %4396 = vmatprep.subr.mxu0 0.0
    %4397 = vmatpush1.msra.mxu0 0.0
    %4398 = vmatprep.subr.mxu0 0.0
    %4399 = vmatpush1.msra.mxu0 0.0
    %4400 = vmatprep.subr.mxu0 0.0
    %4401 = vmatpush1.msra.mxu0 0.0
    %4402 = vmatprep.subr.mxu0 0.0
    %4403 = vmatpush1.msra.mxu0 0.0
    %4404 = vmatprep.subr.mxu0 0.0
    %4405 = vmatpush1.msra.mxu0 0.0
    %4406 = vmatprep.subr.mxu0 0.0
    %4407 = vmatpush1.msra.mxu0 0.0
    %4408 = vmatprep.subr.mxu0 0.0
    %4409 = vmatpush1.msra.mxu0 0.0
    %4410 = vmatprep.subr.mxu0 0.0
    %4411 = vmatpush1.msra.mxu0 0.0
    %4412 = vmatprep.subr.mxu0 0.0
    %4413 = vmatpush1.msra.mxu0 0.0
    %4414 = vmatprep.subr.mxu0 0.0
    %4415 = vmatpush1.msra.mxu0 0.0
    %4416 = vmatprep.mubr.f32.mxu0 0.0
    %4417 = vmatmul.mubr.f32.gmra.mrb[0].mxu0 %v4341
    %v4418 = vpop.f32.mrb[0].mxu0
    %v4419 = vadd.f32 %v4322, %v4418
    %v4420 = vpop.f32.mrb[0].mxu0
    %4421 = vmatprep.mubr.f32.mxu0 0.0
    %4422 = vmatmul.mubr.f32.gmra.mrb[0].mxu0 %v4344
    %v4423 = vpop.f32.mrb[0].mxu0
    %v4424 = vadd.f32 %v4327, %v4423
    %v4425 = vpop.f32.mrb[0].mxu0
    %4426 = vmatprep.mubr.f32.mxu0 0.0
    %4427 = vmatmul.mubr.f32.gmra.mrb[0].mxu0 %v4347
    %v4428 = vpop.f32.mrb[0].mxu0
    %v4429 = vadd.f32 %v4332, %v4428
    %v4430 = vpop.f32.mrb[0].mxu0
    %4431 = vmatprep.mubr.f32.mxu0 0.0
    %4432 = vmatmul.mubr.f32.gmra.mrb[0].mxu0 %v4350
    %v4433 = vpop.f32.mrb[0].mxu0
    %v4434 = vadd.f32 %v4337, %v4433
    %v4435 = vpop.f32.mrb[0].mxu0
    %4436 = vdwg.mxu0
    %s4437 = scalar_lea.vmem [#allocation3], 1216
    %v4438 = vld [vmem:[%s4437] sm:$0xff]
    %v4439 = vld [vmem:[%s4437 + $0x8] sm:$0xff]
    %v4440 = vld [vmem:[%s4437 + $0x10] sm:$0xff]
    %v4441 = vld [vmem:[%s4437 + $0x18] sm:$0xff]
    %v4442 = vld [vmem:[%s4437 + $0x20] sm:$0xff]
    %v4443 = vld [vmem:[%s4437 + $0x28] sm:$0xff]
    %v4444 = vld [vmem:[%s4437 + $0x30] sm:$0xff]
    %v4445 = vld [vmem:[%s4437 + $0x38] sm:$0xff]
    %v4447 = vsel %vm198, %v4043, 0
    %v4450 = vsel %vm198, %v4044, 0
    %v4453 = vsel %vm198, %v4045, 0
    %v4456 = vsel %vm198, %v4046, 0
    %4458 = vmatprep.subr.mxu0 0.0
    %4459 = vmatpush1.msra.mxu0 %v4438
    %4460 = vmatprep.subr.mxu0 0.0
    %4461 = vmatpush1.msra.mxu0 %v4439
    %4462 = vmatprep.subr.mxu0 0.0
    %4463 = vmatpush1.msra.mxu0 %v4440
    %4464 = vmatprep.subr.mxu0 0.0
    %4465 = vmatpush1.msra.mxu0 %v4441
    %4466 = vmatprep.subr.mxu0 0.0
    %4467 = vmatpush1.msra.mxu0 %v4442
    %4468 = vmatprep.subr.mxu0 0.0
    %4469 = vmatpush1.msra.mxu0 %v4443
    %4470 = vmatprep.subr.mxu0 0.0
    %4471 = vmatpush1.msra.mxu0 %v4444
    %4472 = vmatprep.subr.mxu0 0.0
    %4473 = vmatpush1.msra.mxu0 %v4445
    %4474 = vmatprep.subr.mxu0 0.0
    %4475 = vmatpush1.msra.mxu0 0.0
    %4476 = vmatprep.subr.mxu0 0.0
    %4477 = vmatpush1.msra.mxu0 0.0
    %4478 = vmatprep.subr.mxu0 0.0
    %4479 = vmatpush1.msra.mxu0 0.0
    %4480 = vmatprep.subr.mxu0 0.0
    %4481 = vmatpush1.msra.mxu0 0.0
    %4482 = vmatprep.subr.mxu0 0.0
    %4483 = vmatpush1.msra.mxu0 0.0
    %4484 = vmatprep.subr.mxu0 0.0
    %4485 = vmatpush1.msra.mxu0 0.0
    %4486 = vmatprep.subr.mxu0 0.0
    %4487 = vmatpush1.msra.mxu0 0.0
    %4488 = vmatprep.subr.mxu0 0.0
    %4489 = vmatpush1.msra.mxu0 0.0
    %4490 = vmatprep.subr.mxu0 0.0
    %4491 = vmatpush1.msra.mxu0 0.0
    %4492 = vmatprep.subr.mxu0 0.0
    %4493 = vmatpush1.msra.mxu0 0.0
    %4494 = vmatprep.subr.mxu0 0.0
    %4495 = vmatpush1.msra.mxu0 0.0
    %4496 = vmatprep.subr.mxu0 0.0
    %4497 = vmatpush1.msra.mxu0 0.0
    %4498 = vmatprep.subr.mxu0 0.0
    %4499 = vmatpush1.msra.mxu0 0.0
    %4500 = vmatprep.subr.mxu0 0.0
    %4501 = vmatpush1.msra.mxu0 0.0
    %4502 = vmatprep.subr.mxu0 0.0
    %4503 = vmatpush1.msra.mxu0 0.0
    %4504 = vmatprep.subr.mxu0 0.0
    %4505 = vmatpush1.msra.mxu0 0.0
    %4506 = vmatprep.subr.mxu0 0.0
    %4507 = vmatpush1.msra.mxu0 0.0
    %4508 = vmatprep.subr.mxu0 0.0
    %4509 = vmatpush1.msra.mxu0 0.0
    %4510 = vmatprep.subr.mxu0 0.0
    %4511 = vmatpush1.msra.mxu0 0.0
    %4512 = vmatprep.subr.mxu0 0.0
    %4513 = vmatpush1.msra.mxu0 0.0
    %4514 = vmatprep.subr.mxu0 0.0
    %4515 = vmatpush1.msra.mxu0 0.0
    %4516 = vmatprep.subr.mxu0 0.0
    %4517 = vmatpush1.msra.mxu0 0.0
    %4518 = vmatprep.subr.mxu0 0.0
    %4519 = vmatpush1.msra.mxu0 0.0
    %4520 = vmatprep.subr.mxu0 0.0
    %4521 = vmatpush1.msra.mxu0 0.0
    %4522 = vmatprep.mubr.f32.mxu0 0.0
    %4523 = vmatmul.mubr.f32.gmra.mrb[0].mxu0 %v4447
    %v4524 = vpop.f32.mrb[0].mxu0
    %v4525 = vadd.f32 0.0, %v4524
    %v4526 = vpop.f32.mrb[0].mxu0
    %4527 = vmatprep.mubr.f32.mxu0 0.0
    %4528 = vmatmul.mubr.f32.gmra.mrb[0].mxu0 %v4450
    %v4529 = vpop.f32.mrb[0].mxu0
    %v4530 = vadd.f32 0.0, %v4529
    %v4531 = vpop.f32.mrb[0].mxu0
    %4532 = vmatprep.mubr.f32.mxu0 0.0
    %4533 = vmatmul.mubr.f32.gmra.mrb[0].mxu0 %v4453
    %v4534 = vpop.f32.mrb[0].mxu0
    %v4535 = vadd.f32 0.0, %v4534
    %v4536 = vpop.f32.mrb[0].mxu0
    %4537 = vmatprep.mubr.f32.mxu0 0.0
    %4538 = vmatmul.mubr.f32.gmra.mrb[0].mxu0 %v4456
    %v4539 = vpop.f32.mrb[0].mxu0
    %v4540 = vadd.f32 0.0, %v4539
    %v4541 = vpop.f32.mrb[0].mxu0
    %4542 = vdwg.mxu0
    %v4543 = vadd.f32 %v4419, %v4525
    %v4544 = vadd.f32 %v4424, %v4530
    %v4545 = vadd.f32 %v4429, %v4535
    %v4546 = vadd.f32 %v4434, %v4540
    %s4547 = scalar_lea.vmem [#allocation3], 1408
    %v4548 = vld [vmem:[%s4547] sm:$0xff]
    %v4549 = vld [vmem:[%s4547 + $0x8] sm:$0xff]
    %v4550 = vld [vmem:[%s4547 + $0x10] sm:$0xff]
    %v4551 = vld [vmem:[%s4547 + $0x18] sm:$0xff]
    %v4552 = vld [vmem:[%s4547 + $0x20] sm:$0xff]
    %v4553 = vld [vmem:[%s4547 + $0x28] sm:$0xff]
    %v4554 = vld [vmem:[%s4547 + $0x30] sm:$0xff]
    %v4555 = vld [vmem:[%s4547 + $0x38] sm:$0xff]
    %v4557 = vsel %vm198, %v4051, 0
    %v4560 = vsel %vm198, %v4052, 0
    %v4563 = vsel %vm198, %v4053, 0
    %v4566 = vsel %vm198, %v4054, 0
    %4568 = vmatprep.subr.mxu0 0.0
    %4569 = vmatpush1.msra.mxu0 %v4548
    %4570 = vmatprep.subr.mxu0 0.0
    %4571 = vmatpush1.msra.mxu0 %v4549
    %4572 = vmatprep.subr.mxu0 0.0
    %4573 = vmatpush1.msra.mxu0 %v4550
    %4574 = vmatprep.subr.mxu0 0.0
    %4575 = vmatpush1.msra.mxu0 %v4551
    %4576 = vmatprep.subr.mxu0 0.0
    %4577 = vmatpush1.msra.mxu0 %v4552
    %4578 = vmatprep.subr.mxu0 0.0
    %4579 = vmatpush1.msra.mxu0 %v4553
    %4580 = vmatprep.subr.mxu0 0.0
    %4581 = vmatpush1.msra.mxu0 %v4554
    %4582 = vmatprep.subr.mxu0 0.0
    %4583 = vmatpush1.msra.mxu0 %v4555
    %4584 = vmatprep.subr.mxu0 0.0
    %4585 = vmatpush1.msra.mxu0 0.0
    %4586 = vmatprep.subr.mxu0 0.0
    %4587 = vmatpush1.msra.mxu0 0.0
    %4588 = vmatprep.subr.mxu0 0.0
    %4589 = vmatpush1.msra.mxu0 0.0
    %4590 = vmatprep.subr.mxu0 0.0
    %4591 = vmatpush1.msra.mxu0 0.0
    %4592 = vmatprep.subr.mxu0 0.0
    %4593 = vmatpush1.msra.mxu0 0.0
    %4594 = vmatprep.subr.mxu0 0.0
    %4595 = vmatpush1.msra.mxu0 0.0
    %4596 = vmatprep.subr.mxu0 0.0
    %4597 = vmatpush1.msra.mxu0 0.0
    %4598 = vmatprep.subr.mxu0 0.0
    %4599 = vmatpush1.msra.mxu0 0.0
    %4600 = vmatprep.subr.mxu0 0.0
    %4601 = vmatpush1.msra.mxu0 0.0
    %4602 = vmatprep.subr.mxu0 0.0
    %4603 = vmatpush1.msra.mxu0 0.0
    %4604 = vmatprep.subr.mxu0 0.0
    %4605 = vmatpush1.msra.mxu0 0.0
    %4606 = vmatprep.subr.mxu0 0.0
    %4607 = vmatpush1.msra.mxu0 0.0
    %4608 = vmatprep.subr.mxu0 0.0
    %4609 = vmatpush1.msra.mxu0 0.0
    %4610 = vmatprep.subr.mxu0 0.0
    %4611 = vmatpush1.msra.mxu0 0.0
    %4612 = vmatprep.subr.mxu0 0.0
    %4613 = vmatpush1.msra.mxu0 0.0
    %4614 = vmatprep.subr.mxu0 0.0
    %4615 = vmatpush1.msra.mxu0 0.0
    %4616 = vmatprep.subr.mxu0 0.0
    %4617 = vmatpush1.msra.mxu0 0.0
    %4618 = vmatprep.subr.mxu0 0.0
    %4619 = vmatpush1.msra.mxu0 0.0
    %4620 = vmatprep.subr.mxu0 0.0
    %4621 = vmatpush1.msra.mxu0 0.0
    %4622 = vmatprep.subr.mxu0 0.0
    %4623 = vmatpush1.msra.mxu0 0.0
    %4624 = vmatprep.subr.mxu0 0.0
    %4625 = vmatpush1.msra.mxu0 0.0
    %4626 = vmatprep.subr.mxu0 0.0
    %4627 = vmatpush1.msra.mxu0 0.0
    %4628 = vmatprep.subr.mxu0 0.0
    %4629 = vmatpush1.msra.mxu0 0.0
    %4630 = vmatprep.subr.mxu0 0.0
    %4631 = vmatpush1.msra.mxu0 0.0
    %4632 = vmatprep.mubr.f32.mxu0 0.0
    %4633 = vmatmul.mubr.f32.gmra.mrb[0].mxu0 %v4557
    %v4634 = vpop.f32.mrb[0].mxu0
    %v4635 = vadd.f32 0.0, %v4634
    %v4636 = vpop.f32.mrb[0].mxu0
    %4637 = vmatprep.mubr.f32.mxu0 0.0
    %4638 = vmatmul.mubr.f32.gmra.mrb[0].mxu0 %v4560
    %v4639 = vpop.f32.mrb[0].mxu0
    %v4640 = vadd.f32 0.0, %v4639
    %v4641 = vpop.f32.mrb[0].mxu0
    %4642 = vmatprep.mubr.f32.mxu0 0.0
    %4643 = vmatmul.mubr.f32.gmra.mrb[0].mxu0 %v4563
    %v4644 = vpop.f32.mrb[0].mxu0
    %v4645 = vadd.f32 0.0, %v4644
    %v4646 = vpop.f32.mrb[0].mxu0
    %4647 = vmatprep.mubr.f32.mxu0 0.0
    %4648 = vmatmul.mubr.f32.gmra.mrb[0].mxu0 %v4566
    %v4649 = vpop.f32.mrb[0].mxu0
    %v4650 = vadd.f32 0.0, %v4649
    %v4651 = vpop.f32.mrb[0].mxu0
    %4652 = vdwg.mxu0
    %v4653 = vadd.f32 %v4543, %v4635
    %v4654 = vadd.f32 %v4544, %v4640
    %v4655 = vadd.f32 %v4545, %v4645
    %v4656 = vadd.f32 %v4546, %v4650
    %4657 = vmatprep.subr.mxu0 0.0
    %4658 = vmatpush1.msra.mxu0 %v4043
    %4659 = vmatprep.subr.mxu0 0.0
    %4660 = vmatpush1.msra.mxu0 %v4044
    %4661 = vmatprep.subr.mxu0 0.0
    %4662 = vmatpush1.msra.mxu0 %v4045
    %4663 = vmatprep.subr.mxu0 0.0
    %4664 = vmatpush1.msra.mxu0 %v4046
    %4665 = vmatprep.subr.mxu0 0.0
    %4666 = vmatpush1.msra.mxu0 0.0
    %4667 = vmatprep.subr.mxu0 0.0
    %4668 = vmatpush1.msra.mxu0 0.0
    %4669 = vmatprep.subr.mxu0 0.0
    %4670 = vmatpush1.msra.mxu0 0.0
    %4671 = vmatprep.subr.mxu0 0.0
    %4672 = vmatpush1.msra.mxu0 0.0
    %4673 = vmatprep.subr.mxu0 0.0
    %4674 = vmatpush1.msra.mxu0 0.0
    %4675 = vmatprep.subr.mxu0 0.0
    %4676 = vmatpush1.msra.mxu0 0.0
    %4677 = vmatprep.subr.mxu0 0.0
    %4678 = vmatpush1.msra.mxu0 0.0
    %4679 = vmatprep.subr.mxu0 0.0
    %4680 = vmatpush1.msra.mxu0 0.0
    %4681 = vmatprep.subr.mxu0 0.0
    %4682 = vmatpush1.msra.mxu0 0.0
    %4683 = vmatprep.subr.mxu0 0.0
    %4684 = vmatpush1.msra.mxu0 0.0
    %4685 = vmatprep.subr.mxu0 0.0
    %4686 = vmatpush1.msra.mxu0 0.0
    %4687 = vmatprep.subr.mxu0 0.0
    %4688 = vmatpush1.msra.mxu0 0.0
    %4689 = vmatprep.subr.mxu0 0.0
    %4690 = vmatpush1.msra.mxu0 0.0
    %4691 = vmatprep.subr.mxu0 0.0
    %4692 = vmatpush1.msra.mxu0 0.0
    %4693 = vmatprep.subr.mxu0 0.0
    %4694 = vmatpush1.msra.mxu0 0.0
    %4695 = vmatprep.subr.mxu0 0.0
    %4696 = vmatpush1.msra.mxu0 0.0
    %4697 = vmatprep.subr.mxu0 0.0
    %4698 = vmatpush1.msra.mxu0 0.0
    %4699 = vmatprep.subr.mxu0 0.0
    %4700 = vmatpush1.msra.mxu0 0.0
    %4701 = vmatprep.subr.mxu0 0.0
    %4702 = vmatpush1.msra.mxu0 0.0
    %4703 = vmatprep.subr.mxu0 0.0
    %4704 = vmatpush1.msra.mxu0 0.0
    %4705 = vmatprep.subr.mxu0 0.0
    %4706 = vmatpush1.msra.mxu0 0.0
    %4707 = vmatprep.subr.mxu0 0.0
    %4708 = vmatpush1.msra.mxu0 0.0
    %4709 = vmatprep.subr.mxu0 0.0
    %4710 = vmatpush1.msra.mxu0 0.0
    %4711 = vmatprep.subr.mxu0 0.0
    %4712 = vmatpush1.msra.mxu0 0.0
    %4713 = vmatprep.subr.mxu0 0.0
    %4714 = vmatpush1.msra.mxu0 0.0
    %4715 = vmatprep.subr.mxu0 0.0
    %4716 = vmatpush1.msra.mxu0 0.0
    %4717 = vmatprep.subr.mxu0 0.0
    %4718 = vmatpush1.msra.mxu0 0.0
    %4719 = vmatprep.subr.mxu0 0.0
    %4720 = vmatpush1.msra.mxu0 0.0
    %4721 = vmatprep.mubr.f32.mxu0 0.0
    %4722 = vmatmul.mubr.f32.gmra.mrb[0].mxu0 %v1147
    %v4723 = vpop.f32.mrb[0].mxu0
    %v4724 = vadd.f32 0.0, %v4723
    %v4725 = vpop.f32.mrb[0].mxu0
    %4726 = vmatprep.mubr.f32.mxu0 0.0
    %4727 = vmatmul.mubr.f32.gmra.mrb[0].mxu0 %v1150
    %v4728 = vpop.f32.mrb[0].mxu0
    %v4729 = vadd.f32 0.0, %v4728
    %v4730 = vpop.f32.mrb[0].mxu0
    %4731 = vmatprep.mubr.f32.mxu0 0.0
    %4732 = vmatmul.mubr.f32.gmra.mrb[0].mxu0 %v1153
    %v4733 = vpop.f32.mrb[0].mxu0
    %v4734 = vadd.f32 0.0, %v4733
    %v4735 = vpop.f32.mrb[0].mxu0
    %4736 = vmatprep.mubr.f32.mxu0 0.0
    %4737 = vmatmul.mubr.f32.gmra.mrb[0].mxu0 %v1156
    %v4738 = vpop.f32.mrb[0].mxu0
    %v4739 = vadd.f32 0.0, %v4738
    %v4740 = vpop.f32.mrb[0].mxu0
    %4741 = vdwg.mxu0
    %s4742 = scalar_lea.vmem [#allocation3], 1280
    %v4743 = vld [vmem:[%s4742] sm:$0xff]
    %v4744 = vld [vmem:[%s4742 + $0x8] sm:$0xff]
    %v4745 = vld [vmem:[%s4742 + $0x10] sm:$0xff]
    %v4746 = vld [vmem:[%s4742 + $0x18] sm:$0xff]
    %v4747 = vld [vmem:[%s4742 + $0x20] sm:$0xff]
    %v4748 = vld [vmem:[%s4742 + $0x28] sm:$0xff]
    %v4749 = vld [vmem:[%s4742 + $0x30] sm:$0xff]
    %v4750 = vld [vmem:[%s4742 + $0x38] sm:$0xff]
    %v4752 = vsel %vm198, %v4724, 0
    %v4755 = vsel %vm198, %v4729, 0
    %v4758 = vsel %vm198, %v4734, 0
    %v4761 = vsel %vm198, %v4739, 0
    %4763 = vmatprep.subr.mxu0 0.0
    %4764 = vmatpush1.msra.mxu0 %v4743
    %4765 = vmatprep.subr.mxu0 0.0
    %4766 = vmatpush1.msra.mxu0 %v4744
    %4767 = vmatprep.subr.mxu0 0.0
    %4768 = vmatpush1.msra.mxu0 %v4745
    %4769 = vmatprep.subr.mxu0 0.0
    %4770 = vmatpush1.msra.mxu0 %v4746
    %4771 = vmatprep.subr.mxu0 0.0
    %4772 = vmatpush1.msra.mxu0 %v4747
    %4773 = vmatprep.subr.mxu0 0.0
    %4774 = vmatpush1.msra.mxu0 %v4748
    %4775 = vmatprep.subr.mxu0 0.0
    %4776 = vmatpush1.msra.mxu0 %v4749
    %4777 = vmatprep.subr.mxu0 0.0
    %4778 = vmatpush1.msra.mxu0 %v4750
    %4779 = vmatprep.subr.mxu0 0.0
    %4780 = vmatpush1.msra.mxu0 0.0
    %4781 = vmatprep.subr.mxu0 0.0
    %4782 = vmatpush1.msra.mxu0 0.0
    %4783 = vmatprep.subr.mxu0 0.0
    %4784 = vmatpush1.msra.mxu0 0.0
    %4785 = vmatprep.subr.mxu0 0.0
    %4786 = vmatpush1.msra.mxu0 0.0
    %4787 = vmatprep.subr.mxu0 0.0
    %4788 = vmatpush1.msra.mxu0 0.0
    %4789 = vmatprep.subr.mxu0 0.0
    %4790 = vmatpush1.msra.mxu0 0.0
    %4791 = vmatprep.subr.mxu0 0.0
    %4792 = vmatpush1.msra.mxu0 0.0
    %4793 = vmatprep.subr.mxu0 0.0
    %4794 = vmatpush1.msra.mxu0 0.0
    %4795 = vmatprep.subr.mxu0 0.0
    %4796 = vmatpush1.msra.mxu0 0.0
    %4797 = vmatprep.subr.mxu0 0.0
    %4798 = vmatpush1.msra.mxu0 0.0
    %4799 = vmatprep.subr.mxu0 0.0
    %4800 = vmatpush1.msra.mxu0 0.0
    %4801 = vmatprep.subr.mxu0 0.0
    %4802 = vmatpush1.msra.mxu0 0.0
    %4803 = vmatprep.subr.mxu0 0.0
    %4804 = vmatpush1.msra.mxu0 0.0
    %4805 = vmatprep.subr.mxu0 0.0
    %4806 = vmatpush1.msra.mxu0 0.0
    %4807 = vmatprep.subr.mxu0 0.0
    %4808 = vmatpush1.msra.mxu0 0.0
    %4809 = vmatprep.subr.mxu0 0.0
    %4810 = vmatpush1.msra.mxu0 0.0
    %4811 = vmatprep.subr.mxu0 0.0
    %4812 = vmatpush1.msra.mxu0 0.0
    %4813 = vmatprep.subr.mxu0 0.0
    %4814 = vmatpush1.msra.mxu0 0.0
    %4815 = vmatprep.subr.mxu0 0.0
    %4816 = vmatpush1.msra.mxu0 0.0
    %4817 = vmatprep.subr.mxu0 0.0
    %4818 = vmatpush1.msra.mxu0 0.0
    %4819 = vmatprep.subr.mxu0 0.0
    %4820 = vmatpush1.msra.mxu0 0.0
    %4821 = vmatprep.subr.mxu0 0.0
    %4822 = vmatpush1.msra.mxu0 0.0
    %4823 = vmatprep.subr.mxu0 0.0
    %4824 = vmatpush1.msra.mxu0 0.0
    %4825 = vmatprep.subr.mxu0 0.0
    %4826 = vmatpush1.msra.mxu0 0.0
    %4827 = vmatprep.mubr.f32.mxu0 0.0
    %4828 = vmatmul.mubr.f32.gmra.mrb[0].mxu0 %v4752
    %v4829 = vpop.f32.mrb[0].mxu0
    %v4830 = vadd.f32 0.0, %v4829
    %v4831 = vpop.f32.mrb[0].mxu0
    %4832 = vmatprep.mubr.f32.mxu0 0.0
    %4833 = vmatmul.mubr.f32.gmra.mrb[0].mxu0 %v4755
    %v4834 = vpop.f32.mrb[0].mxu0
    %v4835 = vadd.f32 0.0, %v4834
    %v4836 = vpop.f32.mrb[0].mxu0
    %4837 = vmatprep.mubr.f32.mxu0 0.0
    %4838 = vmatmul.mubr.f32.gmra.mrb[0].mxu0 %v4758
    %v4839 = vpop.f32.mrb[0].mxu0
    %v4840 = vadd.f32 0.0, %v4839
    %v4841 = vpop.f32.mrb[0].mxu0
    %4842 = vmatprep.mubr.f32.mxu0 0.0
    %4843 = vmatmul.mubr.f32.gmra.mrb[0].mxu0 %v4761
    %v4844 = vpop.f32.mrb[0].mxu0
    %v4845 = vadd.f32 0.0, %v4844
    %v4846 = vpop.f32.mrb[0].mxu0
    %4847 = vdwg.mxu0
    %v4848 = vadd.f32 %v4653, %v4830
    %v4849 = vadd.f32 %v4654, %v4835
    %v4850 = vadd.f32 %v4655, %v4840
    %v4851 = vadd.f32 %v4656, %v4845
    %4852 = vmatprep.subr.mxu0 0.0
    %4853 = vmatpush1.msra.mxu0 %v4051
    %4854 = vmatprep.subr.mxu0 0.0
    %4855 = vmatpush1.msra.mxu0 %v4052
    %4856 = vmatprep.subr.mxu0 0.0
    %4857 = vmatpush1.msra.mxu0 %v4053
    %4858 = vmatprep.subr.mxu0 0.0
    %4859 = vmatpush1.msra.mxu0 %v4054
    %4860 = vmatprep.subr.mxu0 0.0
    %4861 = vmatpush1.msra.mxu0 0.0
    %4862 = vmatprep.subr.mxu0 0.0
    %4863 = vmatpush1.msra.mxu0 0.0
    %4864 = vmatprep.subr.mxu0 0.0
    %4865 = vmatpush1.msra.mxu0 0.0
    %4866 = vmatprep.subr.mxu0 0.0
    %4867 = vmatpush1.msra.mxu0 0.0
    %4868 = vmatprep.subr.mxu0 0.0
    %4869 = vmatpush1.msra.mxu0 0.0
    %4870 = vmatprep.subr.mxu0 0.0
    %4871 = vmatpush1.msra.mxu0 0.0
    %4872 = vmatprep.subr.mxu0 0.0
    %4873 = vmatpush1.msra.mxu0 0.0
    %4874 = vmatprep.subr.mxu0 0.0
    %4875 = vmatpush1.msra.mxu0 0.0
    %4876 = vmatprep.subr.mxu0 0.0
    %4877 = vmatpush1.msra.mxu0 0.0
    %4878 = vmatprep.subr.mxu0 0.0
    %4879 = vmatpush1.msra.mxu0 0.0
    %4880 = vmatprep.subr.mxu0 0.0
    %4881 = vmatpush1.msra.mxu0 0.0
    %4882 = vmatprep.subr.mxu0 0.0
    %4883 = vmatpush1.msra.mxu0 0.0
    %4884 = vmatprep.subr.mxu0 0.0
    %4885 = vmatpush1.msra.mxu0 0.0
    %4886 = vmatprep.subr.mxu0 0.0
    %4887 = vmatpush1.msra.mxu0 0.0
    %4888 = vmatprep.subr.mxu0 0.0
    %4889 = vmatpush1.msra.mxu0 0.0
    %4890 = vmatprep.subr.mxu0 0.0
    %4891 = vmatpush1.msra.mxu0 0.0
    %4892 = vmatprep.subr.mxu0 0.0
    %4893 = vmatpush1.msra.mxu0 0.0
    %4894 = vmatprep.subr.mxu0 0.0
    %4895 = vmatpush1.msra.mxu0 0.0
    %4896 = vmatprep.subr.mxu0 0.0
    %4897 = vmatpush1.msra.mxu0 0.0
    %4898 = vmatprep.subr.mxu0 0.0
    %4899 = vmatpush1.msra.mxu0 0.0
    %4900 = vmatprep.subr.mxu0 0.0
    %4901 = vmatpush1.msra.mxu0 0.0
    %4902 = vmatprep.subr.mxu0 0.0
    %4903 = vmatpush1.msra.mxu0 0.0
    %4904 = vmatprep.subr.mxu0 0.0
    %4905 = vmatpush1.msra.mxu0 0.0
    %4906 = vmatprep.subr.mxu0 0.0
    %4907 = vmatpush1.msra.mxu0 0.0
    %4908 = vmatprep.subr.mxu0 0.0
    %4909 = vmatpush1.msra.mxu0 0.0
    %4910 = vmatprep.subr.mxu0 0.0
    %4911 = vmatpush1.msra.mxu0 0.0
    %4912 = vmatprep.subr.mxu0 0.0
    %4913 = vmatpush1.msra.mxu0 0.0
    %4914 = vmatprep.subr.mxu0 0.0
    %4915 = vmatpush1.msra.mxu0 0.0
    %4916 = vmatprep.mubr.f32.mxu0 0.0
    %4917 = vmatmul.mubr.f32.gmra.mrb[0].mxu0 %v1147
    %v4918 = vpop.f32.mrb[0].mxu0
    %v4919 = vadd.f32 0.0, %v4918
    %v4920 = vpop.f32.mrb[0].mxu0
    %4921 = vmatprep.mubr.f32.mxu0 0.0
    %4922 = vmatmul.mubr.f32.gmra.mrb[0].mxu0 %v1150
    %v4923 = vpop.f32.mrb[0].mxu0
    %v4924 = vadd.f32 0.0, %v4923
    %v4925 = vpop.f32.mrb[0].mxu0
    %4926 = vmatprep.mubr.f32.mxu0 0.0
    %4927 = vmatmul.mubr.f32.gmra.mrb[0].mxu0 %v1153
    %v4928 = vpop.f32.mrb[0].mxu0
    %v4929 = vadd.f32 0.0, %v4928
    %v4930 = vpop.f32.mrb[0].mxu0
    %4931 = vmatprep.mubr.f32.mxu0 0.0
    %4932 = vmatmul.mubr.f32.gmra.mrb[0].mxu0 %v1156
    %v4933 = vpop.f32.mrb[0].mxu0
    %v4934 = vadd.f32 0.0, %v4933
    %v4935 = vpop.f32.mrb[0].mxu0
    %4936 = vdwg.mxu0
    %s4937 = scalar_lea.vmem [#allocation3], 1472
    %v4938 = vld [vmem:[%s4937] sm:$0xff]
    %v4939 = vld [vmem:[%s4937 + $0x8] sm:$0xff]
    %v4940 = vld [vmem:[%s4937 + $0x10] sm:$0xff]
    %v4941 = vld [vmem:[%s4937 + $0x18] sm:$0xff]
    %v4942 = vld [vmem:[%s4937 + $0x20] sm:$0xff]
    %v4943 = vld [vmem:[%s4937 + $0x28] sm:$0xff]
    %v4944 = vld [vmem:[%s4937 + $0x30] sm:$0xff]
    %v4945 = vld [vmem:[%s4937 + $0x38] sm:$0xff]
    %v4947 = vsel %vm198, %v4919, 0
    %v4950 = vsel %vm198, %v4924, 0
    %v4953 = vsel %vm198, %v4929, 0
    %v4956 = vsel %vm198, %v4934, 0
    %4958 = vmatprep.subr.mxu0 0.0
    %4959 = vmatpush1.msra.mxu0 %v4938
    %4960 = vmatprep.subr.mxu0 0.0
    %4961 = vmatpush1.msra.mxu0 %v4939
    %4962 = vmatprep.subr.mxu0 0.0
    %4963 = vmatpush1.msra.mxu0 %v4940
    %4964 = vmatprep.subr.mxu0 0.0
    %4965 = vmatpush1.msra.mxu0 %v4941
    %4966 = vmatprep.subr.mxu0 0.0
    %4967 = vmatpush1.msra.mxu0 %v4942
    %4968 = vmatprep.subr.mxu0 0.0
    %4969 = vmatpush1.msra.mxu0 %v4943
    %4970 = vmatprep.subr.mxu0 0.0
    %4971 = vmatpush1.msra.mxu0 %v4944
    %4972 = vmatprep.subr.mxu0 0.0
    %4973 = vmatpush1.msra.mxu0 %v4945
    %4974 = vmatprep.subr.mxu0 0.0
    %4975 = vmatpush1.msra.mxu0 0.0
    %4976 = vmatprep.subr.mxu0 0.0
    %4977 = vmatpush1.msra.mxu0 0.0
    %4978 = vmatprep.subr.mxu0 0.0
    %4979 = vmatpush1.msra.mxu0 0.0
    %4980 = vmatprep.subr.mxu0 0.0
    %4981 = vmatpush1.msra.mxu0 0.0
    %4982 = vmatprep.subr.mxu0 0.0
    %4983 = vmatpush1.msra.mxu0 0.0
    %4984 = vmatprep.subr.mxu0 0.0
    %4985 = vmatpush1.msra.mxu0 0.0
    %4986 = vmatprep.subr.mxu0 0.0
    %4987 = vmatpush1.msra.mxu0 0.0
    %4988 = vmatprep.subr.mxu0 0.0
    %4989 = vmatpush1.msra.mxu0 0.0
    %4990 = vmatprep.subr.mxu0 0.0
    %4991 = vmatpush1.msra.mxu0 0.0
    %4992 = vmatprep.subr.mxu0 0.0
    %4993 = vmatpush1.msra.mxu0 0.0
    %4994 = vmatprep.subr.mxu0 0.0
    %4995 = vmatpush1.msra.mxu0 0.0
    %4996 = vmatprep.subr.mxu0 0.0
    %4997 = vmatpush1.msra.mxu0 0.0
    %4998 = vmatprep.subr.mxu0 0.0
    %4999 = vmatpush1.msra.mxu0 0.0
    %5000 = vmatprep.subr.mxu0 0.0
    %5001 = vmatpush1.msra.mxu0 0.0
    %5002 = vmatprep.subr.mxu0 0.0
    %5003 = vmatpush1.msra.mxu0 0.0
    %5004 = vmatprep.subr.mxu0 0.0
    %5005 = vmatpush1.msra.mxu0 0.0
    %5006 = vmatprep.subr.mxu0 0.0
    %5007 = vmatpush1.msra.mxu0 0.0
    %5008 = vmatprep.subr.mxu0 0.0
    %5009 = vmatpush1.msra.mxu0 0.0
    %5010 = vmatprep.subr.mxu0 0.0
    %5011 = vmatpush1.msra.mxu0 0.0
    %5012 = vmatprep.subr.mxu0 0.0
    %5013 = vmatpush1.msra.mxu0 0.0
    %5014 = vmatprep.subr.mxu0 0.0
    %5015 = vmatpush1.msra.mxu0 0.0
    %5016 = vmatprep.subr.mxu0 0.0
    %5017 = vmatpush1.msra.mxu0 0.0
    %5018 = vmatprep.subr.mxu0 0.0
    %5019 = vmatpush1.msra.mxu0 0.0
    %5020 = vmatprep.subr.mxu0 0.0
    %5021 = vmatpush1.msra.mxu0 0.0
    %5022 = vmatprep.mubr.f32.mxu0 0.0
    %5023 = vmatmul.mubr.f32.gmra.mrb[0].mxu0 %v4947
    %v5024 = vpop.f32.mrb[0].mxu0
    %v5025 = vadd.f32 0.0, %v5024
    %v5026 = vpop.f32.mrb[0].mxu0
    %5027 = vmatprep.mubr.f32.mxu0 0.0
    %5028 = vmatmul.mubr.f32.gmra.mrb[0].mxu0 %v4950
    %v5029 = vpop.f32.mrb[0].mxu0
    %v5030 = vadd.f32 0.0, %v5029
    %v5031 = vpop.f32.mrb[0].mxu0
    %5032 = vmatprep.mubr.f32.mxu0 0.0
    %5033 = vmatmul.mubr.f32.gmra.mrb[0].mxu0 %v4953
    %v5034 = vpop.f32.mrb[0].mxu0
    %v5035 = vadd.f32 0.0, %v5034
    %v5036 = vpop.f32.mrb[0].mxu0
    %5037 = vmatprep.mubr.f32.mxu0 0.0
    %5038 = vmatmul.mubr.f32.gmra.mrb[0].mxu0 %v4956
    %v5039 = vpop.f32.mrb[0].mxu0
    %v5040 = vadd.f32 0.0, %v5039
    %v5041 = vpop.f32.mrb[0].mxu0
    %5042 = vdwg.mxu0
    %v5043 = vadd.f32 %v4848, %v5025
    %v5044 = vadd.f32 %v4849, %v5030
    %v5045 = vadd.f32 %v4850, %v5035
    %v5046 = vadd.f32 %v4851, %v5040
    %v5047 = vld [vmem:[%s3 + $0x5] sm:$0x1]
    %v5048 = vlaneseq
    %v5049 = vshrl.u32 %v5048, 7
    %v5050 = vsub.s32 0, %v5049
    %v5051 = vrot.slane %v5047, %v5050
    %v5052 = vmul.f32 %v5043, %v5051
    %v5053 = vmul.f32 %v5044, %v5051
    %v5054 = vmul.f32 %v5045, %v5051
    %v5055 = vmul.f32 %v5046, %v5051
    %v5056 = vld [vmem:[%s4 + $0x5] sm:$0x1]
    %v5057 = vlaneseq
    %v5058 = vshrl.u32 %v5057, 7
    %v5059 = vsub.s32 0, %v5058
    %v5060 = vrot.slane %v5056, %v5059
    %v5061 = vadd.f32 %v5052, %v5060
    %v5062 = vadd.f32 %v5053, %v5060
    %v5063 = vadd.f32 %v5054, %v5060
    %v5064 = vadd.f32 %v5055, %v5060
    %5065 = vst.msk [vmem:[%s18] sm:$0xff] %vm198, %v5061
    %5066 = vst.msk [vmem:[%s18 + $0x8] sm:$0xff] %vm198, %v5062
    %5067 = vst.msk [vmem:[%s18 + $0x10] sm:$0xff] %vm198, %v5063
    %5068 = vst.msk [vmem:[%s18 + $0x18] sm:$0xff] %vm198, %v5064
    // Predicated region
    $region78: #{haam_forward.1} parent=1 // pred_check
      _
    $region79: #{haam_forward.1} parent=1 // pred_check_branch
      %5070 = sbr.rel (0) target = $region81
    $region80: #{haam_forward.1} parent=1 // pred_region
      _
    $region81: #{haam_forward.1} parent=1 // pred_fallthru
      _
    // Predicated region
    $region82: #{haam_forward.1} parent=1 // pred_check
      _
    $region83: #{haam_forward.1} parent=1 // pred_check_branch
      %5072 = sbr.rel (0) target = $region85
    $region84: #{haam_forward.1} parent=1 // pred_region
      _
    $region85: #{haam_forward.1} parent=1 // pred_fallthru
      _
    %5073 = vsyncpa [#allocation4], 1

</llo_original>
